<compile_context>
chip_gen: v7x
topology: tpu7x:2x2x1
jax: 0.10.0
libtpu: 0.0.40
codegen_flags: <defaults>
</compile_context>

<pallas_src>
import jax
import jax.numpy as jnp
from jax import lax
from jax.experimental import pallas as pl
from jax.experimental.pallas import tpu as pltpu


def _pick_hw_chunk(hw):
    """Largest sublane-aligned spatial chunk dividing HW that still leaves >=2 chunks."""
    for cand in (512, 256, 128, 64, 32, 16, 8):
        if hw % cand == 0 and hw // cand >= 2:
            return cand
    return hw  # fall back to a single full-extent chunk


def rotationnet_forward(x_nchw, wc, bc, wf, bf):
    """Rotationnet 'resnet' branch: frozen features -> flatten -> Linear(512, num_classes).

    x_nchw: (N, Cin, H, W) f32
    wc:     (Cin*9, 512) f32 frozen conv-as-matmul weight (backbone stand-in)
    bc:     (1, 512)     f32 frozen conv bias
    wf:     (512, C)     f32 classifier weight (stored as in x out)
    bf:     (1, C)       f32 classifier bias
    Returns (N, C) f32 logits.
    """
    n, cin, h, w = x_nchw.shape
    hw = h * w
    k = cin * 9
    f_dim = wc.shape[1]
    c = wf.shape[1]

    nb = 8                                    # images per grid step (8-sublane-clean output)
    n_pad = pl.cdiv(n, nb) * nb
    c_pad = pl.cdiv(c, 128) * 128             # lane-dense classifier output
    thw = _pick_hw_chunk(hw)
    n_hw_chunks = hw // thw
    inv_hw = 1.0 / float(hw)                  # applied in f32 inside the kernel

    # ---- wrapper-side glue -------------------------------------------------
    # Cast to bf16 BEFORE im2col (halves the dominant 9x-inflated HBM stream) and emit
    # NHWC patches directly (no extra transpose pass over the big array).
    x_pad = jnp.pad(x_nchw, ((0, n_pad - n), (0, 0), (0, 0), (0, 0)))
    x_nhwc = jnp.transpose(x_pad, (0, 2, 3, 1)).astype(jnp.bfloat16)
    patches = lax.conv_general_dilated_patches(
        x_nhwc, filter_shape=(3, 3), window_strides=(1, 1), padding="SAME",
        dimension_numbers=("NHWC", "HWIO", "NHWC"))
    patches = patches.reshape(n_pad, hw, k)                    # (N_pad, HW, K) bf16

    wc_b = wc.astype(jnp.bfloat16)
    wf_p = jnp.pad(wf, ((0, 0), (0, c_pad - c))).astype(jnp.bfloat16)
    bf_p = jnp.pad(bf, ((0, 0), (0, c_pad - c)))               # bias stays f32

    def kernel(patches_ref, wc_ref, bc_ref, wf_ref, bf_ref, out_ref, acc_ref):
        j = pl.program_id(1)

        @pl.when(j == 0)
        def _():
            acc_ref[...] = jnp.zeros_like(acc_ref)

        # "features" stage on this spatial chunk: conv-as-matmul (bf16 in, f32 acc)
        # + bias + ReLU.  (nb*thw, K) @ (K, F) -> (nb*thw, F)
        p2 = patches_ref[...].reshape(nb * thw, k)
        feat = jnp.dot(p2, wc_ref[...], preferred_element_type=jnp.float32)
        feat = jnp.maximum(feat + bc_ref[...], 0.0)

        # Per-image partial spatial sums (sublane reduce, f32) -> accumulate (nb, F).
        acc_ref[...] += jnp.sum(feat.reshape(nb, thw, f_dim), axis=1)

        # Last spatial chunk: global-average-pool scale (f32) then classifier Linear.
        @pl.when(j == pl.num_programs(1) - 1)
        def _():
            pooled = (acc_ref[...] * inv_hw).astype(jnp.bfloat16)      # (nb, F)
            out_ref[...] = (
                jnp.dot(pooled, wf_ref[...], preferred_element_type=jnp.float32)
                + bf_ref[...])

    out = pl.pallas_call(
        kernel,
        out_shape=jax.ShapeDtypeStruct((n_pad, c_pad), jnp.float32),
        grid=(n_pad // nb, n_hw_chunks),
        in_specs=[
            # streamed, double-buffered patch chunks
            pl.BlockSpec((nb, thw, k), lambda i, j: (i, j, 0)),
            # resident parameters
            pl.BlockSpec((k, f_dim), lambda i, j: (0, 0)),
            pl.BlockSpec((1, f_dim), lambda i, j: (0, 0)),
            pl.BlockSpec((f_dim, c_pad), lambda i, j: (0, 0)),
            pl.BlockSpec((1, c_pad), lambda i, j: (0, 0)),
        ],
        out_specs=pl.BlockSpec((nb, c_pad), lambda i, j: (i, 0)),
        scratch_shapes=[pltpu.VMEM((nb, f_dim), jnp.float32)],
        compiler_params=pltpu.CompilerParams(
            dimension_semantics=("parallel", "arbitrary"),
            vmem_limit_bytes=32 * 1024 * 1024),
    )(patches, wc_b, bc, wf_p, bf_p)
    return out[:n, :c]


def rotationnet_reference(x_nchw, wc, bc, wf, bf):
    """Plain-JAX reference with the same declared precision (bf16 inputs, f32 accumulate)."""
    n, cin, h, w = x_nchw.shape
    hw = h * w
    k = cin * 9
    x_nhwc = jnp.transpose(x_nchw, (0, 2, 3, 1)).astype(jnp.bfloat16)
    patches = lax.conv_general_dilated_patches(
        x_nhwc, filter_shape=(3, 3), window_strides=(1, 1), padding="SAME",
        dimension_numbers=("NHWC", "HWIO", "NHWC")).reshape(n, hw, k)
    feat = jnp.einsum("npk,kf->npf", patches, wc.astype(jnp.bfloat16),
                      preferred_element_type=jnp.float32)
    feat = jnp.maximum(feat + bc, 0.0)
    pooled = (jnp.sum(feat, axis=1) * (1.0 / hw)).astype(jnp.bfloat16)   # (N, 512)
    return (jnp.dot(pooled, wf.astype(jnp.bfloat16),
                    preferred_element_type=jnp.float32) + bf)            # Linear(512, C)


if __name__ == "__main__":
    # Small, module-consistent shapes: batch=2, channels=4, spatial=16x16,
    # resnet feature width = 512, num_classes = 40.
    N, CIN, H, W = 2, 4, 16, 16
    FEAT = 512
    NUM_CLASSES = 40
    K = CIN * 3 * 3

    key = jax.random.PRNGKey(0)
    kx, kwc, kbc, kwf, kbf = jax.random.split(key, 5)

    x = jax.random.normal(kx, (N, CIN, H, W), dtype=jnp.float32)

    # Frozen backbone stand-in (conv-as-matmul) parameters.
    wc = 0.05 * jax.random.normal(kwc, (K, FEAT), dtype=jnp.float32)
    bc = 0.05 * jax.random.normal(kbc, (1, FEAT), dtype=jnp.float32)
    # Classifier nn.Linear(512, num_classes): weight stored as (in, out), bias (1, out).
    wf = 0.05 * jax.random.normal(kwf, (FEAT, NUM_CLASSES), dtype=jnp.float32)
    bf = 0.05 * jax.random.normal(kbf, (1, NUM_CLASSES), dtype=jnp.float32)

    fwd = jax.jit(rotationnet_forward)
    y = fwd(x, wc, bc, wf, bf)
    jax.block_until_ready(y)

    y_ref = rotationnet_reference(x, wc, bc, wf, bf)
    assert y.shape == (N, NUM_CLASSES)
    assert jnp.allclose(y, y_ref, atol=5e-3, rtol=5e-3), "Pallas kernel mismatch vs reference"

    print("KERNEL_OK")
</pallas_src>

<mosaic_0001>
module attributes {stable_mosaic.version = 11 : i64} {
  func.func @kernel(%arg0: i32, %arg1: i32, %arg2: memref<8x128x36xbf16, #tpu.memory_space<vmem>>, %arg3: memref<36x512xbf16, #tpu.memory_space<vmem>>, %arg4: memref<1x512xf32, #tpu.memory_space<vmem>>, %arg5: memref<512x128xbf16, #tpu.memory_space<vmem>>, %arg6: memref<1x128xf32, #tpu.memory_space<vmem>>, %arg7: memref<8x128xf32, #tpu.memory_space<vmem>>, %arg8: memref<8x512xf32, #tpu.memory_space<vmem>>) attributes {dimension_semantics = [#tpu.dimension_semantics<parallel>, #tpu.dimension_semantics<arbitrary>], iteration_bounds = array<i64: 1, 2>, scalar_prefetch = 0 : i64, scratch_operands = 1 : i64, tpu.core_type = #tpu.core_type<tc>, window_params = [{transform_indices = @transform_0, window_bounds = array<i64: 8, 128, 36>}, {pipeline_mode = #tpu.pipeline_mode<synchronous>, transform_indices = @transform_1, window_bounds = array<i64: 36, 512>}, {pipeline_mode = #tpu.pipeline_mode<synchronous>, transform_indices = @transform_2, window_bounds = array<i64: 1, 512>}, {pipeline_mode = #tpu.pipeline_mode<synchronous>, transform_indices = @transform_3, window_bounds = array<i64: 512, 128>}, {pipeline_mode = #tpu.pipeline_mode<synchronous>, transform_indices = @transform_4, window_bounds = array<i64: 1, 128>}, {transform_indices = @transform_5, window_bounds = array<i64: 8, 128>}]} {
    %c0_i32 = arith.constant 0 : i32
    %0 = arith.cmpi eq, %arg1, %c0_i32 : i32
    %1 = arith.extui %0 : i1 to i32
    %c0_i32_0 = arith.constant 0 : i32
    %2 = arith.cmpi ne, %1, %c0_i32_0 : i32
    scf.if %2 {
      %cst_14 = arith.constant 0.000000e+00 : f32
      %20 = vector.broadcast %cst_14 : f32 to vector<8x512xf32>
      %c0_15 = arith.constant 0 : index
      %c0_16 = arith.constant 0 : index
      %21 = vector.load %arg8[%c0_15, %c0_16] : memref<8x512xf32, #tpu.memory_space<vmem>>, vector<8x512xf32>
      tpu.vector_store %arg8[%c0_15, %c0_16], %20 {strides = array<i32>} : memref<8x512xf32, #tpu.memory_space<vmem>>, vector<8x512xf32>,
    } else {
    }
    %c0 = arith.constant 0 : index
    %c0_1 = arith.constant 0 : index
    %c0_2 = arith.constant 0 : index
    %3 = vector.load %arg2[%c0, %c0_1, %c0_2] : memref<8x128x36xbf16, #tpu.memory_space<vmem>>, vector<8x128x36xbf16>
    %4 = vector.shape_cast %3 : vector<8x128x36xbf16> to vector<1024x36xbf16>
    %c0_3 = arith.constant 0 : index
    %c0_4 = arith.constant 0 : index
    %5 = vector.load %arg3[%c0_3, %c0_4] : memref<36x512xbf16, #tpu.memory_space<vmem>>, vector<36x512xbf16>
    %cst = arith.constant dense<0.000000e+00> : vector<1024x512xf32>
    %6 = tpu.matmul %4, %5, %cst {dimension_numbers = #tpu.dot_dimension_numbers<[1], [0], [0], [1], [0, 0, 1, 1], [], []>} : vector<1024x36xbf16>, vector<36x512xbf16>, vector<1024x512xf32> -> vector<1024x512xf32>
    %c0_5 = arith.constant 0 : index
    %c0_6 = arith.constant 0 : index
    %7 = vector.load %arg4[%c0_5, %c0_6] : memref<1x512xf32, #tpu.memory_space<vmem>>, vector<1x512xf32>
    %8 = vector.broadcast %7 : vector<1x512xf32> to vector<1024x512xf32>
    %9 = arith.addf %6, %8 : vector<1024x512xf32>
    %cst_7 = arith.constant 0.000000e+00 : f32
    %10 = vector.broadcast %cst_7 : f32 to vector<1024x512xf32>
    %11 = arith.maximumf %9, %10 : vector<1024x512xf32>
    %c0_8 = arith.constant 0 : index
    %c0_9 = arith.constant 0 : index
    %12 = vector.load %arg8[%c0_8, %c0_9] : memref<8x512xf32, #tpu.memory_space<vmem>>, vector<8x512xf32>
    %13 = vector.shape_cast %11 : vector<1024x512xf32> to vector<8x128x512xf32>
    %cst_10 = arith.constant dense<0.000000e+00> : vector<8x512xf32>
    %14 = vector.multi_reduction <add>, %13, %cst_10 [1] : vector<8x128x512xf32> to vector<8x512xf32>
    %15 = arith.addf %12, %14 : vector<8x512xf32>
    %c0_11 = arith.constant 0 : index
    %c0_12 = arith.constant 0 : index
    %16 = vector.load %arg8[%c0_11, %c0_12] : memref<8x512xf32, #tpu.memory_space<vmem>>, vector<8x512xf32>
    tpu.vector_store %arg8[%c0_11, %c0_12], %15 {strides = array<i32>} : memref<8x512xf32, #tpu.memory_space<vmem>>, vector<8x512xf32>,
    %c1_i32 = arith.constant 1 : i32
    %17 = arith.cmpi eq, %arg1, %c1_i32 : i32
    %18 = arith.extui %17 : i1 to i32
    %c0_i32_13 = arith.constant 0 : i32
    %19 = arith.cmpi ne, %18, %c0_i32_13 : i32
    scf.if %19 {
      %c0_14 = arith.constant 0 : index
      %c0_15 = arith.constant 0 : index
      %20 = vector.load %arg8[%c0_14, %c0_15] : memref<8x512xf32, #tpu.memory_space<vmem>>, vector<8x512xf32>
      %cst_16 = arith.constant 3.906250e-03 : f32
      %21 = vector.broadcast %cst_16 : f32 to vector<8x512xf32>
      %22 = arith.mulf %20, %21 : vector<8x512xf32>
      %23 = arith.truncf %22 : vector<8x512xf32> to vector<8x512xbf16>
      %c0_17 = arith.constant 0 : index
      %c0_18 = arith.constant 0 : index
      %24 = vector.load %arg5[%c0_17, %c0_18] : memref<512x128xbf16, #tpu.memory_space<vmem>>, vector<512x128xbf16>
      %cst_19 = arith.constant dense<0.000000e+00> : vector<8x128xf32>
      %25 = tpu.matmul %23, %24, %cst_19 {dimension_numbers = #tpu.dot_dimension_numbers<[1], [0], [0], [1], [0, 0, 1, 1], [], []>} : vector<8x512xbf16>, vector<512x128xbf16>, vector<8x128xf32> -> vector<8x128xf32>
      %c0_20 = arith.constant 0 : index
      %c0_21 = arith.constant 0 : index
      %26 = vector.load %arg6[%c0_20, %c0_21] : memref<1x128xf32, #tpu.memory_space<vmem>>, vector<1x128xf32>
      %27 = vector.broadcast %26 : vector<1x128xf32> to vector<8x128xf32>
      %28 = arith.addf %25, %27 : vector<8x128xf32>
      %c0_22 = arith.constant 0 : index
      %c0_23 = arith.constant 0 : index
      %29 = vector.load %arg7[%c0_22, %c0_23] : memref<8x128xf32, #tpu.memory_space<vmem>>, vector<8x128xf32>
      tpu.vector_store %arg7[%c0_22, %c0_23], %28 {strides = array<i32>} : memref<8x128xf32, #tpu.memory_space<vmem>>, vector<8x128xf32>,
    } else {
    }
    return
  }
  func.func @transform_0(%arg0: i32, %arg1: i32) -> (i32, i32, i32) {
    %c0_i32 = arith.constant 0 : i32
    %c0_i32_0 = arith.constant 0 : i32
    return %arg0, %arg1, %c0_i32 : i32, i32, i32
  }
  func.func @transform_1(%arg0: i32, %arg1: i32) -> (i32, i32) {
    %c0_i32 = arith.constant 0 : i32
    %c0_i32_0 = arith.constant 0 : i32
    %c0_i32_1 = arith.constant 0 : i32
    return %c0_i32, %c0_i32_0 : i32, i32
  }
  func.func @transform_2(%arg0: i32, %arg1: i32) -> (i32, i32) {
    %c0_i32 = arith.constant 0 : i32
    %c0_i32_0 = arith.constant 0 : i32
    %c0_i32_1 = arith.constant 0 : i32
    return %c0_i32, %c0_i32_0 : i32, i32
  }
  func.func @transform_3(%arg0: i32, %arg1: i32) -> (i32, i32) {
    %c0_i32 = arith.constant 0 : i32
    %c0_i32_0 = arith.constant 0 : i32
    %c0_i32_1 = arith.constant 0 : i32
    return %c0_i32, %c0_i32_0 : i32, i32
  }
  func.func @transform_4(%arg0: i32, %arg1: i32) -> (i32, i32) {
    %c0_i32 = arith.constant 0 : i32
    %c0_i32_0 = arith.constant 0 : i32
    %c0_i32_1 = arith.constant 0 : i32
    return %c0_i32, %c0_i32_0 : i32, i32
  }
  func.func @transform_5(%arg0: i32, %arg1: i32) -> (i32, i32) {
    %c0_i32 = arith.constant 0 : i32
    %c0_i32_0 = arith.constant 0 : i32
    return %arg0, %c0_i32 : i32, i32
  }
}

</mosaic_0001>

<llo_original>
// kernel: rotationnet_forward.1
$region0: #{rotationnet_forward.1}
  #allocation0 [shape = 'u32[]', space=smem, size = 0x4, offset = 0x4, fixed_abs, tag = 'smem constant byte address 0x4 - core index']
  #allocation1 [shape = 'u32[144,128]{1,0:T(1,128)}', space=vmem, size = 0x12000, scoped, tag = 'internal scratch']
  #allocation2 [shape = 'f32[8,512]{1,0:T(8,128)}', space=vmem, size = 0x4000, scoped, tag = 'scratch operand']
  %s0 = inlined_call_operand.vmem [shape: bf16[8,256,36], index: 0, kind: input, shape index: {}]
  %s1 = inlined_call_operand.vmem [shape: bf16[36,512], index: 1, kind: input, shape index: {}]
  %s2 = inlined_call_operand.vmem [shape: f32[1,512], index: 2, kind: input, shape index: {}]
  %s3 = inlined_call_operand.vmem [shape: bf16[512,128], index: 3, kind: input, shape index: {}]
  %s4 = inlined_call_operand.vmem [shape: f32[1,128], index: 4, kind: input, shape index: {}]
  %s5 = inlined_call_operand.vmem [shape: f32[8,128], index: 5, kind: output, shape index: {}]
  %s6 = sld [smem:[#allocation0]]
  $region102: #{rotationnet_forward.1} parent=0
    _
  %s8 = ssub.s32 1, %s6
  %s9 = scalar_select 0, %s8, %s6
  $region1: #{rotationnet_forward.1} parent=0
    #allocation3 [shape = 'u8[524288]{0}', space=vmem, size = 0x80000, scoped, tag = 'input window, operand 0']
    loop: start=0, step=1, limit=4
    $region2: #{rotationnet_forward.1} parent=1 // loop_pre_header
      _
    $region3: #{rotationnet_forward.1} parent=1 // loop_header
      %s11 = sphi 0, %s15
      %p12 = scmp.ge.s32.totalorder %s11, 4
      %s18 = sphi 0, %s30
      %s19 = sphi 0, %s26
      %s20 = sphi 0, %s18
      %s21 = sphi 0, %s19
      %s22 = sphi 0, %s20
      %s23 = sphi 0, %s21
      %s35 = sphi 0, %s37
      %s38 = sphi 0, %s35
      %s39 = sphi 0, %s38
      %s55 = sphi 0, %s39
      %s59 = sphi 0, %s59
      %s61 = sphi 0, %s59
      %s62 = sphi 0, %s61
      %s76 = sphi 0, %s62
      %s80 = sphi 0, %s80
      %s82 = sphi 0, %s80
      %s83 = sphi 0, %s82
      %s97 = sphi 0, %s83
      %s101 = sphi 0, %s101
      %s103 = sphi 0, %s101
      %s104 = sphi 0, %s103
      %s118 = sphi 0, %s104
      %s122 = sphi 0, %s122
      %s124 = sphi 0, %s122
      %s125 = sphi 0, %s124
      %s139 = sphi 0, %s125
      %s145 = sphi 0, %s147
      %s148 = sphi 0, %s145
      %s149 = sphi 0, %s148
      %s165 = sphi 0, %s149
    $region4: #{rotationnet_forward.1} parent=1 // loop_header_branch
      %14 = sbr.rel (%p12) target = $region8
    $region5: #{rotationnet_forward.1} parent=1 // loop_body
      %s16 = ssub.s32 %s11, 1
      %s17 = ssub.s32 %s11, 2
      %s24 = sadd.s32 1, %s19
      %p25 = scmp.ge.s32.totalorder %s24, 2
      %s26 = scalar_select %p25, 0, %s24
      %s27 = sadd.s32 1, %s18
      %s28 = scalar_select %p25, %s27, %s18
      %p29 = scmp.ge.s32.totalorder %s28, 1
      %s30 = scalar_select %p29, 0, %s28
      %s31 = ssub.s32 %s18, %s30
      %s32 = ssub.s32 %s19, %s26
      %s33 = sor.u32 %s31, %s32
      %p34 = scmp.eq.s32.totalorder %s33, 0
      %s36 = sadd.s32 %s35, 1
      %s37 = scalar_select %p34, %s35, %s36
      %p40 = pneg %p34
      %p41 = scmp.eq.s32.totalorder %s11, 1
      %p42 = por %p40, %p41
      %p43 = scmp.ne.s32.totalorder %s35, %s38
      %p44 = scmp.eq.s32.totalorder %s11, 0
      %p45 = por %p43, %p44
      %p46 = scmp.ne.s32.totalorder %s35, %s38
      %p47 = scmp.eq.s32.totalorder %s16, 1
      %p48 = por %p46, %p47
      %p49 = scmp.ne.s32.totalorder %s38, %s39
      %p50 = scmp.eq.s32.totalorder %s16, 0
      %p51 = por %p49, %p50
      %p52 = scmp.ne.s32.totalorder %s38, %s39
      %p53 = scmp.eq.s32.totalorder %s17, 1
      %p54 = por %p52, %p53
      %p56 = scmp.ne.s32.totalorder %s39, %s55
      %p57 = scmp.eq.s32.totalorder %s17, 0
      %p58 = por %p56, %p57
      %s60 = sadd.s32 %s59, 1
      %p63 = scmp.eq.s32.totalorder %s11, 1
      %p64 = scmp.ne.s32.totalorder %s59, %s61
      %p65 = scmp.eq.s32.totalorder %s11, 0
      %p66 = por %p64, %p65
      %p67 = scmp.ne.s32.totalorder %s59, %s61
      %p68 = scmp.eq.s32.totalorder %s16, 1
      %p69 = por %p67, %p68
      %p70 = scmp.ne.s32.totalorder %s61, %s62
      %p71 = scmp.eq.s32.totalorder %s16, 0
      %p72 = por %p70, %p71
      %p73 = scmp.ne.s32.totalorder %s61, %s62
      %p74 = scmp.eq.s32.totalorder %s17, 1
      %p75 = por %p73, %p74
      %p77 = scmp.ne.s32.totalorder %s62, %s76
      %p78 = scmp.eq.s32.totalorder %s17, 0
      %p79 = por %p77, %p78
      %s81 = sadd.s32 %s80, 1
      %p84 = scmp.eq.s32.totalorder %s11, 1
      %p85 = scmp.ne.s32.totalorder %s80, %s82
      %p86 = scmp.eq.s32.totalorder %s11, 0
      %p87 = por %p85, %p86
      %p88 = scmp.ne.s32.totalorder %s80, %s82
      %p89 = scmp.eq.s32.totalorder %s16, 1
      %p90 = por %p88, %p89
      %p91 = scmp.ne.s32.totalorder %s82, %s83
      %p92 = scmp.eq.s32.totalorder %s16, 0
      %p93 = por %p91, %p92
      %p94 = scmp.ne.s32.totalorder %s82, %s83
      %p95 = scmp.eq.s32.totalorder %s17, 1
      %p96 = por %p94, %p95
      %p98 = scmp.ne.s32.totalorder %s83, %s97
      %p99 = scmp.eq.s32.totalorder %s17, 0
      %p100 = por %p98, %p99
      %s102 = sadd.s32 %s101, 1
      %p105 = scmp.eq.s32.totalorder %s11, 1
      %p106 = scmp.ne.s32.totalorder %s101, %s103
      %p107 = scmp.eq.s32.totalorder %s11, 0
      %p108 = por %p106, %p107
      %p109 = scmp.ne.s32.totalorder %s101, %s103
      %p110 = scmp.eq.s32.totalorder %s16, 1
      %p111 = por %p109, %p110
      %p112 = scmp.ne.s32.totalorder %s103, %s104
      %p113 = scmp.eq.s32.totalorder %s16, 0
      %p114 = por %p112, %p113
      %p115 = scmp.ne.s32.totalorder %s103, %s104
      %p116 = scmp.eq.s32.totalorder %s17, 1
      %p117 = por %p115, %p116
      %p119 = scmp.ne.s32.totalorder %s104, %s118
      %p120 = scmp.eq.s32.totalorder %s17, 0
      %p121 = por %p119, %p120
      %s123 = sadd.s32 %s122, 1
      %p126 = scmp.eq.s32.totalorder %s11, 1
      %p127 = scmp.ne.s32.totalorder %s122, %s124
      %p128 = scmp.eq.s32.totalorder %s11, 0
      %p129 = por %p127, %p128
      %p130 = scmp.ne.s32.totalorder %s122, %s124
      %p131 = scmp.eq.s32.totalorder %s16, 1
      %p132 = por %p130, %p131
      %p133 = scmp.ne.s32.totalorder %s124, %s125
      %p134 = scmp.eq.s32.totalorder %s16, 0
      %p135 = por %p133, %p134
      %p136 = scmp.ne.s32.totalorder %s124, %s125
      %p137 = scmp.eq.s32.totalorder %s17, 1
      %p138 = por %p136, %p137
      %p140 = scmp.ne.s32.totalorder %s125, %s139
      %p141 = scmp.eq.s32.totalorder %s17, 0
      %p142 = por %p140, %p141
      %s143 = ssub.s32 %s18, %s30
      %p144 = scmp.eq.s32.totalorder %s143, 0
      %s146 = sadd.s32 %s145, 1
      %s147 = scalar_select %p144, %s145, %s146
      %p150 = pneg %p144
      %p151 = scmp.eq.s32.totalorder %s11, 1
      %p152 = por %p150, %p151
      %p153 = scmp.ne.s32.totalorder %s145, %s148
      %p154 = scmp.eq.s32.totalorder %s11, 0
      %p155 = por %p153, %p154
      %p156 = scmp.ne.s32.totalorder %s145, %s148
      %p157 = scmp.eq.s32.totalorder %s16, 1
      %p158 = por %p156, %p157
      %p159 = scmp.ne.s32.totalorder %s148, %s149
      %p160 = scmp.eq.s32.totalorder %s16, 0
      %p161 = por %p159, %p160
      %p162 = scmp.ne.s32.totalorder %s148, %s149
      %p163 = scmp.eq.s32.totalorder %s17, 1
      %p164 = por %p162, %p163
      %p166 = scmp.ne.s32.totalorder %s149, %s165
      %p167 = scmp.eq.s32.totalorder %s17, 0
      %p168 = por %p166, %p167
      %p169 = scmp.le.s32.totalorder 1, %s11
      %p170 = scmp.lt.s32.totalorder %s11, 3
      %p171 = pnand %p169, %p170
      %p172 = pneg %p171
      // Predicated region
      $region9: #{rotationnet_forward.1} parent=5 // pred_check
        _
      $region10: #{rotationnet_forward.1} parent=5 // pred_check_branch
        %174 = sbr.rel (%p171) target = $region12
      $region11: #{rotationnet_forward.1} parent=5 // pred_region
        %s175 = ssub.s32 %s11, 1
        // Predicated region
        $region13: #{rotationnet_forward.1} parent=11 // pred_check
          %p176 = pneg %p72
        $region14: #{rotationnet_forward.1} parent=11 // pred_check_branch
          %178 = sbr.rel (%p176) target = $region16
        $region15: #{rotationnet_forward.1} parent=11 // pred_region
          _
        $region16: #{rotationnet_forward.1} parent=11 // pred_fallthru
          _
        // Predicated region
        $region17: #{rotationnet_forward.1} parent=11 // pred_check
          %p179 = pneg %p93
        $region18: #{rotationnet_forward.1} parent=11 // pred_check_branch
          %181 = sbr.rel (%p179) target = $region20
        $region19: #{rotationnet_forward.1} parent=11 // pred_region
          _
        $region20: #{rotationnet_forward.1} parent=11 // pred_fallthru
          _
        // Predicated region
        $region21: #{rotationnet_forward.1} parent=11 // pred_check
          %p182 = pneg %p114
        $region22: #{rotationnet_forward.1} parent=11 // pred_check_branch
          %184 = sbr.rel (%p182) target = $region24
        $region23: #{rotationnet_forward.1} parent=11 // pred_region
          _
        $region24: #{rotationnet_forward.1} parent=11 // pred_fallthru
          _
        // Predicated region
        $region25: #{rotationnet_forward.1} parent=11 // pred_check
          %p185 = pneg %p135
        $region26: #{rotationnet_forward.1} parent=11 // pred_check_branch
          %187 = sbr.rel (%p185) target = $region28
        $region27: #{rotationnet_forward.1} parent=11 // pred_region
          _
        $region28: #{rotationnet_forward.1} parent=11 // pred_fallthru
          _
      $region12: #{rotationnet_forward.1} parent=5 // pred_fallthru
        _
      %p188 = scmp.lt.s32.totalorder %s11, 2
      // Predicated region
      $region29: #{rotationnet_forward.1} parent=5 // pred_check
        %p189 = pneg %p188
      $region30: #{rotationnet_forward.1} parent=5 // pred_check_branch
        %191 = sbr.rel (%p189) target = $region32
      $region31: #{rotationnet_forward.1} parent=5 // pred_region
        // Predicated region
        $region33: #{rotationnet_forward.1} parent=31 // pred_check
          %p192 = pneg %p45
        $region34: #{rotationnet_forward.1} parent=31 // pred_check_branch
          %194 = sbr.rel (%p192) target = $region36
        $region35: #{rotationnet_forward.1} parent=31 // pred_region
          %s195 = sand.u32 %s35, 1
          %s196 = sand.u32 %s35, 1
          %s197 = smul.addr %s196, 512
          %s198 = scalar_lea.vmem [#allocation3], %s197
          %s199 = smul.u32 8, %s18
          %s200 = smul.u32 16, %s19
          %s201 = smul.addr %s199, 32
          %s202 = sadd.s32 %s200, %s201
          %s203 = smul.addr %s202, 4
          %s204 = scalar_lea.vmem %s0, %s203
          // Predicated region
          $region37: #{rotationnet_forward.1} parent=35 // pred_check
            _
          $region38: #{rotationnet_forward.1} parent=35 // pred_check_branch
            %206 = sbr.rel (0) target = $region40
          $region39: #{rotationnet_forward.1} parent=35 // pred_region
            // Predicated region
            $region41: #{rotationnet_forward.1} parent=39 // pred_check
              _
            $region42: #{rotationnet_forward.1} parent=39 // pred_check_branch
              %208 = sbr.rel target = $region44
            $region43: #{rotationnet_forward.1} parent=39 // pred_region
              // Predicated region
              $region56: #{rotationnet_forward.1} parent=43 // pred_check
                _
              $region57: #{rotationnet_forward.1} parent=43 // pred_check_branch
                %477 = sbr.rel (0) target = $region59
              $region58: #{rotationnet_forward.1} parent=43 // pred_region
                loop: start=0, step=1, limit=1
                $region60: #{rotationnet_forward.1} parent=58 // loop_pre_header
                  _
                $region61: #{rotationnet_forward.1} parent=58 // loop_header
                  %s479 = sphi 0, %s483
                  %p480 = scmp.ge.s32.totalorder %s479, 1
                  %s484 = sphi %s204, %s204
                  %s485 = sphi %s198, %s198
                $region62: #{rotationnet_forward.1} parent=58 // loop_header_branch
                  %482 = sbr.rel (%p480) target = $region66
                $region63: #{rotationnet_forward.1} parent=58 // loop_body
                  _
                $region64: #{rotationnet_forward.1} parent=58 // loop_footer
                  %s483 = sadd.s32 1, %s479
                $region65: #{rotationnet_forward.1} parent=58 // loop_footer_branch
                  %478 = sbr.rel target = $region61
                $region66: #{rotationnet_forward.1} parent=58 // loop_exit
                  _
                loop: start=0, step=1, limit=1
                $region67: #{rotationnet_forward.1} parent=58 // loop_pre_header
                  _
                $region68: #{rotationnet_forward.1} parent=58 // loop_header
                  %s488 = sphi 0, %s492
                  %p489 = scmp.ge.s32.totalorder %s488, 1
                  %s493 = sphi %s204, %s204
                  %s494 = sphi %s198, %s198
                $region69: #{rotationnet_forward.1} parent=58 // loop_header_branch
                  %491 = sbr.rel (%p489) target = $region73
                $region70: #{rotationnet_forward.1} parent=58 // loop_body
                  %v495 = vld [vmem:[%s493] sm:$0xf]
                  %496 = vst [vmem:[%s494] sm:$0xf] %v495
                  %v497 = vld [vmem:[%s493 + $0x4] sm:$0xf]
                  %498 = vst [vmem:[%s494 + $0x4] sm:$0xf] %v497
                  %v499 = vld [vmem:[%s493 + $0x8] sm:$0xf]
                  %500 = vst [vmem:[%s494 + $0x8] sm:$0xf] %v499
                  %v501 = vld [vmem:[%s493 + $0xc] sm:$0xf]
                  %502 = vst [vmem:[%s494 + $0xc] sm:$0xf] %v501
                  %v503 = vld [vmem:[%s493 + $0x10] sm:$0xf]
                  %504 = vst [vmem:[%s494 + $0x10] sm:$0xf] %v503
                  %v505 = vld [vmem:[%s493 + $0x14] sm:$0xf]
                  %506 = vst [vmem:[%s494 + $0x14] sm:$0xf] %v505
                  %v507 = vld [vmem:[%s493 + $0x18] sm:$0xf]
                  %508 = vst [vmem:[%s494 + $0x18] sm:$0xf] %v507
                  %v509 = vld [vmem:[%s493 + $0x1c] sm:$0xf]
                  %510 = vst [vmem:[%s494 + $0x1c] sm:$0xf] %v509
                  %v511 = vld [vmem:[%s493 + $0x20] sm:$0xf]
                  %512 = vst [vmem:[%s494 + $0x20] sm:$0xf] %v511
                  %v513 = vld [vmem:[%s493 + $0x24] sm:$0xf]
                  %514 = vst [vmem:[%s494 + $0x24] sm:$0xf] %v513
                  %v515 = vld [vmem:[%s493 + $0x28] sm:$0xf]
                  %516 = vst [vmem:[%s494 + $0x28] sm:$0xf] %v515
                  %v517 = vld [vmem:[%s493 + $0x2c] sm:$0xf]
                  %518 = vst [vmem:[%s494 + $0x2c] sm:$0xf] %v517
                  %v519 = vld [vmem:[%s493 + $0x30] sm:$0xf]
                  %520 = vst [vmem:[%s494 + $0x30] sm:$0xf] %v519
                  %v521 = vld [vmem:[%s493 + $0x34] sm:$0xf]
                  %522 = vst [vmem:[%s494 + $0x34] sm:$0xf] %v521
                  %v523 = vld [vmem:[%s493 + $0x38] sm:$0xf]
                  %524 = vst [vmem:[%s494 + $0x38] sm:$0xf] %v523
                  %v525 = vld [vmem:[%s493 + $0x3c] sm:$0xf]
                  %526 = vst [vmem:[%s494 + $0x3c] sm:$0xf] %v525
                  %v527 = vld [vmem:[%s493 + $0x80] sm:$0xf]
                  %528 = vst [vmem:[%s494 + $0x40] sm:$0xf] %v527
                  %v529 = vld [vmem:[%s493 + $0x84] sm:$0xf]
                  %530 = vst [vmem:[%s494 + $0x44] sm:$0xf] %v529
                  %v531 = vld [vmem:[%s493 + $0x88] sm:$0xf]
                  %532 = vst [vmem:[%s494 + $0x48] sm:$0xf] %v531
                  %v533 = vld [vmem:[%s493 + $0x8c] sm:$0xf]
                  %534 = vst [vmem:[%s494 + $0x4c] sm:$0xf] %v533
                  %v535 = vld [vmem:[%s493 + $0x90] sm:$0xf]
                  %536 = vst [vmem:[%s494 + $0x50] sm:$0xf] %v535
                  %v537 = vld [vmem:[%s493 + $0x94] sm:$0xf]
                  %538 = vst [vmem:[%s494 + $0x54] sm:$0xf] %v537
                  %v539 = vld [vmem:[%s493 + $0x98] sm:$0xf]
                  %540 = vst [vmem:[%s494 + $0x58] sm:$0xf] %v539
                  %v541 = vld [vmem:[%s493 + $0x9c] sm:$0xf]
                  %542 = vst [vmem:[%s494 + $0x5c] sm:$0xf] %v541
                  %v543 = vld [vmem:[%s493 + $0xa0] sm:$0xf]
                  %544 = vst [vmem:[%s494 + $0x60] sm:$0xf] %v543
                  %v545 = vld [vmem:[%s493 + $0xa4] sm:$0xf]
                  %546 = vst [vmem:[%s494 + $0x64] sm:$0xf] %v545
                  %v547 = vld [vmem:[%s493 + $0xa8] sm:$0xf]
                  %548 = vst [vmem:[%s494 + $0x68] sm:$0xf] %v547
                  %v549 = vld [vmem:[%s493 + $0xac] sm:$0xf]
                  %550 = vst [vmem:[%s494 + $0x6c] sm:$0xf] %v549
                  %v551 = vld [vmem:[%s493 + $0xb0] sm:$0xf]
                  %552 = vst [vmem:[%s494 + $0x70] sm:$0xf] %v551
                  %v553 = vld [vmem:[%s493 + $0xb4] sm:$0xf]
                  %554 = vst [vmem:[%s494 + $0x74] sm:$0xf] %v553
                  %v555 = vld [vmem:[%s493 + $0xb8] sm:$0xf]
                  %556 = vst [vmem:[%s494 + $0x78] sm:$0xf] %v555
                  %v557 = vld [vmem:[%s493 + $0xbc] sm:$0xf]
                  %558 = vst [vmem:[%s494 + $0x7c] sm:$0xf] %v557
                  %v559 = vld [vmem:[%s493 + $0x100] sm:$0xf]
                  %560 = vst [vmem:[%s494 + $0x80] sm:$0xf] %v559
                  %v561 = vld [vmem:[%s493 + $0x104] sm:$0xf]
                  %562 = vst [vmem:[%s494 + $0x84] sm:$0xf] %v561
                  %v563 = vld [vmem:[%s493 + $0x108] sm:$0xf]
                  %564 = vst [vmem:[%s494 + $0x88] sm:$0xf] %v563
                  %v565 = vld [vmem:[%s493 + $0x10c] sm:$0xf]
                  %566 = vst [vmem:[%s494 + $0x8c] sm:$0xf] %v565
                  %v567 = vld [vmem:[%s493 + $0x110] sm:$0xf]
                  %568 = vst [vmem:[%s494 + $0x90] sm:$0xf] %v567
                  %v569 = vld [vmem:[%s493 + $0x114] sm:$0xf]
                  %570 = vst [vmem:[%s494 + $0x94] sm:$0xf] %v569
                  %v571 = vld [vmem:[%s493 + $0x118] sm:$0xf]
                  %572 = vst [vmem:[%s494 + $0x98] sm:$0xf] %v571
                  %v573 = vld [vmem:[%s493 + $0x11c] sm:$0xf]
                  %574 = vst [vmem:[%s494 + $0x9c] sm:$0xf] %v573
                  %v575 = vld [vmem:[%s493 + $0x120] sm:$0xf]
                  %576 = vst [vmem:[%s494 + $0xa0] sm:$0xf] %v575
                  %v577 = vld [vmem:[%s493 + $0x124] sm:$0xf]
                  %578 = vst [vmem:[%s494 + $0xa4] sm:$0xf] %v577
                  %v579 = vld [vmem:[%s493 + $0x128] sm:$0xf]
                  %580 = vst [vmem:[%s494 + $0xa8] sm:$0xf] %v579
                  %v581 = vld [vmem:[%s493 + $0x12c] sm:$0xf]
                  %582 = vst [vmem:[%s494 + $0xac] sm:$0xf] %v581
                  %v583 = vld [vmem:[%s493 + $0x130] sm:$0xf]
                  %584 = vst [vmem:[%s494 + $0xb0] sm:$0xf] %v583
                  %v585 = vld [vmem:[%s493 + $0x134] sm:$0xf]
                  %586 = vst [vmem:[%s494 + $0xb4] sm:$0xf] %v585
                  %v587 = vld [vmem:[%s493 + $0x138] sm:$0xf]
                  %588 = vst [vmem:[%s494 + $0xb8] sm:$0xf] %v587
                  %v589 = vld [vmem:[%s493 + $0x13c] sm:$0xf]
                  %590 = vst [vmem:[%s494 + $0xbc] sm:$0xf] %v589
                  %v591 = vld [vmem:[%s493 + $0x180] sm:$0xf]
                  %592 = vst [vmem:[%s494 + $0xc0] sm:$0xf] %v591
                  %v593 = vld [vmem:[%s493 + $0x184] sm:$0xf]
                  %594 = vst [vmem:[%s494 + $0xc4] sm:$0xf] %v593
                  %v595 = vld [vmem:[%s493 + $0x188] sm:$0xf]
                  %596 = vst [vmem:[%s494 + $0xc8] sm:$0xf] %v595
                  %v597 = vld [vmem:[%s493 + $0x18c] sm:$0xf]
                  %598 = vst [vmem:[%s494 + $0xcc] sm:$0xf] %v597
                  %v599 = vld [vmem:[%s493 + $0x190] sm:$0xf]
                  %600 = vst [vmem:[%s494 + $0xd0] sm:$0xf] %v599
                  %v601 = vld [vmem:[%s493 + $0x194] sm:$0xf]
                  %602 = vst [vmem:[%s494 + $0xd4] sm:$0xf] %v601
                  %v603 = vld [vmem:[%s493 + $0x198] sm:$0xf]
                  %604 = vst [vmem:[%s494 + $0xd8] sm:$0xf] %v603
                  %v605 = vld [vmem:[%s493 + $0x19c] sm:$0xf]
                  %606 = vst [vmem:[%s494 + $0xdc] sm:$0xf] %v605
                  %v607 = vld [vmem:[%s493 + $0x1a0] sm:$0xf]
                  %608 = vst [vmem:[%s494 + $0xe0] sm:$0xf] %v607
                  %v609 = vld [vmem:[%s493 + $0x1a4] sm:$0xf]
                  %610 = vst [vmem:[%s494 + $0xe4] sm:$0xf] %v609
                  %v611 = vld [vmem:[%s493 + $0x1a8] sm:$0xf]
                  %612 = vst [vmem:[%s494 + $0xe8] sm:$0xf] %v611
                  %v613 = vld [vmem:[%s493 + $0x1ac] sm:$0xf]
                  %614 = vst [vmem:[%s494 + $0xec] sm:$0xf] %v613
                  %v615 = vld [vmem:[%s493 + $0x1b0] sm:$0xf]
                  %616 = vst [vmem:[%s494 + $0xf0] sm:$0xf] %v615
                  %v617 = vld [vmem:[%s493 + $0x1b4] sm:$0xf]
                  %618 = vst [vmem:[%s494 + $0xf4] sm:$0xf] %v617
                  %v619 = vld [vmem:[%s493 + $0x1b8] sm:$0xf]
                  %620 = vst [vmem:[%s494 + $0xf8] sm:$0xf] %v619
                  %v621 = vld [vmem:[%s493 + $0x1bc] sm:$0xf]
                  %622 = vst [vmem:[%s494 + $0xfc] sm:$0xf] %v621
                  %v623 = vld [vmem:[%s493 + $0x200] sm:$0xf]
                  %624 = vst [vmem:[%s494 + $0x100] sm:$0xf] %v623
                  %v625 = vld [vmem:[%s493 + $0x204] sm:$0xf]
                  %626 = vst [vmem:[%s494 + $0x104] sm:$0xf] %v625
                  %v627 = vld [vmem:[%s493 + $0x208] sm:$0xf]
                  %628 = vst [vmem:[%s494 + $0x108] sm:$0xf] %v627
                  %v629 = vld [vmem:[%s493 + $0x20c] sm:$0xf]
                  %630 = vst [vmem:[%s494 + $0x10c] sm:$0xf] %v629
                  %v631 = vld [vmem:[%s493 + $0x210] sm:$0xf]
                  %632 = vst [vmem:[%s494 + $0x110] sm:$0xf] %v631
                  %v633 = vld [vmem:[%s493 + $0x214] sm:$0xf]
                  %634 = vst [vmem:[%s494 + $0x114] sm:$0xf] %v633
                  %v635 = vld [vmem:[%s493 + $0x218] sm:$0xf]
                  %636 = vst [vmem:[%s494 + $0x118] sm:$0xf] %v635
                  %v637 = vld [vmem:[%s493 + $0x21c] sm:$0xf]
                  %638 = vst [vmem:[%s494 + $0x11c] sm:$0xf] %v637
                  %v639 = vld [vmem:[%s493 + $0x220] sm:$0xf]
                  %640 = vst [vmem:[%s494 + $0x120] sm:$0xf] %v639
                  %v641 = vld [vmem:[%s493 + $0x224] sm:$0xf]
                  %642 = vst [vmem:[%s494 + $0x124] sm:$0xf] %v641
                  %v643 = vld [vmem:[%s493 + $0x228] sm:$0xf]
                  %644 = vst [vmem:[%s494 + $0x128] sm:$0xf] %v643
                  %v645 = vld [vmem:[%s493 + $0x22c] sm:$0xf]
                  %646 = vst [vmem:[%s494 + $0x12c] sm:$0xf] %v645
                  %v647 = vld [vmem:[%s493 + $0x230] sm:$0xf]
                  %648 = vst [vmem:[%s494 + $0x130] sm:$0xf] %v647
                  %v649 = vld [vmem:[%s493 + $0x234] sm:$0xf]
                  %650 = vst [vmem:[%s494 + $0x134] sm:$0xf] %v649
                  %v651 = vld [vmem:[%s493 + $0x238] sm:$0xf]
                  %652 = vst [vmem:[%s494 + $0x138] sm:$0xf] %v651
                  %v653 = vld [vmem:[%s493 + $0x23c] sm:$0xf]
                  %654 = vst [vmem:[%s494 + $0x13c] sm:$0xf] %v653
                  %v655 = vld [vmem:[%s493 + $0x280] sm:$0xf]
                  %656 = vst [vmem:[%s494 + $0x140] sm:$0xf] %v655
                  %v657 = vld [vmem:[%s493 + $0x284] sm:$0xf]
                  %658 = vst [vmem:[%s494 + $0x144] sm:$0xf] %v657
                  %v659 = vld [vmem:[%s493 + $0x288] sm:$0xf]
                  %660 = vst [vmem:[%s494 + $0x148] sm:$0xf] %v659
                  %v661 = vld [vmem:[%s493 + $0x28c] sm:$0xf]
                  %662 = vst [vmem:[%s494 + $0x14c] sm:$0xf] %v661
                  %v663 = vld [vmem:[%s493 + $0x290] sm:$0xf]
                  %664 = vst [vmem:[%s494 + $0x150] sm:$0xf] %v663
                  %v665 = vld [vmem:[%s493 + $0x294] sm:$0xf]
                  %666 = vst [vmem:[%s494 + $0x154] sm:$0xf] %v665
                  %v667 = vld [vmem:[%s493 + $0x298] sm:$0xf]
                  %668 = vst [vmem:[%s494 + $0x158] sm:$0xf] %v667
                  %v669 = vld [vmem:[%s493 + $0x29c] sm:$0xf]
                  %670 = vst [vmem:[%s494 + $0x15c] sm:$0xf] %v669
                  %v671 = vld [vmem:[%s493 + $0x2a0] sm:$0xf]
                  %672 = vst [vmem:[%s494 + $0x160] sm:$0xf] %v671
                  %v673 = vld [vmem:[%s493 + $0x2a4] sm:$0xf]
                  %674 = vst [vmem:[%s494 + $0x164] sm:$0xf] %v673
                  %v675 = vld [vmem:[%s493 + $0x2a8] sm:$0xf]
                  %676 = vst [vmem:[%s494 + $0x168] sm:$0xf] %v675
                  %v677 = vld [vmem:[%s493 + $0x2ac] sm:$0xf]
                  %678 = vst [vmem:[%s494 + $0x16c] sm:$0xf] %v677
                  %v679 = vld [vmem:[%s493 + $0x2b0] sm:$0xf]
                  %680 = vst [vmem:[%s494 + $0x170] sm:$0xf] %v679
                  %v681 = vld [vmem:[%s493 + $0x2b4] sm:$0xf]
                  %682 = vst [vmem:[%s494 + $0x174] sm:$0xf] %v681
                  %v683 = vld [vmem:[%s493 + $0x2b8] sm:$0xf]
                  %684 = vst [vmem:[%s494 + $0x178] sm:$0xf] %v683
                  %v685 = vld [vmem:[%s493 + $0x2bc] sm:$0xf]
                  %686 = vst [vmem:[%s494 + $0x17c] sm:$0xf] %v685
                  %v687 = vld [vmem:[%s493 + $0x300] sm:$0xf]
                  %688 = vst [vmem:[%s494 + $0x180] sm:$0xf] %v687
                  %v689 = vld [vmem:[%s493 + $0x304] sm:$0xf]
                  %690 = vst [vmem:[%s494 + $0x184] sm:$0xf] %v689
                  %v691 = vld [vmem:[%s493 + $0x308] sm:$0xf]
                  %692 = vst [vmem:[%s494 + $0x188] sm:$0xf] %v691
                  %v693 = vld [vmem:[%s493 + $0x30c] sm:$0xf]
                  %694 = vst [vmem:[%s494 + $0x18c] sm:$0xf] %v693
                  %v695 = vld [vmem:[%s493 + $0x310] sm:$0xf]
                  %696 = vst [vmem:[%s494 + $0x190] sm:$0xf] %v695
                  %v697 = vld [vmem:[%s493 + $0x314] sm:$0xf]
                  %698 = vst [vmem:[%s494 + $0x194] sm:$0xf] %v697
                  %v699 = vld [vmem:[%s493 + $0x318] sm:$0xf]
                  %700 = vst [vmem:[%s494 + $0x198] sm:$0xf] %v699
                  %v701 = vld [vmem:[%s493 + $0x31c] sm:$0xf]
                  %702 = vst [vmem:[%s494 + $0x19c] sm:$0xf] %v701
                  %v703 = vld [vmem:[%s493 + $0x320] sm:$0xf]
                  %704 = vst [vmem:[%s494 + $0x1a0] sm:$0xf] %v703
                  %v705 = vld [vmem:[%s493 + $0x324] sm:$0xf]
                  %706 = vst [vmem:[%s494 + $0x1a4] sm:$0xf] %v705
                  %v707 = vld [vmem:[%s493 + $0x328] sm:$0xf]
                  %708 = vst [vmem:[%s494 + $0x1a8] sm:$0xf] %v707
                  %v709 = vld [vmem:[%s493 + $0x32c] sm:$0xf]
                  %710 = vst [vmem:[%s494 + $0x1ac] sm:$0xf] %v709
                  %v711 = vld [vmem:[%s493 + $0x330] sm:$0xf]
                  %712 = vst [vmem:[%s494 + $0x1b0] sm:$0xf] %v711
                  %v713 = vld [vmem:[%s493 + $0x334] sm:$0xf]
                  %714 = vst [vmem:[%s494 + $0x1b4] sm:$0xf] %v713
                  %v715 = vld [vmem:[%s493 + $0x338] sm:$0xf]
                  %716 = vst [vmem:[%s494 + $0x1b8] sm:$0xf] %v715
                  %v717 = vld [vmem:[%s493 + $0x33c] sm:$0xf]
                  %718 = vst [vmem:[%s494 + $0x1bc] sm:$0xf] %v717
                  %v719 = vld [vmem:[%s493 + $0x380] sm:$0xf]
                  %720 = vst [vmem:[%s494 + $0x1c0] sm:$0xf] %v719
                  %v721 = vld [vmem:[%s493 + $0x384] sm:$0xf]
                  %722 = vst [vmem:[%s494 + $0x1c4] sm:$0xf] %v721
                  %v723 = vld [vmem:[%s493 + $0x388] sm:$0xf]
                  %724 = vst [vmem:[%s494 + $0x1c8] sm:$0xf] %v723
                  %v725 = vld [vmem:[%s493 + $0x38c] sm:$0xf]
                  %726 = vst [vmem:[%s494 + $0x1cc] sm:$0xf] %v725
                  %v727 = vld [vmem:[%s493 + $0x390] sm:$0xf]
                  %728 = vst [vmem:[%s494 + $0x1d0] sm:$0xf] %v727
                  %v729 = vld [vmem:[%s493 + $0x394] sm:$0xf]
                  %730 = vst [vmem:[%s494 + $0x1d4] sm:$0xf] %v729
                  %v731 = vld [vmem:[%s493 + $0x398] sm:$0xf]
                  %732 = vst [vmem:[%s494 + $0x1d8] sm:$0xf] %v731
                  %v733 = vld [vmem:[%s493 + $0x39c] sm:$0xf]
                  %734 = vst [vmem:[%s494 + $0x1dc] sm:$0xf] %v733
                  %v735 = vld [vmem:[%s493 + $0x3a0] sm:$0xf]
                  %736 = vst [vmem:[%s494 + $0x1e0] sm:$0xf] %v735
                  %v737 = vld [vmem:[%s493 + $0x3a4] sm:$0xf]
                  %738 = vst [vmem:[%s494 + $0x1e4] sm:$0xf] %v737
                  %v739 = vld [vmem:[%s493 + $0x3a8] sm:$0xf]
                  %740 = vst [vmem:[%s494 + $0x1e8] sm:$0xf] %v739
                  %v741 = vld [vmem:[%s493 + $0x3ac] sm:$0xf]
                  %742 = vst [vmem:[%s494 + $0x1ec] sm:$0xf] %v741
                  %v743 = vld [vmem:[%s493 + $0x3b0] sm:$0xf]
                  %744 = vst [vmem:[%s494 + $0x1f0] sm:$0xf] %v743
                  %v745 = vld [vmem:[%s493 + $0x3b4] sm:$0xf]
                  %746 = vst [vmem:[%s494 + $0x1f4] sm:$0xf] %v745
                  %v747 = vld [vmem:[%s493 + $0x3b8] sm:$0xf]
                  %748 = vst [vmem:[%s494 + $0x1f8] sm:$0xf] %v747
                  %v749 = vld [vmem:[%s493 + $0x3bc] sm:$0xf]
                  %750 = vst [vmem:[%s494 + $0x1fc] sm:$0xf] %v749
                $region71: #{rotationnet_forward.1} parent=58 // loop_footer
                  %s492 = sadd.s32 1, %s488
                $region72: #{rotationnet_forward.1} parent=58 // loop_footer_branch
                  %487 = sbr.rel target = $region68
                $region73: #{rotationnet_forward.1} parent=58 // loop_exit
                  _
              $region59: #{rotationnet_forward.1} parent=43 // pred_fallthru
                _
            $region44: #{rotationnet_forward.1} parent=39 // pred_fallthru
              _
            // Predicated region
            $region45: #{rotationnet_forward.1} parent=39 // pred_check
              _
            $region46: #{rotationnet_forward.1} parent=39 // pred_check_branch
              %210 = sbr.rel (0) target = $region48
            $region47: #{rotationnet_forward.1} parent=39 // pred_region
              loop: start=0, step=1, limit=1
              $region49: #{rotationnet_forward.1} parent=47 // loop_pre_header
                _
              $region50: #{rotationnet_forward.1} parent=47 // loop_header
                %s213 = sphi 0, %s217
                %p214 = scmp.ge.s32.totalorder %s213, 1
                %s218 = sphi %s204, %s204
                %s219 = sphi %s198, %s198
              $region51: #{rotationnet_forward.1} parent=47 // loop_header_branch
                %216 = sbr.rel (%p214) target = $region55
              $region52: #{rotationnet_forward.1} parent=47 // loop_body
                %v220 = vld [vmem:[%s218] sm:$0xf]
                %221 = vst [vmem:[%s219] sm:$0xf] %v220
                %v222 = vld [vmem:[%s218 + $0x4] sm:$0xf]
                %223 = vst [vmem:[%s219 + $0x4] sm:$0xf] %v222
                %v224 = vld [vmem:[%s218 + $0x8] sm:$0xf]
                %225 = vst [vmem:[%s219 + $0x8] sm:$0xf] %v224
                %v226 = vld [vmem:[%s218 + $0xc] sm:$0xf]
                %227 = vst [vmem:[%s219 + $0xc] sm:$0xf] %v226
                %v228 = vld [vmem:[%s218 + $0x10] sm:$0xf]
                %229 = vst [vmem:[%s219 + $0x10] sm:$0xf] %v228
                %v230 = vld [vmem:[%s218 + $0x14] sm:$0xf]
                %231 = vst [vmem:[%s219 + $0x14] sm:$0xf] %v230
                %v232 = vld [vmem:[%s218 + $0x18] sm:$0xf]
                %233 = vst [vmem:[%s219 + $0x18] sm:$0xf] %v232
                %v234 = vld [vmem:[%s218 + $0x1c] sm:$0xf]
                %235 = vst [vmem:[%s219 + $0x1c] sm:$0xf] %v234
                %v236 = vld [vmem:[%s218 + $0x20] sm:$0xf]
                %237 = vst [vmem:[%s219 + $0x20] sm:$0xf] %v236
                %v238 = vld [vmem:[%s218 + $0x24] sm:$0xf]
                %239 = vst [vmem:[%s219 + $0x24] sm:$0xf] %v238
                %v240 = vld [vmem:[%s218 + $0x28] sm:$0xf]
                %241 = vst [vmem:[%s219 + $0x28] sm:$0xf] %v240
                %v242 = vld [vmem:[%s218 + $0x2c] sm:$0xf]
                %243 = vst [vmem:[%s219 + $0x2c] sm:$0xf] %v242
                %v244 = vld [vmem:[%s218 + $0x30] sm:$0xf]
                %245 = vst [vmem:[%s219 + $0x30] sm:$0xf] %v244
                %v246 = vld [vmem:[%s218 + $0x34] sm:$0xf]
                %247 = vst [vmem:[%s219 + $0x34] sm:$0xf] %v246
                %v248 = vld [vmem:[%s218 + $0x38] sm:$0xf]
                %249 = vst [vmem:[%s219 + $0x38] sm:$0xf] %v248
                %v250 = vld [vmem:[%s218 + $0x3c] sm:$0xf]
                %251 = vst [vmem:[%s219 + $0x3c] sm:$0xf] %v250
                %v252 = vld [vmem:[%s218 + $0x80] sm:$0xf]
                %253 = vst [vmem:[%s219 + $0x40] sm:$0xf] %v252
                %v254 = vld [vmem:[%s218 + $0x84] sm:$0xf]
                %255 = vst [vmem:[%s219 + $0x44] sm:$0xf] %v254
                %v256 = vld [vmem:[%s218 + $0x88] sm:$0xf]
                %257 = vst [vmem:[%s219 + $0x48] sm:$0xf] %v256
                %v258 = vld [vmem:[%s218 + $0x8c] sm:$0xf]
                %259 = vst [vmem:[%s219 + $0x4c] sm:$0xf] %v258
                %v260 = vld [vmem:[%s218 + $0x90] sm:$0xf]
                %261 = vst [vmem:[%s219 + $0x50] sm:$0xf] %v260
                %v262 = vld [vmem:[%s218 + $0x94] sm:$0xf]
                %263 = vst [vmem:[%s219 + $0x54] sm:$0xf] %v262
                %v264 = vld [vmem:[%s218 + $0x98] sm:$0xf]
                %265 = vst [vmem:[%s219 + $0x58] sm:$0xf] %v264
                %v266 = vld [vmem:[%s218 + $0x9c] sm:$0xf]
                %267 = vst [vmem:[%s219 + $0x5c] sm:$0xf] %v266
                %v268 = vld [vmem:[%s218 + $0xa0] sm:$0xf]
                %269 = vst [vmem:[%s219 + $0x60] sm:$0xf] %v268
                %v270 = vld [vmem:[%s218 + $0xa4] sm:$0xf]
                %271 = vst [vmem:[%s219 + $0x64] sm:$0xf] %v270
                %v272 = vld [vmem:[%s218 + $0xa8] sm:$0xf]
                %273 = vst [vmem:[%s219 + $0x68] sm:$0xf] %v272
                %v274 = vld [vmem:[%s218 + $0xac] sm:$0xf]
                %275 = vst [vmem:[%s219 + $0x6c] sm:$0xf] %v274
                %v276 = vld [vmem:[%s218 + $0xb0] sm:$0xf]
                %277 = vst [vmem:[%s219 + $0x70] sm:$0xf] %v276
                %v278 = vld [vmem:[%s218 + $0xb4] sm:$0xf]
                %279 = vst [vmem:[%s219 + $0x74] sm:$0xf] %v278
                %v280 = vld [vmem:[%s218 + $0xb8] sm:$0xf]
                %281 = vst [vmem:[%s219 + $0x78] sm:$0xf] %v280
                %v282 = vld [vmem:[%s218 + $0xbc] sm:$0xf]
                %283 = vst [vmem:[%s219 + $0x7c] sm:$0xf] %v282
                %v284 = vld [vmem:[%s218 + $0x100] sm:$0xf]
                %285 = vst [vmem:[%s219 + $0x80] sm:$0xf] %v284
                %v286 = vld [vmem:[%s218 + $0x104] sm:$0xf]
                %287 = vst [vmem:[%s219 + $0x84] sm:$0xf] %v286
                %v288 = vld [vmem:[%s218 + $0x108] sm:$0xf]
                %289 = vst [vmem:[%s219 + $0x88] sm:$0xf] %v288
                %v290 = vld [vmem:[%s218 + $0x10c] sm:$0xf]
                %291 = vst [vmem:[%s219 + $0x8c] sm:$0xf] %v290
                %v292 = vld [vmem:[%s218 + $0x110] sm:$0xf]
                %293 = vst [vmem:[%s219 + $0x90] sm:$0xf] %v292
                %v294 = vld [vmem:[%s218 + $0x114] sm:$0xf]
                %295 = vst [vmem:[%s219 + $0x94] sm:$0xf] %v294
                %v296 = vld [vmem:[%s218 + $0x118] sm:$0xf]
                %297 = vst [vmem:[%s219 + $0x98] sm:$0xf] %v296
                %v298 = vld [vmem:[%s218 + $0x11c] sm:$0xf]
                %299 = vst [vmem:[%s219 + $0x9c] sm:$0xf] %v298
                %v300 = vld [vmem:[%s218 + $0x120] sm:$0xf]
                %301 = vst [vmem:[%s219 + $0xa0] sm:$0xf] %v300
                %v302 = vld [vmem:[%s218 + $0x124] sm:$0xf]
                %303 = vst [vmem:[%s219 + $0xa4] sm:$0xf] %v302
                %v304 = vld [vmem:[%s218 + $0x128] sm:$0xf]
                %305 = vst [vmem:[%s219 + $0xa8] sm:$0xf] %v304
                %v306 = vld [vmem:[%s218 + $0x12c] sm:$0xf]
                %307 = vst [vmem:[%s219 + $0xac] sm:$0xf] %v306
                %v308 = vld [vmem:[%s218 + $0x130] sm:$0xf]
                %309 = vst [vmem:[%s219 + $0xb0] sm:$0xf] %v308
                %v310 = vld [vmem:[%s218 + $0x134] sm:$0xf]
                %311 = vst [vmem:[%s219 + $0xb4] sm:$0xf] %v310
                %v312 = vld [vmem:[%s218 + $0x138] sm:$0xf]
                %313 = vst [vmem:[%s219 + $0xb8] sm:$0xf] %v312
                %v314 = vld [vmem:[%s218 + $0x13c] sm:$0xf]
                %315 = vst [vmem:[%s219 + $0xbc] sm:$0xf] %v314
                %v316 = vld [vmem:[%s218 + $0x180] sm:$0xf]
                %317 = vst [vmem:[%s219 + $0xc0] sm:$0xf] %v316
                %v318 = vld [vmem:[%s218 + $0x184] sm:$0xf]
                %319 = vst [vmem:[%s219 + $0xc4] sm:$0xf] %v318
                %v320 = vld [vmem:[%s218 + $0x188] sm:$0xf]
                %321 = vst [vmem:[%s219 + $0xc8] sm:$0xf] %v320
                %v322 = vld [vmem:[%s218 + $0x18c] sm:$0xf]
                %323 = vst [vmem:[%s219 + $0xcc] sm:$0xf] %v322
                %v324 = vld [vmem:[%s218 + $0x190] sm:$0xf]
                %325 = vst [vmem:[%s219 + $0xd0] sm:$0xf] %v324
                %v326 = vld [vmem:[%s218 + $0x194] sm:$0xf]
                %327 = vst [vmem:[%s219 + $0xd4] sm:$0xf] %v326
                %v328 = vld [vmem:[%s218 + $0x198] sm:$0xf]
                %329 = vst [vmem:[%s219 + $0xd8] sm:$0xf] %v328
                %v330 = vld [vmem:[%s218 + $0x19c] sm:$0xf]
                %331 = vst [vmem:[%s219 + $0xdc] sm:$0xf] %v330
                %v332 = vld [vmem:[%s218 + $0x1a0] sm:$0xf]
                %333 = vst [vmem:[%s219 + $0xe0] sm:$0xf] %v332
                %v334 = vld [vmem:[%s218 + $0x1a4] sm:$0xf]
                %335 = vst [vmem:[%s219 + $0xe4] sm:$0xf] %v334
                %v336 = vld [vmem:[%s218 + $0x1a8] sm:$0xf]
                %337 = vst [vmem:[%s219 + $0xe8] sm:$0xf] %v336
                %v338 = vld [vmem:[%s218 + $0x1ac] sm:$0xf]
                %339 = vst [vmem:[%s219 + $0xec] sm:$0xf] %v338
                %v340 = vld [vmem:[%s218 + $0x1b0] sm:$0xf]
                %341 = vst [vmem:[%s219 + $0xf0] sm:$0xf] %v340
                %v342 = vld [vmem:[%s218 + $0x1b4] sm:$0xf]
                %343 = vst [vmem:[%s219 + $0xf4] sm:$0xf] %v342
                %v344 = vld [vmem:[%s218 + $0x1b8] sm:$0xf]
                %345 = vst [vmem:[%s219 + $0xf8] sm:$0xf] %v344
                %v346 = vld [vmem:[%s218 + $0x1bc] sm:$0xf]
                %347 = vst [vmem:[%s219 + $0xfc] sm:$0xf] %v346
                %v348 = vld [vmem:[%s218 + $0x200] sm:$0xf]
                %349 = vst [vmem:[%s219 + $0x100] sm:$0xf] %v348
                %v350 = vld [vmem:[%s218 + $0x204] sm:$0xf]
                %351 = vst [vmem:[%s219 + $0x104] sm:$0xf] %v350
                %v352 = vld [vmem:[%s218 + $0x208] sm:$0xf]
                %353 = vst [vmem:[%s219 + $0x108] sm:$0xf] %v352
                %v354 = vld [vmem:[%s218 + $0x20c] sm:$0xf]
                %355 = vst [vmem:[%s219 + $0x10c] sm:$0xf] %v354
                %v356 = vld [vmem:[%s218 + $0x210] sm:$0xf]
                %357 = vst [vmem:[%s219 + $0x110] sm:$0xf] %v356
                %v358 = vld [vmem:[%s218 + $0x214] sm:$0xf]
                %359 = vst [vmem:[%s219 + $0x114] sm:$0xf] %v358
                %v360 = vld [vmem:[%s218 + $0x218] sm:$0xf]
                %361 = vst [vmem:[%s219 + $0x118] sm:$0xf] %v360
                %v362 = vld [vmem:[%s218 + $0x21c] sm:$0xf]
                %363 = vst [vmem:[%s219 + $0x11c] sm:$0xf] %v362
                %v364 = vld [vmem:[%s218 + $0x220] sm:$0xf]
                %365 = vst [vmem:[%s219 + $0x120] sm:$0xf] %v364
                %v366 = vld [vmem:[%s218 + $0x224] sm:$0xf]
                %367 = vst [vmem:[%s219 + $0x124] sm:$0xf] %v366
                %v368 = vld [vmem:[%s218 + $0x228] sm:$0xf]
                %369 = vst [vmem:[%s219 + $0x128] sm:$0xf] %v368
                %v370 = vld [vmem:[%s218 + $0x22c] sm:$0xf]
                %371 = vst [vmem:[%s219 + $0x12c] sm:$0xf] %v370
                %v372 = vld [vmem:[%s218 + $0x230] sm:$0xf]
                %373 = vst [vmem:[%s219 + $0x130] sm:$0xf] %v372
                %v374 = vld [vmem:[%s218 + $0x234] sm:$0xf]
                %375 = vst [vmem:[%s219 + $0x134] sm:$0xf] %v374
                %v376 = vld [vmem:[%s218 + $0x238] sm:$0xf]
                %377 = vst [vmem:[%s219 + $0x138] sm:$0xf] %v376
                %v378 = vld [vmem:[%s218 + $0x23c] sm:$0xf]
                %379 = vst [vmem:[%s219 + $0x13c] sm:$0xf] %v378
                %v380 = vld [vmem:[%s218 + $0x280] sm:$0xf]
                %381 = vst [vmem:[%s219 + $0x140] sm:$0xf] %v380
                %v382 = vld [vmem:[%s218 + $0x284] sm:$0xf]
                %383 = vst [vmem:[%s219 + $0x144] sm:$0xf] %v382
                %v384 = vld [vmem:[%s218 + $0x288] sm:$0xf]
                %385 = vst [vmem:[%s219 + $0x148] sm:$0xf] %v384
                %v386 = vld [vmem:[%s218 + $0x28c] sm:$0xf]
                %387 = vst [vmem:[%s219 + $0x14c] sm:$0xf] %v386
                %v388 = vld [vmem:[%s218 + $0x290] sm:$0xf]
                %389 = vst [vmem:[%s219 + $0x150] sm:$0xf] %v388
                %v390 = vld [vmem:[%s218 + $0x294] sm:$0xf]
                %391 = vst [vmem:[%s219 + $0x154] sm:$0xf] %v390
                %v392 = vld [vmem:[%s218 + $0x298] sm:$0xf]
                %393 = vst [vmem:[%s219 + $0x158] sm:$0xf] %v392
                %v394 = vld [vmem:[%s218 + $0x29c] sm:$0xf]
                %395 = vst [vmem:[%s219 + $0x15c] sm:$0xf] %v394
                %v396 = vld [vmem:[%s218 + $0x2a0] sm:$0xf]
                %397 = vst [vmem:[%s219 + $0x160] sm:$0xf] %v396
                %v398 = vld [vmem:[%s218 + $0x2a4] sm:$0xf]
                %399 = vst [vmem:[%s219 + $0x164] sm:$0xf] %v398
                %v400 = vld [vmem:[%s218 + $0x2a8] sm:$0xf]
                %401 = vst [vmem:[%s219 + $0x168] sm:$0xf] %v400
                %v402 = vld [vmem:[%s218 + $0x2ac] sm:$0xf]
                %403 = vst [vmem:[%s219 + $0x16c] sm:$0xf] %v402
                %v404 = vld [vmem:[%s218 + $0x2b0] sm:$0xf]
                %405 = vst [vmem:[%s219 + $0x170] sm:$0xf] %v404
                %v406 = vld [vmem:[%s218 + $0x2b4] sm:$0xf]
                %407 = vst [vmem:[%s219 + $0x174] sm:$0xf] %v406
                %v408 = vld [vmem:[%s218 + $0x2b8] sm:$0xf]
                %409 = vst [vmem:[%s219 + $0x178] sm:$0xf] %v408
                %v410 = vld [vmem:[%s218 + $0x2bc] sm:$0xf]
                %411 = vst [vmem:[%s219 + $0x17c] sm:$0xf] %v410
                %v412 = vld [vmem:[%s218 + $0x300] sm:$0xf]
                %413 = vst [vmem:[%s219 + $0x180] sm:$0xf] %v412
                %v414 = vld [vmem:[%s218 + $0x304] sm:$0xf]
                %415 = vst [vmem:[%s219 + $0x184] sm:$0xf] %v414
                %v416 = vld [vmem:[%s218 + $0x308] sm:$0xf]
                %417 = vst [vmem:[%s219 + $0x188] sm:$0xf] %v416
                %v418 = vld [vmem:[%s218 + $0x30c] sm:$0xf]
                %419 = vst [vmem:[%s219 + $0x18c] sm:$0xf] %v418
                %v420 = vld [vmem:[%s218 + $0x310] sm:$0xf]
                %421 = vst [vmem:[%s219 + $0x190] sm:$0xf] %v420
                %v422 = vld [vmem:[%s218 + $0x314] sm:$0xf]
                %423 = vst [vmem:[%s219 + $0x194] sm:$0xf] %v422
                %v424 = vld [vmem:[%s218 + $0x318] sm:$0xf]
                %425 = vst [vmem:[%s219 + $0x198] sm:$0xf] %v424
                %v426 = vld [vmem:[%s218 + $0x31c] sm:$0xf]
                %427 = vst [vmem:[%s219 + $0x19c] sm:$0xf] %v426
                %v428 = vld [vmem:[%s218 + $0x320] sm:$0xf]
                %429 = vst [vmem:[%s219 + $0x1a0] sm:$0xf] %v428
                %v430 = vld [vmem:[%s218 + $0x324] sm:$0xf]
                %431 = vst [vmem:[%s219 + $0x1a4] sm:$0xf] %v430
                %v432 = vld [vmem:[%s218 + $0x328] sm:$0xf]
                %433 = vst [vmem:[%s219 + $0x1a8] sm:$0xf] %v432
                %v434 = vld [vmem:[%s218 + $0x32c] sm:$0xf]
                %435 = vst [vmem:[%s219 + $0x1ac] sm:$0xf] %v434
                %v436 = vld [vmem:[%s218 + $0x330] sm:$0xf]
                %437 = vst [vmem:[%s219 + $0x1b0] sm:$0xf] %v436
                %v438 = vld [vmem:[%s218 + $0x334] sm:$0xf]
                %439 = vst [vmem:[%s219 + $0x1b4] sm:$0xf] %v438
                %v440 = vld [vmem:[%s218 + $0x338] sm:$0xf]
                %441 = vst [vmem:[%s219 + $0x1b8] sm:$0xf] %v440
                %v442 = vld [vmem:[%s218 + $0x33c] sm:$0xf]
                %443 = vst [vmem:[%s219 + $0x1bc] sm:$0xf] %v442
                %v444 = vld [vmem:[%s218 + $0x380] sm:$0xf]
                %445 = vst [vmem:[%s219 + $0x1c0] sm:$0xf] %v444
                %v446 = vld [vmem:[%s218 + $0x384] sm:$0xf]
                %447 = vst [vmem:[%s219 + $0x1c4] sm:$0xf] %v446
                %v448 = vld [vmem:[%s218 + $0x388] sm:$0xf]
                %449 = vst [vmem:[%s219 + $0x1c8] sm:$0xf] %v448
                %v450 = vld [vmem:[%s218 + $0x38c] sm:$0xf]
                %451 = vst [vmem:[%s219 + $0x1cc] sm:$0xf] %v450
                %v452 = vld [vmem:[%s218 + $0x390] sm:$0xf]
                %453 = vst [vmem:[%s219 + $0x1d0] sm:$0xf] %v452
                %v454 = vld [vmem:[%s218 + $0x394] sm:$0xf]
                %455 = vst [vmem:[%s219 + $0x1d4] sm:$0xf] %v454
                %v456 = vld [vmem:[%s218 + $0x398] sm:$0xf]
                %457 = vst [vmem:[%s219 + $0x1d8] sm:$0xf] %v456
                %v458 = vld [vmem:[%s218 + $0x39c] sm:$0xf]
                %459 = vst [vmem:[%s219 + $0x1dc] sm:$0xf] %v458
                %v460 = vld [vmem:[%s218 + $0x3a0] sm:$0xf]
                %461 = vst [vmem:[%s219 + $0x1e0] sm:$0xf] %v460
                %v462 = vld [vmem:[%s218 + $0x3a4] sm:$0xf]
                %463 = vst [vmem:[%s219 + $0x1e4] sm:$0xf] %v462
                %v464 = vld [vmem:[%s218 + $0x3a8] sm:$0xf]
                %465 = vst [vmem:[%s219 + $0x1e8] sm:$0xf] %v464
                %v466 = vld [vmem:[%s218 + $0x3ac] sm:$0xf]
                %467 = vst [vmem:[%s219 + $0x1ec] sm:$0xf] %v466
                %v468 = vld [vmem:[%s218 + $0x3b0] sm:$0xf]
                %469 = vst [vmem:[%s219 + $0x1f0] sm:$0xf] %v468
                %v470 = vld [vmem:[%s218 + $0x3b4] sm:$0xf]
                %471 = vst [vmem:[%s219 + $0x1f4] sm:$0xf] %v470
                %v472 = vld [vmem:[%s218 + $0x3b8] sm:$0xf]
                %473 = vst [vmem:[%s219 + $0x1f8] sm:$0xf] %v472
                %v474 = vld [vmem:[%s218 + $0x3bc] sm:$0xf]
                %475 = vst [vmem:[%s219 + $0x1fc] sm:$0xf] %v474
              $region53: #{rotationnet_forward.1} parent=47 // loop_footer
                %s217 = sadd.s32 1, %s213
              $region54: #{rotationnet_forward.1} parent=47 // loop_footer_branch
                %212 = sbr.rel target = $region50
              $region55: #{rotationnet_forward.1} parent=47 // loop_exit
                _
            $region48: #{rotationnet_forward.1} parent=39 // pred_fallthru
              _
          $region40: #{rotationnet_forward.1} parent=35 // pred_fallthru
            _
          %751 = vnop
        $region36: #{rotationnet_forward.1} parent=31 // pred_fallthru
          _
      $region32: #{rotationnet_forward.1} parent=5 // pred_fallthru
        _
      %p752 = scmp.le.s32.totalorder 1, %s11
      %p753 = scmp.lt.s32.totalorder %s11, 3
      %p754 = pnand %p752, %p753
      %p755 = pneg %p754
      // Predicated region
      $region74: #{rotationnet_forward.1} parent=5 // pred_check
        _
      $region75: #{rotationnet_forward.1} parent=5 // pred_check_branch
        %757 = sbr.rel (%p754) target = $region77
      $region76: #{rotationnet_forward.1} parent=5 // pred_region
        %s758 = ssub.s32 %s11, 1
        %s759 = sand.u32 %s38, 1
        %s760 = sand.u32 %s38, 1
        %s761 = smul.addr %s760, 512
        %s762 = scalar_lea.vmem [#allocation3], %s761
        // Predicated region
        $region78: #{rotationnet_forward.1} parent=76 // pred_check
          %p763 = pneg %p51
        $region79: #{rotationnet_forward.1} parent=76 // pred_check_branch
          %765 = sbr.rel (%p763) target = $region81
        $region80: #{rotationnet_forward.1} parent=76 // pred_region
          _
        $region81: #{rotationnet_forward.1} parent=76 // pred_fallthru
          _
        %s766 = sand.u32 %s38, 1
        %s767 = sand.u32 %s38, 1
        %s768 = smul.addr %s767, 512
        %s769 = scalar_lea.vmem [#allocation3], %s768
        %p770 = pneg %p51
        %p771 = pneg %p48
        %p772 = pneg %p72
        %p773 = pneg %p69
        %p774 = pneg %p93
        %p775 = pneg %p90
        %p776 = pneg %p114
        %p777 = pneg %p111
        %p778 = pneg %p135
        %p779 = pneg %p132
        %p780 = pneg %p161
        %p781 = pneg %p158
        %p782 = scmp.lt.s32.totalorder %s20, 0
        %s783 = scalar_select %p782, %s20, 0
        %s784 = smul.addr %s783, 8
        %s785 = scalar_lea.vmem %s5, %s784
        %s786 = smul.u32 8, %s20
        %s787 = smul.u32 16, %s21
        %p788 = scmp.lt.s32.totalorder %s20, 0
        %s789 = scalar_select %p788, %s20, 0
        %s790 = smul.addr %s789, 8
        %s791 = scalar_lea.vmem %s5, %s790
        %p793 = scmp.eq.s32.totalorder %s21, 0
        // Predicated region
        $region82: #{rotationnet_forward.1} parent=76 // pred_check
          %p794 = pneg %p793
        $region83: #{rotationnet_forward.1} parent=76 // pred_check_branch
          %796 = sbr.rel (%p794) target = $region85
        $region84: #{rotationnet_forward.1} parent=76 // pred_region
          %797 = vst [vmem:[#allocation2] sm:$0xff] 0.0
          %798 = vst [vmem:[#allocation2 + $0x8] sm:$0xff] 0.0
          %799 = vst [vmem:[#allocation2 + $0x10] sm:$0xff] 0.0
          %800 = vst [vmem:[#allocation2 + $0x18] sm:$0xff] 0.0
        $region85: #{rotationnet_forward.1} parent=76 // pred_fallthru
          _
        %v801 = vld [vmem:[%s762] sm:$0xf]
        %v802 = vld [vmem:[%s762 + $0x4] sm:$0xf]
        %v803 = vld [vmem:[%s762 + $0x8] sm:$0xf]
        %v804 = vld [vmem:[%s762 + $0xc] sm:$0xf]
        %v805 = vld [vmem:[%s762 + $0x10] sm:$0xf]
        %v806 = vld [vmem:[%s762 + $0x14] sm:$0xf]
        %v807 = vld [vmem:[%s762 + $0x18] sm:$0xf]
        %v808 = vld [vmem:[%s762 + $0x1c] sm:$0xf]
        %v809 = vld [vmem:[%s762 + $0x20] sm:$0xf]
        %v810 = vld [vmem:[%s762 + $0x24] sm:$0xf]
        %v811 = vld [vmem:[%s762 + $0x28] sm:$0xf]
        %v812 = vld [vmem:[%s762 + $0x2c] sm:$0xf]
        %v813 = vld [vmem:[%s762 + $0x30] sm:$0xf]
        %v814 = vld [vmem:[%s762 + $0x34] sm:$0xf]
        %v815 = vld [vmem:[%s762 + $0x38] sm:$0xf]
        %v816 = vld [vmem:[%s762 + $0x3c] sm:$0xf]
        %v817 = vld [vmem:[%s762 + $0x40] sm:$0xf]
        %v818 = vld [vmem:[%s762 + $0x44] sm:$0xf]
        %v819 = vld [vmem:[%s762 + $0x48] sm:$0xf]
        %v820 = vld [vmem:[%s762 + $0x4c] sm:$0xf]
        %v821 = vld [vmem:[%s762 + $0x50] sm:$0xf]
        %v822 = vld [vmem:[%s762 + $0x54] sm:$0xf]
        %v823 = vld [vmem:[%s762 + $0x58] sm:$0xf]
        %v824 = vld [vmem:[%s762 + $0x5c] sm:$0xf]
        %v825 = vld [vmem:[%s762 + $0x60] sm:$0xf]
        %v826 = vld [vmem:[%s762 + $0x64] sm:$0xf]
        %v827 = vld [vmem:[%s762 + $0x68] sm:$0xf]
        %v828 = vld [vmem:[%s762 + $0x6c] sm:$0xf]
        %v829 = vld [vmem:[%s762 + $0x70] sm:$0xf]
        %v830 = vld [vmem:[%s762 + $0x74] sm:$0xf]
        %v831 = vld [vmem:[%s762 + $0x78] sm:$0xf]
        %v832 = vld [vmem:[%s762 + $0x7c] sm:$0xf]
        %v833 = vld [vmem:[%s762 + $0x80] sm:$0xf]
        %v834 = vld [vmem:[%s762 + $0x84] sm:$0xf]
        %v835 = vld [vmem:[%s762 + $0x88] sm:$0xf]
        %v836 = vld [vmem:[%s762 + $0x8c] sm:$0xf]
        %v837 = vld [vmem:[%s762 + $0x90] sm:$0xf]
        %v838 = vld [vmem:[%s762 + $0x94] sm:$0xf]
        %v839 = vld [vmem:[%s762 + $0x98] sm:$0xf]
        %v840 = vld [vmem:[%s762 + $0x9c] sm:$0xf]
        %v841 = vld [vmem:[%s762 + $0xa0] sm:$0xf]
        %v842 = vld [vmem:[%s762 + $0xa4] sm:$0xf]
        %v843 = vld [vmem:[%s762 + $0xa8] sm:$0xf]
        %v844 = vld [vmem:[%s762 + $0xac] sm:$0xf]
        %v845 = vld [vmem:[%s762 + $0xb0] sm:$0xf]
        %v846 = vld [vmem:[%s762 + $0xb4] sm:$0xf]
        %v847 = vld [vmem:[%s762 + $0xb8] sm:$0xf]
        %v848 = vld [vmem:[%s762 + $0xbc] sm:$0xf]
        %v849 = vld [vmem:[%s762 + $0xc0] sm:$0xf]
        %v850 = vld [vmem:[%s762 + $0xc4] sm:$0xf]
        %v851 = vld [vmem:[%s762 + $0xc8] sm:$0xf]
        %v852 = vld [vmem:[%s762 + $0xcc] sm:$0xf]
        %v853 = vld [vmem:[%s762 + $0xd0] sm:$0xf]
        %v854 = vld [vmem:[%s762 + $0xd4] sm:$0xf]
        %v855 = vld [vmem:[%s762 + $0xd8] sm:$0xf]
        %v856 = vld [vmem:[%s762 + $0xdc] sm:$0xf]
        %v857 = vld [vmem:[%s762 + $0xe0] sm:$0xf]
        %v858 = vld [vmem:[%s762 + $0xe4] sm:$0xf]
        %v859 = vld [vmem:[%s762 + $0xe8] sm:$0xf]
        %v860 = vld [vmem:[%s762 + $0xec] sm:$0xf]
        %v861 = vld [vmem:[%s762 + $0xf0] sm:$0xf]
        %v862 = vld [vmem:[%s762 + $0xf4] sm:$0xf]
        %v863 = vld [vmem:[%s762 + $0xf8] sm:$0xf]
        %v864 = vld [vmem:[%s762 + $0xfc] sm:$0xf]
        %v865 = vld [vmem:[%s762 + $0x100] sm:$0xf]
        %v866 = vld [vmem:[%s762 + $0x104] sm:$0xf]
        %v867 = vld [vmem:[%s762 + $0x108] sm:$0xf]
        %v868 = vld [vmem:[%s762 + $0x10c] sm:$0xf]
        %v869 = vld [vmem:[%s762 + $0x110] sm:$0xf]
        %v870 = vld [vmem:[%s762 + $0x114] sm:$0xf]
        %v871 = vld [vmem:[%s762 + $0x118] sm:$0xf]
        %v872 = vld [vmem:[%s762 + $0x11c] sm:$0xf]
        %v873 = vld [vmem:[%s762 + $0x120] sm:$0xf]
        %v874 = vld [vmem:[%s762 + $0x124] sm:$0xf]
        %v875 = vld [vmem:[%s762 + $0x128] sm:$0xf]
        %v876 = vld [vmem:[%s762 + $0x12c] sm:$0xf]
        %v877 = vld [vmem:[%s762 + $0x130] sm:$0xf]
        %v878 = vld [vmem:[%s762 + $0x134] sm:$0xf]
        %v879 = vld [vmem:[%s762 + $0x138] sm:$0xf]
        %v880 = vld [vmem:[%s762 + $0x13c] sm:$0xf]
        %v881 = vld [vmem:[%s762 + $0x140] sm:$0xf]
        %v882 = vld [vmem:[%s762 + $0x144] sm:$0xf]
        %v883 = vld [vmem:[%s762 + $0x148] sm:$0xf]
        %v884 = vld [vmem:[%s762 + $0x14c] sm:$0xf]
        %v885 = vld [vmem:[%s762 + $0x150] sm:$0xf]
        %v886 = vld [vmem:[%s762 + $0x154] sm:$0xf]
        %v887 = vld [vmem:[%s762 + $0x158] sm:$0xf]
        %v888 = vld [vmem:[%s762 + $0x15c] sm:$0xf]
        %v889 = vld [vmem:[%s762 + $0x160] sm:$0xf]
        %v890 = vld [vmem:[%s762 + $0x164] sm:$0xf]
        %v891 = vld [vmem:[%s762 + $0x168] sm:$0xf]
        %v892 = vld [vmem:[%s762 + $0x16c] sm:$0xf]
        %v893 = vld [vmem:[%s762 + $0x170] sm:$0xf]
        %v894 = vld [vmem:[%s762 + $0x174] sm:$0xf]
        %v895 = vld [vmem:[%s762 + $0x178] sm:$0xf]
        %v896 = vld [vmem:[%s762 + $0x17c] sm:$0xf]
        %v897 = vld [vmem:[%s762 + $0x180] sm:$0xf]
        %v898 = vld [vmem:[%s762 + $0x184] sm:$0xf]
        %v899 = vld [vmem:[%s762 + $0x188] sm:$0xf]
        %v900 = vld [vmem:[%s762 + $0x18c] sm:$0xf]
        %v901 = vld [vmem:[%s762 + $0x190] sm:$0xf]
        %v902 = vld [vmem:[%s762 + $0x194] sm:$0xf]
        %v903 = vld [vmem:[%s762 + $0x198] sm:$0xf]
        %v904 = vld [vmem:[%s762 + $0x19c] sm:$0xf]
        %v905 = vld [vmem:[%s762 + $0x1a0] sm:$0xf]
        %v906 = vld [vmem:[%s762 + $0x1a4] sm:$0xf]
        %v907 = vld [vmem:[%s762 + $0x1a8] sm:$0xf]
        %v908 = vld [vmem:[%s762 + $0x1ac] sm:$0xf]
        %v909 = vld [vmem:[%s762 + $0x1b0] sm:$0xf]
        %v910 = vld [vmem:[%s762 + $0x1b4] sm:$0xf]
        %v911 = vld [vmem:[%s762 + $0x1b8] sm:$0xf]
        %v912 = vld [vmem:[%s762 + $0x1bc] sm:$0xf]
        %v913 = vld [vmem:[%s762 + $0x1c0] sm:$0xf]
        %v914 = vld [vmem:[%s762 + $0x1c4] sm:$0xf]
        %v915 = vld [vmem:[%s762 + $0x1c8] sm:$0xf]
        %v916 = vld [vmem:[%s762 + $0x1cc] sm:$0xf]
        %v917 = vld [vmem:[%s762 + $0x1d0] sm:$0xf]
        %v918 = vld [vmem:[%s762 + $0x1d4] sm:$0xf]
        %v919 = vld [vmem:[%s762 + $0x1d8] sm:$0xf]
        %v920 = vld [vmem:[%s762 + $0x1dc] sm:$0xf]
        %v921 = vld [vmem:[%s762 + $0x1e0] sm:$0xf]
        %v922 = vld [vmem:[%s762 + $0x1e4] sm:$0xf]
        %v923 = vld [vmem:[%s762 + $0x1e8] sm:$0xf]
        %v924 = vld [vmem:[%s762 + $0x1ec] sm:$0xf]
        %v925 = vld [vmem:[%s762 + $0x1f0] sm:$0xf]
        %v926 = vld [vmem:[%s762 + $0x1f4] sm:$0xf]
        %v927 = vld [vmem:[%s762 + $0x1f8] sm:$0xf]
        %v928 = vld [vmem:[%s762 + $0x1fc] sm:$0xf]
        %v929 = vld [vmem:[%s1] sm:$0xff]
        %v930 = vld [vmem:[%s1 + $0x8] sm:$0xff]
        %v931 = vld [vmem:[%s1 + $0x10] sm:$0xff]
        %v932 = vld [vmem:[%s1 + $0x18] sm:$0xff]
        %v933 = vld [vmem:[%s1 + $0x20] sm:$0xff]
        %v934 = vld [vmem:[%s1 + $0x28] sm:$0xff]
        %v935 = vld [vmem:[%s1 + $0x30] sm:$0xff]
        %v936 = vld [vmem:[%s1 + $0x38] sm:$0xff]
        %v937 = vld [vmem:[%s1 + $0x40] sm:$0x33]
        %v938 = vld [vmem:[%s1 + $0x48] sm:$0x33]
        %v939 = vld [vmem:[%s2] sm:$0xf]
        %v941 = vlaneseq
        %v942 = vshrl.u32 %v941, 7
        %v943 = vsub.s32 0, %v942
        %v944 = vrot.slane %v939, %v943
        %v945 = vlaneseq
        %v946 = vshrl.u32 %v945, 7
        %v947 = vsub.s32 1, %v946
        %v948 = vrot.slane %v939, %v947
        %v949 = vlaneseq
        %v950 = vshrl.u32 %v949, 7
        %v951 = vsub.s32 2, %v950
        %v952 = vrot.slane %v939, %v951
        %v953 = vlaneseq
        %v954 = vshrl.u32 %v953, 7
        %v955 = vsub.s32 3, %v954
        %v956 = vrot.slane %v939, %v955
        %v1089 = vunpack.c.l.b16 %v801
        %v1090 = vunpack.c.l.b16 %v802
        %v1091 = vunpack.c.l.b16 %v803
        %v1092 = vunpack.c.l.b16 %v804
        %v1093 = vunpack.c.l.b16 %v805
        %v1094 = vunpack.c.l.b16 %v806
        %v1095 = vunpack.c.l.b16 %v807
        %v1096 = vunpack.c.l.b16 %v808
        %v1097 = vunpack.c.l.b16 %v809
        %v1098 = vunpack.c.l.b16 %v810
        %v1099 = vunpack.c.l.b16 %v811
        %v1100 = vunpack.c.l.b16 %v812
        %v1101 = vunpack.c.l.b16 %v813
        %v1102 = vunpack.c.l.b16 %v814
        %v1103 = vunpack.c.l.b16 %v815
        %v1104 = vunpack.c.l.b16 %v816
        %v1105 = vunpack.c.l.b16 %v817
        %v1106 = vunpack.c.l.b16 %v818
        %v1107 = vunpack.c.l.b16 %v819
        %v1108 = vunpack.c.l.b16 %v820
        %v1109 = vunpack.c.l.b16 %v821
        %v1110 = vunpack.c.l.b16 %v822
        %v1111 = vunpack.c.l.b16 %v823
        %v1112 = vunpack.c.l.b16 %v824
        %v1113 = vunpack.c.l.b16 %v825
        %v1114 = vunpack.c.l.b16 %v826
        %v1115 = vunpack.c.l.b16 %v827
        %v1116 = vunpack.c.l.b16 %v828
        %v1117 = vunpack.c.l.b16 %v829
        %v1118 = vunpack.c.l.b16 %v830
        %v1119 = vunpack.c.l.b16 %v831
        %v1120 = vunpack.c.l.b16 %v832
        %v1121 = vunpack.c.l.b16 %v833
        %v1122 = vunpack.c.l.b16 %v834
        %v1123 = vunpack.c.l.b16 %v835
        %v1124 = vunpack.c.l.b16 %v836
        %v1125 = vunpack.c.l.b16 %v837
        %v1126 = vunpack.c.l.b16 %v838
        %v1127 = vunpack.c.l.b16 %v839
        %v1128 = vunpack.c.l.b16 %v840
        %v1129 = vunpack.c.l.b16 %v841
        %v1130 = vunpack.c.l.b16 %v842
        %v1131 = vunpack.c.l.b16 %v843
        %v1132 = vunpack.c.l.b16 %v844
        %v1133 = vunpack.c.l.b16 %v845
        %v1134 = vunpack.c.l.b16 %v846
        %v1135 = vunpack.c.l.b16 %v847
        %v1136 = vunpack.c.l.b16 %v848
        %v1137 = vunpack.c.l.b16 %v849
        %v1138 = vunpack.c.l.b16 %v850
        %v1139 = vunpack.c.l.b16 %v851
        %v1140 = vunpack.c.l.b16 %v852
        %v1141 = vunpack.c.l.b16 %v853
        %v1142 = vunpack.c.l.b16 %v854
        %v1143 = vunpack.c.l.b16 %v855
        %v1144 = vunpack.c.l.b16 %v856
        %v1145 = vunpack.c.l.b16 %v857
        %v1146 = vunpack.c.l.b16 %v858
        %v1147 = vunpack.c.l.b16 %v859
        %v1148 = vunpack.c.l.b16 %v860
        %v1149 = vunpack.c.l.b16 %v861
        %v1150 = vunpack.c.l.b16 %v862
        %v1151 = vunpack.c.l.b16 %v863
        %v1152 = vunpack.c.l.b16 %v864
        %v1153 = vunpack.c.l.b16 %v865
        %v1154 = vunpack.c.l.b16 %v866
        %v1155 = vunpack.c.l.b16 %v867
        %v1156 = vunpack.c.l.b16 %v868
        %v1157 = vunpack.c.l.b16 %v869
        %v1158 = vunpack.c.l.b16 %v870
        %v1159 = vunpack.c.l.b16 %v871
        %v1160 = vunpack.c.l.b16 %v872
        %v1161 = vunpack.c.l.b16 %v873
        %v1162 = vunpack.c.l.b16 %v874
        %v1163 = vunpack.c.l.b16 %v875
        %v1164 = vunpack.c.l.b16 %v876
        %v1165 = vunpack.c.l.b16 %v877
        %v1166 = vunpack.c.l.b16 %v878
        %v1167 = vunpack.c.l.b16 %v879
        %v1168 = vunpack.c.l.b16 %v880
        %v1169 = vunpack.c.l.b16 %v881
        %v1170 = vunpack.c.l.b16 %v882
        %v1171 = vunpack.c.l.b16 %v883
        %v1172 = vunpack.c.l.b16 %v884
        %v1173 = vunpack.c.l.b16 %v885
        %v1174 = vunpack.c.l.b16 %v886
        %v1175 = vunpack.c.l.b16 %v887
        %v1176 = vunpack.c.l.b16 %v888
        %v1177 = vunpack.c.l.b16 %v889
        %v1178 = vunpack.c.l.b16 %v890
        %v1179 = vunpack.c.l.b16 %v891
        %v1180 = vunpack.c.l.b16 %v892
        %v1181 = vunpack.c.l.b16 %v893
        %v1182 = vunpack.c.l.b16 %v894
        %v1183 = vunpack.c.l.b16 %v895
        %v1184 = vunpack.c.l.b16 %v896
        %v1185 = vunpack.c.l.b16 %v897
        %v1186 = vunpack.c.l.b16 %v898
        %v1187 = vunpack.c.l.b16 %v899
        %v1188 = vunpack.c.l.b16 %v900
        %v1189 = vunpack.c.l.b16 %v901
        %v1190 = vunpack.c.l.b16 %v902
        %v1191 = vunpack.c.l.b16 %v903
        %v1192 = vunpack.c.l.b16 %v904
        %v1193 = vunpack.c.l.b16 %v905
        %v1194 = vunpack.c.l.b16 %v906
        %v1195 = vunpack.c.l.b16 %v907
        %v1196 = vunpack.c.l.b16 %v908
        %v1197 = vunpack.c.l.b16 %v909
        %v1198 = vunpack.c.l.b16 %v910
        %v1199 = vunpack.c.l.b16 %v911
        %v1200 = vunpack.c.l.b16 %v912
        %v1201 = vunpack.c.l.b16 %v913
        %v1202 = vunpack.c.l.b16 %v914
        %v1203 = vunpack.c.l.b16 %v915
        %v1204 = vunpack.c.l.b16 %v916
        %v1205 = vunpack.c.l.b16 %v917
        %v1206 = vunpack.c.l.b16 %v918
        %v1207 = vunpack.c.l.b16 %v919
        %v1208 = vunpack.c.l.b16 %v920
        %v1209 = vunpack.c.l.b16 %v921
        %v1210 = vunpack.c.l.b16 %v922
        %v1211 = vunpack.c.l.b16 %v923
        %v1212 = vunpack.c.l.b16 %v924
        %v1213 = vunpack.c.l.b16 %v925
        %v1214 = vunpack.c.l.b16 %v926
        %v1215 = vunpack.c.l.b16 %v927
        %v1216 = vunpack.c.l.b16 %v928
        %v1217 = vpack.c.b16 %v1090, %v1089
        %v1218 = vpack.c.b16 %v1092, %v1091
        %v1219 = vpack.c.b16 %v1094, %v1093
        %v1220 = vpack.c.b16 %v1096, %v1095
        %v1221 = vpack.c.b16 %v1098, %v1097
        %v1222 = vpack.c.b16 %v1100, %v1099
        %v1223 = vpack.c.b16 %v1102, %v1101
        %v1224 = vpack.c.b16 %v1104, %v1103
        %v1225 = vpack.c.b16 %v1106, %v1105
        %v1226 = vpack.c.b16 %v1108, %v1107
        %v1227 = vpack.c.b16 %v1110, %v1109
        %v1228 = vpack.c.b16 %v1112, %v1111
        %v1229 = vpack.c.b16 %v1114, %v1113
        %v1230 = vpack.c.b16 %v1116, %v1115
        %v1231 = vpack.c.b16 %v1118, %v1117
        %v1232 = vpack.c.b16 %v1120, %v1119
        %v1233 = vpack.c.b16 %v1122, %v1121
        %v1234 = vpack.c.b16 %v1124, %v1123
        %v1235 = vpack.c.b16 %v1126, %v1125
        %v1236 = vpack.c.b16 %v1128, %v1127
        %v1237 = vpack.c.b16 %v1130, %v1129
        %v1238 = vpack.c.b16 %v1132, %v1131
        %v1239 = vpack.c.b16 %v1134, %v1133
        %v1240 = vpack.c.b16 %v1136, %v1135
        %v1241 = vpack.c.b16 %v1138, %v1137
        %v1242 = vpack.c.b16 %v1140, %v1139
        %v1243 = vpack.c.b16 %v1142, %v1141
        %v1244 = vpack.c.b16 %v1144, %v1143
        %v1245 = vpack.c.b16 %v1146, %v1145
        %v1246 = vpack.c.b16 %v1148, %v1147
        %v1247 = vpack.c.b16 %v1150, %v1149
        %v1248 = vpack.c.b16 %v1152, %v1151
        %v1249 = vpack.c.b16 %v1154, %v1153
        %v1250 = vpack.c.b16 %v1156, %v1155
        %v1251 = vpack.c.b16 %v1158, %v1157
        %v1252 = vpack.c.b16 %v1160, %v1159
        %v1253 = vpack.c.b16 %v1162, %v1161
        %v1254 = vpack.c.b16 %v1164, %v1163
        %v1255 = vpack.c.b16 %v1166, %v1165
        %v1256 = vpack.c.b16 %v1168, %v1167
        %v1257 = vpack.c.b16 %v1170, %v1169
        %v1258 = vpack.c.b16 %v1172, %v1171
        %v1259 = vpack.c.b16 %v1174, %v1173
        %v1260 = vpack.c.b16 %v1176, %v1175
        %v1261 = vpack.c.b16 %v1178, %v1177
        %v1262 = vpack.c.b16 %v1180, %v1179
        %v1263 = vpack.c.b16 %v1182, %v1181
        %v1264 = vpack.c.b16 %v1184, %v1183
        %v1265 = vpack.c.b16 %v1186, %v1185
        %v1266 = vpack.c.b16 %v1188, %v1187
        %v1267 = vpack.c.b16 %v1190, %v1189
        %v1268 = vpack.c.b16 %v1192, %v1191
        %v1269 = vpack.c.b16 %v1194, %v1193
        %v1270 = vpack.c.b16 %v1196, %v1195
        %v1271 = vpack.c.b16 %v1198, %v1197
        %v1272 = vpack.c.b16 %v1200, %v1199
        %v1273 = vpack.c.b16 %v1202, %v1201
        %v1274 = vpack.c.b16 %v1204, %v1203
        %v1275 = vpack.c.b16 %v1206, %v1205
        %v1276 = vpack.c.b16 %v1208, %v1207
        %v1277 = vpack.c.b16 %v1210, %v1209
        %v1278 = vpack.c.b16 %v1212, %v1211
        %v1279 = vpack.c.b16 %v1214, %v1213
        %v1280 = vpack.c.b16 %v1216, %v1215
        %v1291 = vunpack.c.l.b16 %v929
        %v1292 = vunpack.c.h.b16 %v929
        %v1293 = vunpack.c.l.b16 %v930
        %v1294 = vunpack.c.h.b16 %v930
        %v1295 = vunpack.c.l.b16 %v931
        %v1296 = vunpack.c.h.b16 %v931
        %v1297 = vunpack.c.l.b16 %v932
        %v1298 = vunpack.c.h.b16 %v932
        %v1299 = vunpack.c.l.b16 %v933
        %v1300 = vunpack.c.h.b16 %v933
        %v1301 = vunpack.c.l.b16 %v934
        %v1302 = vunpack.c.h.b16 %v934
        %v1303 = vunpack.c.l.b16 %v935
        %v1304 = vunpack.c.h.b16 %v935
        %v1305 = vunpack.c.l.b16 %v936
        %v1306 = vunpack.c.h.b16 %v936
        %v1307 = vunpack.c.l.b16 %v937
        %v1308 = vunpack.c.h.b16 %v937
        %v1309 = vunpack.c.l.b16 %v938
        %v1310 = vunpack.c.h.b16 %v938
        %v1311 = vpack.c.b16 %v1295, %v1291
        %v1312 = vpack.c.b16 %v1296, %v1292
        %v1313 = vpack.c.b16 %v1297, %v1293
        %v1314 = vpack.c.b16 %v1298, %v1294
        %v1315 = vpack.c.b16 %v1303, %v1299
        %v1316 = vpack.c.b16 %v1304, %v1300
        %v1317 = vpack.c.b16 %v1305, %v1301
        %v1318 = vpack.c.b16 %v1306, %v1302
        %v1319 = vpack.c.b16 %v1307, %v1307
        %v1320 = vpack.c.b16 %v1308, %v1308
        %v1321 = vpack.c.b16 %v1309, %v1309
        %v1322 = vpack.c.b16 %v1310, %v1310
        %vm1331 = vcmask 293888
        %v1333 = vsel %vm1331, %v1217, 0
        %v1336 = vsel %vm1331, %v1218, 0
        %v1339 = vsel %vm1331, %v1219, 0
        %v1342 = vsel %vm1331, %v1220, 0
        %v1345 = vsel %vm1331, %v1221, 0
        %v1348 = vsel %vm1331, %v1222, 0
        %v1351 = vsel %vm1331, %v1223, 0
        %v1354 = vsel %vm1331, %v1224, 0
        %v1357 = vsel %vm1331, %v1225, 0
        %v1360 = vsel %vm1331, %v1226, 0
        %v1363 = vsel %vm1331, %v1227, 0
        %v1366 = vsel %vm1331, %v1228, 0
        %v1369 = vsel %vm1331, %v1229, 0
        %v1372 = vsel %vm1331, %v1230, 0
        %v1375 = vsel %vm1331, %v1231, 0
        %v1378 = vsel %vm1331, %v1232, 0
        %v1381 = vsel %vm1331, %v1233, 0
        %v1384 = vsel %vm1331, %v1234, 0
        %v1387 = vsel %vm1331, %v1235, 0
        %v1390 = vsel %vm1331, %v1236, 0
        %v1393 = vsel %vm1331, %v1237, 0
        %v1396 = vsel %vm1331, %v1238, 0
        %v1399 = vsel %vm1331, %v1239, 0
        %v1402 = vsel %vm1331, %v1240, 0
        %v1405 = vsel %vm1331, %v1241, 0
        %v1408 = vsel %vm1331, %v1242, 0
        %v1411 = vsel %vm1331, %v1243, 0
        %v1414 = vsel %vm1331, %v1244, 0
        %v1417 = vsel %vm1331, %v1245, 0
        %v1420 = vsel %vm1331, %v1246, 0
        %v1423 = vsel %vm1331, %v1247, 0
        %v1426 = vsel %vm1331, %v1248, 0
        %v1429 = vsel %vm1331, %v1249, 0
        %v1432 = vsel %vm1331, %v1250, 0
        %v1435 = vsel %vm1331, %v1251, 0
        %v1438 = vsel %vm1331, %v1252, 0
        %v1441 = vsel %vm1331, %v1253, 0
        %v1444 = vsel %vm1331, %v1254, 0
        %v1447 = vsel %vm1331, %v1255, 0
        %v1450 = vsel %vm1331, %v1256, 0
        %v1453 = vsel %vm1331, %v1257, 0
        %v1456 = vsel %vm1331, %v1258, 0
        %v1459 = vsel %vm1331, %v1259, 0
        %v1462 = vsel %vm1331, %v1260, 0
        %v1465 = vsel %vm1331, %v1261, 0
        %v1468 = vsel %vm1331, %v1262, 0
        %v1471 = vsel %vm1331, %v1263, 0
        %v1474 = vsel %vm1331, %v1264, 0
        %v1477 = vsel %vm1331, %v1265, 0
        %v1480 = vsel %vm1331, %v1266, 0
        %v1483 = vsel %vm1331, %v1267, 0
        %v1486 = vsel %vm1331, %v1268, 0
        %v1489 = vsel %vm1331, %v1269, 0
        %v1492 = vsel %vm1331, %v1270, 0
        %v1495 = vsel %vm1331, %v1271, 0
        %v1498 = vsel %vm1331, %v1272, 0
        %v1501 = vsel %vm1331, %v1273, 0
        %v1504 = vsel %vm1331, %v1274, 0
        %v1507 = vsel %vm1331, %v1275, 0
        %v1510 = vsel %vm1331, %v1276, 0
        %v1513 = vsel %vm1331, %v1277, 0
        %v1516 = vsel %vm1331, %v1278, 0
        %v1519 = vsel %vm1331, %v1279, 0
        %v1522 = vsel %vm1331, %v1280, 0
        %vm1524 = vcmask 1041408
        %v1526 = vsel %vm1524, %v1319, 0
        %v1529 = vsel %vm1524, %v1320, 0
        %v1532 = vsel %vm1524, %v1321, 0
        %v1535 = vsel %vm1524, %v1322, 0
        %1537 = vmatprep.subr.bf16.mxu0 %v1312
        %1538 = vmatpush1.bf16.msra.mxu0 %v1311
        %1539 = vmatprep.subr.bf16.mxu0 %v1316
        %1540 = vmatpush1.bf16.msra.mxu0 %v1315
        %1541 = vmatprep.subr.bf16.mxu0 %v1529
        %1542 = vmatpush1.bf16.msra.mxu0 %v1526
        %1543 = vmatprep.subr.bf16.mxu0 0
        %1544 = vmatpush1.bf16.msra.mxu0 0
        %1545 = vmatprep.subr.bf16.mxu0 0
        %1546 = vmatpush1.bf16.msra.mxu0 0
        %1547 = vmatprep.subr.bf16.mxu0 0
        %1548 = vmatpush1.bf16.msra.mxu0 0
        %1549 = vmatprep.subr.bf16.mxu0 0
        %1550 = vmatpush1.bf16.msra.mxu0 0
        %1551 = vmatprep.subr.bf16.mxu0 0
        %1552 = vmatpush1.bf16.msra.mxu0 0
        %1553 = vmatprep.subr.bf16.mxu0 0
        %1554 = vmatpush1.bf16.msra.mxu0 0
        %1555 = vmatprep.subr.bf16.mxu0 0
        %1556 = vmatpush1.bf16.msra.mxu0 0
        %1557 = vmatprep.subr.bf16.mxu0 0
        %1558 = vmatpush1.bf16.msra.mxu0 0
        %1559 = vmatprep.subr.bf16.mxu0 0
        %1560 = vmatpush1.bf16.msra.mxu0 0
        %1561 = vmatprep.subr.bf16.mxu0 0
        %1562 = vmatpush1.bf16.msra.mxu0 0
        %1563 = vmatprep.subr.bf16.mxu0 0
        %1564 = vmatpush1.bf16.msra.mxu0 0
        %1565 = vmatprep.subr.bf16.mxu0 0
        %1566 = vmatpush1.bf16.msra.mxu0 0
        %1567 = vmatprep.subr.bf16.mxu0 0
        %1568 = vmatpush1.bf16.msra.mxu0 0
        %1569 = vmatprep.mubr.bf16.mxu0 0
        %1570 = vmatmul.mubr.bf16.gmra.mrb[0].mxu0 %v1333
        %v1571 = vpop.f32.mrb[0].mxu0
        %v1572 = vadd.f32 %v944, %v1571
        %v1573 = vpop.f32.mrb[0].mxu0
        %v1574 = vadd.f32 %v948, %v1573
        %v1575 = vpop.f32.mrb[0].mxu0
        %v1576 = vadd.f32 %v944, %v1575
        %v1577 = vpop.f32.mrb[0].mxu0
        %v1578 = vadd.f32 %v948, %v1577
        %1579 = vmatprep.mubr.bf16.mxu0 0
        %1580 = vmatmul.mubr.bf16.gmra.mrb[0].mxu0 %v1336
        %v1581 = vpop.f32.mrb[0].mxu0
        %v1582 = vadd.f32 %v944, %v1581
        %v1583 = vpop.f32.mrb[0].mxu0
        %v1584 = vadd.f32 %v948, %v1583
        %v1585 = vpop.f32.mrb[0].mxu0
        %v1586 = vadd.f32 %v944, %v1585
        %v1587 = vpop.f32.mrb[0].mxu0
        %v1588 = vadd.f32 %v948, %v1587
        %1589 = vmatprep.mubr.bf16.mxu0 0
        %1590 = vmatmul.mubr.bf16.gmra.mrb[0].mxu0 %v1339
        %v1591 = vpop.f32.mrb[0].mxu0
        %v1592 = vadd.f32 %v944, %v1591
        %v1593 = vpop.f32.mrb[0].mxu0
        %v1594 = vadd.f32 %v948, %v1593
        %v1595 = vpop.f32.mrb[0].mxu0
        %v1596 = vadd.f32 %v944, %v1595
        %v1597 = vpop.f32.mrb[0].mxu0
        %v1598 = vadd.f32 %v948, %v1597
        %1599 = vmatprep.mubr.bf16.mxu0 0
        %1600 = vmatmul.mubr.bf16.gmra.mrb[0].mxu0 %v1342
        %v1601 = vpop.f32.mrb[0].mxu0
        %v1602 = vadd.f32 %v944, %v1601
        %v1603 = vpop.f32.mrb[0].mxu0
        %v1604 = vadd.f32 %v948, %v1603
        %v1605 = vpop.f32.mrb[0].mxu0
        %v1606 = vadd.f32 %v944, %v1605
        %v1607 = vpop.f32.mrb[0].mxu0
        %v1608 = vadd.f32 %v948, %v1607
        %1609 = vmatprep.mubr.bf16.mxu0 0
        %1610 = vmatmul.mubr.bf16.gmra.mrb[0].mxu0 %v1345
        %v1611 = vpop.f32.mrb[0].mxu0
        %v1612 = vadd.f32 %v944, %v1611
        %v1613 = vpop.f32.mrb[0].mxu0
        %v1614 = vadd.f32 %v948, %v1613
        %v1615 = vpop.f32.mrb[0].mxu0
        %v1616 = vadd.f32 %v944, %v1615
        %v1617 = vpop.f32.mrb[0].mxu0
        %v1618 = vadd.f32 %v948, %v1617
        %1619 = vmatprep.mubr.bf16.mxu0 0
        %1620 = vmatmul.mubr.bf16.gmra.mrb[0].mxu0 %v1348
        %v1621 = vpop.f32.mrb[0].mxu0
        %v1622 = vadd.f32 %v944, %v1621
        %v1623 = vpop.f32.mrb[0].mxu0
        %v1624 = vadd.f32 %v948, %v1623
        %v1625 = vpop.f32.mrb[0].mxu0
        %v1626 = vadd.f32 %v944, %v1625
        %v1627 = vpop.f32.mrb[0].mxu0
        %v1628 = vadd.f32 %v948, %v1627
        %1629 = vmatprep.mubr.bf16.mxu0 0
        %1630 = vmatmul.mubr.bf16.gmra.mrb[0].mxu0 %v1351
        %v1631 = vpop.f32.mrb[0].mxu0
        %v1632 = vadd.f32 %v944, %v1631
        %v1633 = vpop.f32.mrb[0].mxu0
        %v1634 = vadd.f32 %v948, %v1633
        %v1635 = vpop.f32.mrb[0].mxu0
        %v1636 = vadd.f32 %v944, %v1635
        %v1637 = vpop.f32.mrb[0].mxu0
        %v1638 = vadd.f32 %v948, %v1637
        %1639 = vmatprep.mubr.bf16.mxu0 0
        %1640 = vmatmul.mubr.bf16.gmra.mrb[0].mxu0 %v1354
        %v1641 = vpop.f32.mrb[0].mxu0
        %v1642 = vadd.f32 %v944, %v1641
        %v1643 = vpop.f32.mrb[0].mxu0
        %v1644 = vadd.f32 %v948, %v1643
        %v1645 = vpop.f32.mrb[0].mxu0
        %v1646 = vadd.f32 %v944, %v1645
        %v1647 = vpop.f32.mrb[0].mxu0
        %v1648 = vadd.f32 %v948, %v1647
        %1649 = vmatprep.mubr.bf16.mxu0 0
        %1650 = vmatmul.mubr.bf16.gmra.mrb[0].mxu0 %v1357
        %v1651 = vpop.f32.mrb[0].mxu0
        %v1652 = vadd.f32 %v944, %v1651
        %v1653 = vpop.f32.mrb[0].mxu0
        %v1654 = vadd.f32 %v948, %v1653
        %v1655 = vpop.f32.mrb[0].mxu0
        %v1656 = vadd.f32 %v944, %v1655
        %v1657 = vpop.f32.mrb[0].mxu0
        %v1658 = vadd.f32 %v948, %v1657
        %1659 = vmatprep.mubr.bf16.mxu0 0
        %1660 = vmatmul.mubr.bf16.gmra.mrb[0].mxu0 %v1360
        %v1661 = vpop.f32.mrb[0].mxu0
        %v1662 = vadd.f32 %v944, %v1661
        %v1663 = vpop.f32.mrb[0].mxu0
        %v1664 = vadd.f32 %v948, %v1663
        %v1665 = vpop.f32.mrb[0].mxu0
        %v1666 = vadd.f32 %v944, %v1665
        %v1667 = vpop.f32.mrb[0].mxu0
        %v1668 = vadd.f32 %v948, %v1667
        %1669 = vmatprep.mubr.bf16.mxu0 0
        %1670 = vmatmul.mubr.bf16.gmra.mrb[0].mxu0 %v1363
        %v1671 = vpop.f32.mrb[0].mxu0
        %v1672 = vadd.f32 %v944, %v1671
        %v1673 = vpop.f32.mrb[0].mxu0
        %v1674 = vadd.f32 %v948, %v1673
        %v1675 = vpop.f32.mrb[0].mxu0
        %v1676 = vadd.f32 %v944, %v1675
        %v1677 = vpop.f32.mrb[0].mxu0
        %v1678 = vadd.f32 %v948, %v1677
        %1679 = vmatprep.mubr.bf16.mxu0 0
        %1680 = vmatmul.mubr.bf16.gmra.mrb[0].mxu0 %v1366
        %v1681 = vpop.f32.mrb[0].mxu0
        %v1682 = vadd.f32 %v944, %v1681
        %v1683 = vpop.f32.mrb[0].mxu0
        %v1684 = vadd.f32 %v948, %v1683
        %v1685 = vpop.f32.mrb[0].mxu0
        %v1686 = vadd.f32 %v944, %v1685
        %v1687 = vpop.f32.mrb[0].mxu0
        %v1688 = vadd.f32 %v948, %v1687
        %1689 = vmatprep.mubr.bf16.mxu0 0
        %1690 = vmatmul.mubr.bf16.gmra.mrb[0].mxu0 %v1369
        %v1691 = vpop.f32.mrb[0].mxu0
        %v1692 = vadd.f32 %v944, %v1691
        %v1693 = vpop.f32.mrb[0].mxu0
        %v1694 = vadd.f32 %v948, %v1693
        %v1695 = vpop.f32.mrb[0].mxu0
        %v1696 = vadd.f32 %v944, %v1695
        %v1697 = vpop.f32.mrb[0].mxu0
        %v1698 = vadd.f32 %v948, %v1697
        %1699 = vmatprep.mubr.bf16.mxu0 0
        %1700 = vmatmul.mubr.bf16.gmra.mrb[0].mxu0 %v1372
        %v1701 = vpop.f32.mrb[0].mxu0
        %v1702 = vadd.f32 %v944, %v1701
        %v1703 = vpop.f32.mrb[0].mxu0
        %v1704 = vadd.f32 %v948, %v1703
        %v1705 = vpop.f32.mrb[0].mxu0
        %v1706 = vadd.f32 %v944, %v1705
        %v1707 = vpop.f32.mrb[0].mxu0
        %v1708 = vadd.f32 %v948, %v1707
        %1709 = vmatprep.mubr.bf16.mxu0 0
        %1710 = vmatmul.mubr.bf16.gmra.mrb[0].mxu0 %v1375
        %v1711 = vpop.f32.mrb[0].mxu0
        %v1712 = vadd.f32 %v944, %v1711
        %v1713 = vpop.f32.mrb[0].mxu0
        %v1714 = vadd.f32 %v948, %v1713
        %v1715 = vpop.f32.mrb[0].mxu0
        %v1716 = vadd.f32 %v944, %v1715
        %v1717 = vpop.f32.mrb[0].mxu0
        %v1718 = vadd.f32 %v948, %v1717
        %1719 = vmatprep.mubr.bf16.mxu0 0
        %1720 = vmatmul.mubr.bf16.gmra.mrb[0].mxu0 %v1378
        %v1721 = vpop.f32.mrb[0].mxu0
        %v1722 = vadd.f32 %v944, %v1721
        %v1723 = vpop.f32.mrb[0].mxu0
        %v1724 = vadd.f32 %v948, %v1723
        %v1725 = vpop.f32.mrb[0].mxu0
        %v1726 = vadd.f32 %v944, %v1725
        %v1727 = vpop.f32.mrb[0].mxu0
        %v1728 = vadd.f32 %v948, %v1727
        %1729 = vmatprep.mubr.bf16.mxu0 0
        %1730 = vmatmul.mubr.bf16.gmra.mrb[0].mxu0 %v1381
        %v1731 = vpop.f32.mrb[0].mxu0
        %v1732 = vadd.f32 %v944, %v1731
        %v1733 = vpop.f32.mrb[0].mxu0
        %v1734 = vadd.f32 %v948, %v1733
        %v1735 = vpop.f32.mrb[0].mxu0
        %v1736 = vadd.f32 %v944, %v1735
        %v1737 = vpop.f32.mrb[0].mxu0
        %v1738 = vadd.f32 %v948, %v1737
        %1739 = vmatprep.mubr.bf16.mxu0 0
        %1740 = vmatmul.mubr.bf16.gmra.mrb[0].mxu0 %v1384
        %v1741 = vpop.f32.mrb[0].mxu0
        %v1742 = vadd.f32 %v944, %v1741
        %v1743 = vpop.f32.mrb[0].mxu0
        %v1744 = vadd.f32 %v948, %v1743
        %v1745 = vpop.f32.mrb[0].mxu0
        %v1746 = vadd.f32 %v944, %v1745
        %v1747 = vpop.f32.mrb[0].mxu0
        %v1748 = vadd.f32 %v948, %v1747
        %1749 = vmatprep.mubr.bf16.mxu0 0
        %1750 = vmatmul.mubr.bf16.gmra.mrb[0].mxu0 %v1387
        %v1751 = vpop.f32.mrb[0].mxu0
        %v1752 = vadd.f32 %v944, %v1751
        %v1753 = vpop.f32.mrb[0].mxu0
        %v1754 = vadd.f32 %v948, %v1753
        %v1755 = vpop.f32.mrb[0].mxu0
        %v1756 = vadd.f32 %v944, %v1755
        %v1757 = vpop.f32.mrb[0].mxu0
        %v1758 = vadd.f32 %v948, %v1757
        %1759 = vmatprep.mubr.bf16.mxu0 0
        %1760 = vmatmul.mubr.bf16.gmra.mrb[0].mxu0 %v1390
        %v1761 = vpop.f32.mrb[0].mxu0
        %v1762 = vadd.f32 %v944, %v1761
        %v1763 = vpop.f32.mrb[0].mxu0
        %v1764 = vadd.f32 %v948, %v1763
        %v1765 = vpop.f32.mrb[0].mxu0
        %v1766 = vadd.f32 %v944, %v1765
        %v1767 = vpop.f32.mrb[0].mxu0
        %v1768 = vadd.f32 %v948, %v1767
        %1769 = vmatprep.mubr.bf16.mxu0 0
        %1770 = vmatmul.mubr.bf16.gmra.mrb[0].mxu0 %v1393
        %v1771 = vpop.f32.mrb[0].mxu0
        %v1772 = vadd.f32 %v944, %v1771
        %v1773 = vpop.f32.mrb[0].mxu0
        %v1774 = vadd.f32 %v948, %v1773
        %v1775 = vpop.f32.mrb[0].mxu0
        %v1776 = vadd.f32 %v944, %v1775
        %v1777 = vpop.f32.mrb[0].mxu0
        %v1778 = vadd.f32 %v948, %v1777
        %1779 = vmatprep.mubr.bf16.mxu0 0
        %1780 = vmatmul.mubr.bf16.gmra.mrb[0].mxu0 %v1396
        %v1781 = vpop.f32.mrb[0].mxu0
        %v1782 = vadd.f32 %v944, %v1781
        %v1783 = vpop.f32.mrb[0].mxu0
        %v1784 = vadd.f32 %v948, %v1783
        %v1785 = vpop.f32.mrb[0].mxu0
        %v1786 = vadd.f32 %v944, %v1785
        %v1787 = vpop.f32.mrb[0].mxu0
        %v1788 = vadd.f32 %v948, %v1787
        %1789 = vmatprep.mubr.bf16.mxu0 0
        %1790 = vmatmul.mubr.bf16.gmra.mrb[0].mxu0 %v1399
        %v1791 = vpop.f32.mrb[0].mxu0
        %v1792 = vadd.f32 %v944, %v1791
        %v1793 = vpop.f32.mrb[0].mxu0
        %v1794 = vadd.f32 %v948, %v1793
        %v1795 = vpop.f32.mrb[0].mxu0
        %v1796 = vadd.f32 %v944, %v1795
        %v1797 = vpop.f32.mrb[0].mxu0
        %v1798 = vadd.f32 %v948, %v1797
        %1799 = vmatprep.mubr.bf16.mxu0 0
        %1800 = vmatmul.mubr.bf16.gmra.mrb[0].mxu0 %v1402
        %v1801 = vpop.f32.mrb[0].mxu0
        %v1802 = vadd.f32 %v944, %v1801
        %v1803 = vpop.f32.mrb[0].mxu0
        %v1804 = vadd.f32 %v948, %v1803
        %v1805 = vpop.f32.mrb[0].mxu0
        %v1806 = vadd.f32 %v944, %v1805
        %v1807 = vpop.f32.mrb[0].mxu0
        %v1808 = vadd.f32 %v948, %v1807
        %1809 = vmatprep.mubr.bf16.mxu0 0
        %1810 = vmatmul.mubr.bf16.gmra.mrb[0].mxu0 %v1405
        %v1811 = vpop.f32.mrb[0].mxu0
        %v1812 = vadd.f32 %v944, %v1811
        %v1813 = vpop.f32.mrb[0].mxu0
        %v1814 = vadd.f32 %v948, %v1813
        %v1815 = vpop.f32.mrb[0].mxu0
        %v1816 = vadd.f32 %v944, %v1815
        %v1817 = vpop.f32.mrb[0].mxu0
        %v1818 = vadd.f32 %v948, %v1817
        %1819 = vmatprep.mubr.bf16.mxu0 0
        %1820 = vmatmul.mubr.bf16.gmra.mrb[0].mxu0 %v1408
        %v1821 = vpop.f32.mrb[0].mxu0
        %v1822 = vadd.f32 %v944, %v1821
        %v1823 = vpop.f32.mrb[0].mxu0
        %v1824 = vadd.f32 %v948, %v1823
        %v1825 = vpop.f32.mrb[0].mxu0
        %v1826 = vadd.f32 %v944, %v1825
        %v1827 = vpop.f32.mrb[0].mxu0
        %v1828 = vadd.f32 %v948, %v1827
        %1829 = vmatprep.mubr.bf16.mxu0 0
        %1830 = vmatmul.mubr.bf16.gmra.mrb[0].mxu0 %v1411
        %v1831 = vpop.f32.mrb[0].mxu0
        %v1832 = vadd.f32 %v944, %v1831
        %v1833 = vpop.f32.mrb[0].mxu0
        %v1834 = vadd.f32 %v948, %v1833
        %v1835 = vpop.f32.mrb[0].mxu0
        %v1836 = vadd.f32 %v944, %v1835
        %v1837 = vpop.f32.mrb[0].mxu0
        %v1838 = vadd.f32 %v948, %v1837
        %1839 = vmatprep.mubr.bf16.mxu0 0
        %1840 = vmatmul.mubr.bf16.gmra.mrb[0].mxu0 %v1414
        %v1841 = vpop.f32.mrb[0].mxu0
        %v1842 = vadd.f32 %v944, %v1841
        %v1843 = vpop.f32.mrb[0].mxu0
        %v1844 = vadd.f32 %v948, %v1843
        %v1845 = vpop.f32.mrb[0].mxu0
        %v1846 = vadd.f32 %v944, %v1845
        %v1847 = vpop.f32.mrb[0].mxu0
        %v1848 = vadd.f32 %v948, %v1847
        %1849 = vmatprep.mubr.bf16.mxu0 0
        %1850 = vmatmul.mubr.bf16.gmra.mrb[0].mxu0 %v1417
        %v1851 = vpop.f32.mrb[0].mxu0
        %v1852 = vadd.f32 %v944, %v1851
        %v1853 = vpop.f32.mrb[0].mxu0
        %v1854 = vadd.f32 %v948, %v1853
        %v1855 = vpop.f32.mrb[0].mxu0
        %v1856 = vadd.f32 %v944, %v1855
        %v1857 = vpop.f32.mrb[0].mxu0
        %v1858 = vadd.f32 %v948, %v1857
        %1859 = vmatprep.mubr.bf16.mxu0 0
        %1860 = vmatmul.mubr.bf16.gmra.mrb[0].mxu0 %v1420
        %v1861 = vpop.f32.mrb[0].mxu0
        %v1862 = vadd.f32 %v944, %v1861
        %v1863 = vpop.f32.mrb[0].mxu0
        %v1864 = vadd.f32 %v948, %v1863
        %v1865 = vpop.f32.mrb[0].mxu0
        %v1866 = vadd.f32 %v944, %v1865
        %v1867 = vpop.f32.mrb[0].mxu0
        %v1868 = vadd.f32 %v948, %v1867
        %1869 = vmatprep.mubr.bf16.mxu0 0
        %1870 = vmatmul.mubr.bf16.gmra.mrb[0].mxu0 %v1423
        %v1871 = vpop.f32.mrb[0].mxu0
        %v1872 = vadd.f32 %v944, %v1871
        %v1873 = vpop.f32.mrb[0].mxu0
        %v1874 = vadd.f32 %v948, %v1873
        %v1875 = vpop.f32.mrb[0].mxu0
        %v1876 = vadd.f32 %v944, %v1875
        %v1877 = vpop.f32.mrb[0].mxu0
        %v1878 = vadd.f32 %v948, %v1877
        %1879 = vmatprep.mubr.bf16.mxu0 0
        %1880 = vmatmul.mubr.bf16.gmra.mrb[0].mxu0 %v1426
        %v1881 = vpop.f32.mrb[0].mxu0
        %v1882 = vadd.f32 %v944, %v1881
        %v1883 = vpop.f32.mrb[0].mxu0
        %v1884 = vadd.f32 %v948, %v1883
        %v1885 = vpop.f32.mrb[0].mxu0
        %v1886 = vadd.f32 %v944, %v1885
        %v1887 = vpop.f32.mrb[0].mxu0
        %v1888 = vadd.f32 %v948, %v1887
        %1889 = vmatprep.mubr.bf16.mxu0 0
        %1890 = vmatmul.mubr.bf16.gmra.mrb[0].mxu0 %v1429
        %v1891 = vpop.f32.mrb[0].mxu0
        %v1892 = vadd.f32 %v944, %v1891
        %v1893 = vpop.f32.mrb[0].mxu0
        %v1894 = vadd.f32 %v948, %v1893
        %v1895 = vpop.f32.mrb[0].mxu0
        %v1896 = vadd.f32 %v944, %v1895
        %v1897 = vpop.f32.mrb[0].mxu0
        %v1898 = vadd.f32 %v948, %v1897
        %1899 = vmatprep.mubr.bf16.mxu0 0
        %1900 = vmatmul.mubr.bf16.gmra.mrb[0].mxu0 %v1432
        %v1901 = vpop.f32.mrb[0].mxu0
        %v1902 = vadd.f32 %v944, %v1901
        %v1903 = vpop.f32.mrb[0].mxu0
        %v1904 = vadd.f32 %v948, %v1903
        %v1905 = vpop.f32.mrb[0].mxu0
        %v1906 = vadd.f32 %v944, %v1905
        %v1907 = vpop.f32.mrb[0].mxu0
        %v1908 = vadd.f32 %v948, %v1907
        %1909 = vmatprep.mubr.bf16.mxu0 0
        %1910 = vmatmul.mubr.bf16.gmra.mrb[0].mxu0 %v1435
        %v1911 = vpop.f32.mrb[0].mxu0
        %v1912 = vadd.f32 %v944, %v1911
        %v1913 = vpop.f32.mrb[0].mxu0
        %v1914 = vadd.f32 %v948, %v1913
        %v1915 = vpop.f32.mrb[0].mxu0
        %v1916 = vadd.f32 %v944, %v1915
        %v1917 = vpop.f32.mrb[0].mxu0
        %v1918 = vadd.f32 %v948, %v1917
        %1919 = vmatprep.mubr.bf16.mxu0 0
        %1920 = vmatmul.mubr.bf16.gmra.mrb[0].mxu0 %v1438
        %v1921 = vpop.f32.mrb[0].mxu0
        %v1922 = vadd.f32 %v944, %v1921
        %v1923 = vpop.f32.mrb[0].mxu0
        %v1924 = vadd.f32 %v948, %v1923
        %v1925 = vpop.f32.mrb[0].mxu0
        %v1926 = vadd.f32 %v944, %v1925
        %v1927 = vpop.f32.mrb[0].mxu0
        %v1928 = vadd.f32 %v948, %v1927
        %1929 = vmatprep.mubr.bf16.mxu0 0
        %1930 = vmatmul.mubr.bf16.gmra.mrb[0].mxu0 %v1441
        %v1931 = vpop.f32.mrb[0].mxu0
        %v1932 = vadd.f32 %v944, %v1931
        %v1933 = vpop.f32.mrb[0].mxu0
        %v1934 = vadd.f32 %v948, %v1933
        %v1935 = vpop.f32.mrb[0].mxu0
        %v1936 = vadd.f32 %v944, %v1935
        %v1937 = vpop.f32.mrb[0].mxu0
        %v1938 = vadd.f32 %v948, %v1937
        %1939 = vmatprep.mubr.bf16.mxu0 0
        %1940 = vmatmul.mubr.bf16.gmra.mrb[0].mxu0 %v1444
        %v1941 = vpop.f32.mrb[0].mxu0
        %v1942 = vadd.f32 %v944, %v1941
        %v1943 = vpop.f32.mrb[0].mxu0
        %v1944 = vadd.f32 %v948, %v1943
        %v1945 = vpop.f32.mrb[0].mxu0
        %v1946 = vadd.f32 %v944, %v1945
        %v1947 = vpop.f32.mrb[0].mxu0
        %v1948 = vadd.f32 %v948, %v1947
        %1949 = vmatprep.mubr.bf16.mxu0 0
        %1950 = vmatmul.mubr.bf16.gmra.mrb[0].mxu0 %v1447
        %v1951 = vpop.f32.mrb[0].mxu0
        %v1952 = vadd.f32 %v944, %v1951
        %v1953 = vpop.f32.mrb[0].mxu0
        %v1954 = vadd.f32 %v948, %v1953
        %v1955 = vpop.f32.mrb[0].mxu0
        %v1956 = vadd.f32 %v944, %v1955
        %v1957 = vpop.f32.mrb[0].mxu0
        %v1958 = vadd.f32 %v948, %v1957
        %1959 = vmatprep.mubr.bf16.mxu0 0
        %1960 = vmatmul.mubr.bf16.gmra.mrb[0].mxu0 %v1450
        %v1961 = vpop.f32.mrb[0].mxu0
        %v1962 = vadd.f32 %v944, %v1961
        %v1963 = vpop.f32.mrb[0].mxu0
        %v1964 = vadd.f32 %v948, %v1963
        %v1965 = vpop.f32.mrb[0].mxu0
        %v1966 = vadd.f32 %v944, %v1965
        %v1967 = vpop.f32.mrb[0].mxu0
        %v1968 = vadd.f32 %v948, %v1967
        %1969 = vmatprep.mubr.bf16.mxu0 0
        %1970 = vmatmul.mubr.bf16.gmra.mrb[0].mxu0 %v1453
        %v1971 = vpop.f32.mrb[0].mxu0
        %v1972 = vadd.f32 %v944, %v1971
        %v1973 = vpop.f32.mrb[0].mxu0
        %v1974 = vadd.f32 %v948, %v1973
        %v1975 = vpop.f32.mrb[0].mxu0
        %v1976 = vadd.f32 %v944, %v1975
        %v1977 = vpop.f32.mrb[0].mxu0
        %v1978 = vadd.f32 %v948, %v1977
        %1979 = vmatprep.mubr.bf16.mxu0 0
        %1980 = vmatmul.mubr.bf16.gmra.mrb[0].mxu0 %v1456
        %v1981 = vpop.f32.mrb[0].mxu0
        %v1982 = vadd.f32 %v944, %v1981
        %v1983 = vpop.f32.mrb[0].mxu0
        %v1984 = vadd.f32 %v948, %v1983
        %v1985 = vpop.f32.mrb[0].mxu0
        %v1986 = vadd.f32 %v944, %v1985
        %v1987 = vpop.f32.mrb[0].mxu0
        %v1988 = vadd.f32 %v948, %v1987
        %1989 = vmatprep.mubr.bf16.mxu0 0
        %1990 = vmatmul.mubr.bf16.gmra.mrb[0].mxu0 %v1459
        %v1991 = vpop.f32.mrb[0].mxu0
        %v1992 = vadd.f32 %v944, %v1991
        %v1993 = vpop.f32.mrb[0].mxu0
        %v1994 = vadd.f32 %v948, %v1993
        %v1995 = vpop.f32.mrb[0].mxu0
        %v1996 = vadd.f32 %v944, %v1995
        %v1997 = vpop.f32.mrb[0].mxu0
        %v1998 = vadd.f32 %v948, %v1997
        %1999 = vmatprep.mubr.bf16.mxu0 0
        %2000 = vmatmul.mubr.bf16.gmra.mrb[0].mxu0 %v1462
        %v2001 = vpop.f32.mrb[0].mxu0
        %v2002 = vadd.f32 %v944, %v2001
        %v2003 = vpop.f32.mrb[0].mxu0
        %v2004 = vadd.f32 %v948, %v2003
        %v2005 = vpop.f32.mrb[0].mxu0
        %v2006 = vadd.f32 %v944, %v2005
        %v2007 = vpop.f32.mrb[0].mxu0
        %v2008 = vadd.f32 %v948, %v2007
        %2009 = vmatprep.mubr.bf16.mxu0 0
        %2010 = vmatmul.mubr.bf16.gmra.mrb[0].mxu0 %v1465
        %v2011 = vpop.f32.mrb[0].mxu0
        %v2012 = vadd.f32 %v944, %v2011
        %v2013 = vpop.f32.mrb[0].mxu0
        %v2014 = vadd.f32 %v948, %v2013
        %v2015 = vpop.f32.mrb[0].mxu0
        %v2016 = vadd.f32 %v944, %v2015
        %v2017 = vpop.f32.mrb[0].mxu0
        %v2018 = vadd.f32 %v948, %v2017
        %2019 = vmatprep.mubr.bf16.mxu0 0
        %2020 = vmatmul.mubr.bf16.gmra.mrb[0].mxu0 %v1468
        %v2021 = vpop.f32.mrb[0].mxu0
        %v2022 = vadd.f32 %v944, %v2021
        %v2023 = vpop.f32.mrb[0].mxu0
        %v2024 = vadd.f32 %v948, %v2023
        %v2025 = vpop.f32.mrb[0].mxu0
        %v2026 = vadd.f32 %v944, %v2025
        %v2027 = vpop.f32.mrb[0].mxu0
        %v2028 = vadd.f32 %v948, %v2027
        %2029 = vmatprep.mubr.bf16.mxu0 0
        %2030 = vmatmul.mubr.bf16.gmra.mrb[0].mxu0 %v1471
        %v2031 = vpop.f32.mrb[0].mxu0
        %v2032 = vadd.f32 %v944, %v2031
        %v2033 = vpop.f32.mrb[0].mxu0
        %v2034 = vadd.f32 %v948, %v2033
        %v2035 = vpop.f32.mrb[0].mxu0
        %v2036 = vadd.f32 %v944, %v2035
        %v2037 = vpop.f32.mrb[0].mxu0
        %v2038 = vadd.f32 %v948, %v2037
        %2039 = vmatprep.mubr.bf16.mxu0 0
        %2040 = vmatmul.mubr.bf16.gmra.mrb[0].mxu0 %v1474
        %v2041 = vpop.f32.mrb[0].mxu0
        %v2042 = vadd.f32 %v944, %v2041
        %v2043 = vpop.f32.mrb[0].mxu0
        %v2044 = vadd.f32 %v948, %v2043
        %v2045 = vpop.f32.mrb[0].mxu0
        %v2046 = vadd.f32 %v944, %v2045
        %v2047 = vpop.f32.mrb[0].mxu0
        %v2048 = vadd.f32 %v948, %v2047
        %2049 = vmatprep.mubr.bf16.mxu0 0
        %2050 = vmatmul.mubr.bf16.gmra.mrb[0].mxu0 %v1477
        %v2051 = vpop.f32.mrb[0].mxu0
        %v2052 = vadd.f32 %v944, %v2051
        %v2053 = vpop.f32.mrb[0].mxu0
        %v2054 = vadd.f32 %v948, %v2053
        %v2055 = vpop.f32.mrb[0].mxu0
        %v2056 = vadd.f32 %v944, %v2055
        %v2057 = vpop.f32.mrb[0].mxu0
        %v2058 = vadd.f32 %v948, %v2057
        %2059 = vmatprep.mubr.bf16.mxu0 0
        %2060 = vmatmul.mubr.bf16.gmra.mrb[0].mxu0 %v1480
        %v2061 = vpop.f32.mrb[0].mxu0
        %v2062 = vadd.f32 %v944, %v2061
        %v2063 = vpop.f32.mrb[0].mxu0
        %v2064 = vadd.f32 %v948, %v2063
        %v2065 = vpop.f32.mrb[0].mxu0
        %v2066 = vadd.f32 %v944, %v2065
        %v2067 = vpop.f32.mrb[0].mxu0
        %v2068 = vadd.f32 %v948, %v2067
        %2069 = vmatprep.mubr.bf16.mxu0 0
        %2070 = vmatmul.mubr.bf16.gmra.mrb[0].mxu0 %v1483
        %v2071 = vpop.f32.mrb[0].mxu0
        %v2072 = vadd.f32 %v944, %v2071
        %v2073 = vpop.f32.mrb[0].mxu0
        %v2074 = vadd.f32 %v948, %v2073
        %v2075 = vpop.f32.mrb[0].mxu0
        %v2076 = vadd.f32 %v944, %v2075
        %v2077 = vpop.f32.mrb[0].mxu0
        %v2078 = vadd.f32 %v948, %v2077
        %2079 = vmatprep.mubr.bf16.mxu0 0
        %2080 = vmatmul.mubr.bf16.gmra.mrb[0].mxu0 %v1486
        %v2081 = vpop.f32.mrb[0].mxu0
        %v2082 = vadd.f32 %v944, %v2081
        %v2083 = vpop.f32.mrb[0].mxu0
        %v2084 = vadd.f32 %v948, %v2083
        %v2085 = vpop.f32.mrb[0].mxu0
        %v2086 = vadd.f32 %v944, %v2085
        %v2087 = vpop.f32.mrb[0].mxu0
        %v2088 = vadd.f32 %v948, %v2087
        %2089 = vmatprep.mubr.bf16.mxu0 0
        %2090 = vmatmul.mubr.bf16.gmra.mrb[0].mxu0 %v1489
        %v2091 = vpop.f32.mrb[0].mxu0
        %v2092 = vadd.f32 %v944, %v2091
        %v2093 = vpop.f32.mrb[0].mxu0
        %v2094 = vadd.f32 %v948, %v2093
        %v2095 = vpop.f32.mrb[0].mxu0
        %v2096 = vadd.f32 %v944, %v2095
        %v2097 = vpop.f32.mrb[0].mxu0
        %v2098 = vadd.f32 %v948, %v2097
        %2099 = vmatprep.mubr.bf16.mxu0 0
        %2100 = vmatmul.mubr.bf16.gmra.mrb[0].mxu0 %v1492
        %v2101 = vpop.f32.mrb[0].mxu0
        %v2102 = vadd.f32 %v944, %v2101
        %v2103 = vpop.f32.mrb[0].mxu0
        %v2104 = vadd.f32 %v948, %v2103
        %v2105 = vpop.f32.mrb[0].mxu0
        %v2106 = vadd.f32 %v944, %v2105
        %v2107 = vpop.f32.mrb[0].mxu0
        %v2108 = vadd.f32 %v948, %v2107
        %2109 = vmatprep.mubr.bf16.mxu0 0
        %2110 = vmatmul.mubr.bf16.gmra.mrb[0].mxu0 %v1495
        %v2111 = vpop.f32.mrb[0].mxu0
        %v2112 = vadd.f32 %v944, %v2111
        %v2113 = vpop.f32.mrb[0].mxu0
        %v2114 = vadd.f32 %v948, %v2113
        %v2115 = vpop.f32.mrb[0].mxu0
        %v2116 = vadd.f32 %v944, %v2115
        %v2117 = vpop.f32.mrb[0].mxu0
        %v2118 = vadd.f32 %v948, %v2117
        %2119 = vmatprep.mubr.bf16.mxu0 0
        %2120 = vmatmul.mubr.bf16.gmra.mrb[0].mxu0 %v1498
        %v2121 = vpop.f32.mrb[0].mxu0
        %v2122 = vadd.f32 %v944, %v2121
        %v2123 = vpop.f32.mrb[0].mxu0
        %v2124 = vadd.f32 %v948, %v2123
        %v2125 = vpop.f32.mrb[0].mxu0
        %v2126 = vadd.f32 %v944, %v2125
        %v2127 = vpop.f32.mrb[0].mxu0
        %v2128 = vadd.f32 %v948, %v2127
        %2129 = vmatprep.mubr.bf16.mxu0 0
        %2130 = vmatmul.mubr.bf16.gmra.mrb[0].mxu0 %v1501
        %v2131 = vpop.f32.mrb[0].mxu0
        %v2132 = vadd.f32 %v944, %v2131
        %v2133 = vpop.f32.mrb[0].mxu0
        %v2134 = vadd.f32 %v948, %v2133
        %v2135 = vpop.f32.mrb[0].mxu0
        %v2136 = vadd.f32 %v944, %v2135
        %v2137 = vpop.f32.mrb[0].mxu0
        %v2138 = vadd.f32 %v948, %v2137
        %2139 = vmatprep.mubr.bf16.mxu0 0
        %2140 = vmatmul.mubr.bf16.gmra.mrb[0].mxu0 %v1504
        %v2141 = vpop.f32.mrb[0].mxu0
        %v2142 = vadd.f32 %v944, %v2141
        %v2143 = vpop.f32.mrb[0].mxu0
        %v2144 = vadd.f32 %v948, %v2143
        %v2145 = vpop.f32.mrb[0].mxu0
        %v2146 = vadd.f32 %v944, %v2145
        %v2147 = vpop.f32.mrb[0].mxu0
        %v2148 = vadd.f32 %v948, %v2147
        %2149 = vmatprep.mubr.bf16.mxu0 0
        %2150 = vmatmul.mubr.bf16.gmra.mrb[0].mxu0 %v1507
        %v2151 = vpop.f32.mrb[0].mxu0
        %v2152 = vadd.f32 %v944, %v2151
        %v2153 = vpop.f32.mrb[0].mxu0
        %v2154 = vadd.f32 %v948, %v2153
        %v2155 = vpop.f32.mrb[0].mxu0
        %v2156 = vadd.f32 %v944, %v2155
        %v2157 = vpop.f32.mrb[0].mxu0
        %v2158 = vadd.f32 %v948, %v2157
        %2159 = vmatprep.mubr.bf16.mxu0 0
        %2160 = vmatmul.mubr.bf16.gmra.mrb[0].mxu0 %v1510
        %v2161 = vpop.f32.mrb[0].mxu0
        %v2162 = vadd.f32 %v944, %v2161
        %v2163 = vpop.f32.mrb[0].mxu0
        %v2164 = vadd.f32 %v948, %v2163
        %v2165 = vpop.f32.mrb[0].mxu0
        %v2166 = vadd.f32 %v944, %v2165
        %v2167 = vpop.f32.mrb[0].mxu0
        %v2168 = vadd.f32 %v948, %v2167
        %2169 = vmatprep.mubr.bf16.mxu0 0
        %2170 = vmatmul.mubr.bf16.gmra.mrb[0].mxu0 %v1513
        %v2171 = vpop.f32.mrb[0].mxu0
        %v2172 = vadd.f32 %v944, %v2171
        %v2173 = vpop.f32.mrb[0].mxu0
        %v2174 = vadd.f32 %v948, %v2173
        %v2175 = vpop.f32.mrb[0].mxu0
        %v2176 = vadd.f32 %v944, %v2175
        %v2177 = vpop.f32.mrb[0].mxu0
        %v2178 = vadd.f32 %v948, %v2177
        %2179 = vmatprep.mubr.bf16.mxu0 0
        %2180 = vmatmul.mubr.bf16.gmra.mrb[0].mxu0 %v1516
        %v2181 = vpop.f32.mrb[0].mxu0
        %v2182 = vadd.f32 %v944, %v2181
        %v2183 = vpop.f32.mrb[0].mxu0
        %v2184 = vadd.f32 %v948, %v2183
        %v2185 = vpop.f32.mrb[0].mxu0
        %v2186 = vadd.f32 %v944, %v2185
        %v2187 = vpop.f32.mrb[0].mxu0
        %v2188 = vadd.f32 %v948, %v2187
        %2189 = vmatprep.mubr.bf16.mxu0 0
        %2190 = vmatmul.mubr.bf16.gmra.mrb[0].mxu0 %v1519
        %v2191 = vpop.f32.mrb[0].mxu0
        %v2192 = vadd.f32 %v944, %v2191
        %v2193 = vpop.f32.mrb[0].mxu0
        %v2194 = vadd.f32 %v948, %v2193
        %v2195 = vpop.f32.mrb[0].mxu0
        %v2196 = vadd.f32 %v944, %v2195
        %v2197 = vpop.f32.mrb[0].mxu0
        %v2198 = vadd.f32 %v948, %v2197
        %2199 = vmatprep.mubr.bf16.mxu0 0
        %2200 = vmatmul.mubr.bf16.gmra.mrb[0].mxu0 %v1522
        %v2201 = vpop.f32.mrb[0].mxu0
        %v2202 = vadd.f32 %v944, %v2201
        %v2203 = vpop.f32.mrb[0].mxu0
        %v2204 = vadd.f32 %v948, %v2203
        %v2205 = vpop.f32.mrb[0].mxu0
        %v2206 = vadd.f32 %v944, %v2205
        %v2207 = vpop.f32.mrb[0].mxu0
        %v2208 = vadd.f32 %v948, %v2207
        %2209 = vdwg.mxu0
        %2210 = vmatprep.subr.bf16.mxu0 %v1314
        %2211 = vmatpush1.bf16.msra.mxu0 %v1313
        %2212 = vmatprep.subr.bf16.mxu0 %v1318
        %2213 = vmatpush1.bf16.msra.mxu0 %v1317
        %2214 = vmatprep.subr.bf16.mxu0 %v1535
        %2215 = vmatpush1.bf16.msra.mxu0 %v1532
        %2216 = vmatprep.subr.bf16.mxu0 0
        %2217 = vmatpush1.bf16.msra.mxu0 0
        %2218 = vmatprep.subr.bf16.mxu0 0
        %2219 = vmatpush1.bf16.msra.mxu0 0
        %2220 = vmatprep.subr.bf16.mxu0 0
        %2221 = vmatpush1.bf16.msra.mxu0 0
        %2222 = vmatprep.subr.bf16.mxu0 0
        %2223 = vmatpush1.bf16.msra.mxu0 0
        %2224 = vmatprep.subr.bf16.mxu0 0
        %2225 = vmatpush1.bf16.msra.mxu0 0
        %2226 = vmatprep.subr.bf16.mxu0 0
        %2227 = vmatpush1.bf16.msra.mxu0 0
        %2228 = vmatprep.subr.bf16.mxu0 0
        %2229 = vmatpush1.bf16.msra.mxu0 0
        %2230 = vmatprep.subr.bf16.mxu0 0
        %2231 = vmatpush1.bf16.msra.mxu0 0
        %2232 = vmatprep.subr.bf16.mxu0 0
        %2233 = vmatpush1.bf16.msra.mxu0 0
        %2234 = vmatprep.subr.bf16.mxu0 0
        %2235 = vmatpush1.bf16.msra.mxu0 0
        %2236 = vmatprep.subr.bf16.mxu0 0
        %2237 = vmatpush1.bf16.msra.mxu0 0
        %2238 = vmatprep.subr.bf16.mxu0 0
        %2239 = vmatpush1.bf16.msra.mxu0 0
        %2240 = vmatprep.subr.bf16.mxu0 0
        %2241 = vmatpush1.bf16.msra.mxu0 0
        %2242 = vmatprep.mubr.bf16.mxu0 0
        %2243 = vmatmul.mubr.bf16.gmra.mrb[0].mxu0 %v1333
        %v2244 = vpop.f32.mrb[0].mxu0
        %v2245 = vadd.f32 %v952, %v2244
        %v2246 = vpop.f32.mrb[0].mxu0
        %v2247 = vadd.f32 %v956, %v2246
        %v2248 = vpop.f32.mrb[0].mxu0
        %v2249 = vadd.f32 %v952, %v2248
        %v2250 = vpop.f32.mrb[0].mxu0
        %v2251 = vadd.f32 %v956, %v2250
        %2252 = vmatprep.mubr.bf16.mxu0 0
        %2253 = vmatmul.mubr.bf16.gmra.mrb[0].mxu0 %v1336
        %v2254 = vpop.f32.mrb[0].mxu0
        %v2255 = vadd.f32 %v952, %v2254
        %v2256 = vpop.f32.mrb[0].mxu0
        %v2257 = vadd.f32 %v956, %v2256
        %v2258 = vpop.f32.mrb[0].mxu0
        %v2259 = vadd.f32 %v952, %v2258
        %v2260 = vpop.f32.mrb[0].mxu0
        %v2261 = vadd.f32 %v956, %v2260
        %2262 = vmatprep.mubr.bf16.mxu0 0
        %2263 = vmatmul.mubr.bf16.gmra.mrb[0].mxu0 %v1339
        %v2264 = vpop.f32.mrb[0].mxu0
        %v2265 = vadd.f32 %v952, %v2264
        %v2266 = vpop.f32.mrb[0].mxu0
        %v2267 = vadd.f32 %v956, %v2266
        %v2268 = vpop.f32.mrb[0].mxu0
        %v2269 = vadd.f32 %v952, %v2268
        %v2270 = vpop.f32.mrb[0].mxu0
        %v2271 = vadd.f32 %v956, %v2270
        %2272 = vmatprep.mubr.bf16.mxu0 0
        %2273 = vmatmul.mubr.bf16.gmra.mrb[0].mxu0 %v1342
        %v2274 = vpop.f32.mrb[0].mxu0
        %v2275 = vadd.f32 %v952, %v2274
        %v2276 = vpop.f32.mrb[0].mxu0
        %v2277 = vadd.f32 %v956, %v2276
        %v2278 = vpop.f32.mrb[0].mxu0
        %v2279 = vadd.f32 %v952, %v2278
        %v2280 = vpop.f32.mrb[0].mxu0
        %v2281 = vadd.f32 %v956, %v2280
        %2282 = vmatprep.mubr.bf16.mxu0 0
        %2283 = vmatmul.mubr.bf16.gmra.mrb[0].mxu0 %v1345
        %v2284 = vpop.f32.mrb[0].mxu0
        %v2285 = vadd.f32 %v952, %v2284
        %v2286 = vpop.f32.mrb[0].mxu0
        %v2287 = vadd.f32 %v956, %v2286
        %v2288 = vpop.f32.mrb[0].mxu0
        %v2289 = vadd.f32 %v952, %v2288
        %v2290 = vpop.f32.mrb[0].mxu0
        %v2291 = vadd.f32 %v956, %v2290
        %2292 = vmatprep.mubr.bf16.mxu0 0
        %2293 = vmatmul.mubr.bf16.gmra.mrb[0].mxu0 %v1348
        %v2294 = vpop.f32.mrb[0].mxu0
        %v2295 = vadd.f32 %v952, %v2294
        %v2296 = vpop.f32.mrb[0].mxu0
        %v2297 = vadd.f32 %v956, %v2296
        %v2298 = vpop.f32.mrb[0].mxu0
        %v2299 = vadd.f32 %v952, %v2298
        %v2300 = vpop.f32.mrb[0].mxu0
        %v2301 = vadd.f32 %v956, %v2300
        %2302 = vmatprep.mubr.bf16.mxu0 0
        %2303 = vmatmul.mubr.bf16.gmra.mrb[0].mxu0 %v1351
        %v2304 = vpop.f32.mrb[0].mxu0
        %v2305 = vadd.f32 %v952, %v2304
        %v2306 = vpop.f32.mrb[0].mxu0
        %v2307 = vadd.f32 %v956, %v2306
        %v2308 = vpop.f32.mrb[0].mxu0
        %v2309 = vadd.f32 %v952, %v2308
        %v2310 = vpop.f32.mrb[0].mxu0
        %v2311 = vadd.f32 %v956, %v2310
        %2312 = vmatprep.mubr.bf16.mxu0 0
        %2313 = vmatmul.mubr.bf16.gmra.mrb[0].mxu0 %v1354
        %v2314 = vpop.f32.mrb[0].mxu0
        %v2315 = vadd.f32 %v952, %v2314
        %v2316 = vpop.f32.mrb[0].mxu0
        %v2317 = vadd.f32 %v956, %v2316
        %v2318 = vpop.f32.mrb[0].mxu0
        %v2319 = vadd.f32 %v952, %v2318
        %v2320 = vpop.f32.mrb[0].mxu0
        %v2321 = vadd.f32 %v956, %v2320
        %2322 = vmatprep.mubr.bf16.mxu0 0
        %2323 = vmatmul.mubr.bf16.gmra.mrb[0].mxu0 %v1357
        %v2324 = vpop.f32.mrb[0].mxu0
        %v2325 = vadd.f32 %v952, %v2324
        %v2326 = vpop.f32.mrb[0].mxu0
        %v2327 = vadd.f32 %v956, %v2326
        %v2328 = vpop.f32.mrb[0].mxu0
        %v2329 = vadd.f32 %v952, %v2328
        %v2330 = vpop.f32.mrb[0].mxu0
        %v2331 = vadd.f32 %v956, %v2330
        %2332 = vmatprep.mubr.bf16.mxu0 0
        %2333 = vmatmul.mubr.bf16.gmra.mrb[0].mxu0 %v1360
        %v2334 = vpop.f32.mrb[0].mxu0
        %v2335 = vadd.f32 %v952, %v2334
        %v2336 = vpop.f32.mrb[0].mxu0
        %v2337 = vadd.f32 %v956, %v2336
        %v2338 = vpop.f32.mrb[0].mxu0
        %v2339 = vadd.f32 %v952, %v2338
        %v2340 = vpop.f32.mrb[0].mxu0
        %v2341 = vadd.f32 %v956, %v2340
        %2342 = vmatprep.mubr.bf16.mxu0 0
        %2343 = vmatmul.mubr.bf16.gmra.mrb[0].mxu0 %v1363
        %v2344 = vpop.f32.mrb[0].mxu0
        %v2345 = vadd.f32 %v952, %v2344
        %v2346 = vpop.f32.mrb[0].mxu0
        %v2347 = vadd.f32 %v956, %v2346
        %v2348 = vpop.f32.mrb[0].mxu0
        %v2349 = vadd.f32 %v952, %v2348
        %v2350 = vpop.f32.mrb[0].mxu0
        %v2351 = vadd.f32 %v956, %v2350
        %2352 = vmatprep.mubr.bf16.mxu0 0
        %2353 = vmatmul.mubr.bf16.gmra.mrb[0].mxu0 %v1366
        %v2354 = vpop.f32.mrb[0].mxu0
        %v2355 = vadd.f32 %v952, %v2354
        %v2356 = vpop.f32.mrb[0].mxu0
        %v2357 = vadd.f32 %v956, %v2356
        %v2358 = vpop.f32.mrb[0].mxu0
        %v2359 = vadd.f32 %v952, %v2358
        %v2360 = vpop.f32.mrb[0].mxu0
        %v2361 = vadd.f32 %v956, %v2360
        %2362 = vmatprep.mubr.bf16.mxu0 0
        %2363 = vmatmul.mubr.bf16.gmra.mrb[0].mxu0 %v1369
        %v2364 = vpop.f32.mrb[0].mxu0
        %v2365 = vadd.f32 %v952, %v2364
        %v2366 = vpop.f32.mrb[0].mxu0
        %v2367 = vadd.f32 %v956, %v2366
        %v2368 = vpop.f32.mrb[0].mxu0
        %v2369 = vadd.f32 %v952, %v2368
        %v2370 = vpop.f32.mrb[0].mxu0
        %v2371 = vadd.f32 %v956, %v2370
        %2372 = vmatprep.mubr.bf16.mxu0 0
        %2373 = vmatmul.mubr.bf16.gmra.mrb[0].mxu0 %v1372
        %v2374 = vpop.f32.mrb[0].mxu0
        %v2375 = vadd.f32 %v952, %v2374
        %v2376 = vpop.f32.mrb[0].mxu0
        %v2377 = vadd.f32 %v956, %v2376
        %v2378 = vpop.f32.mrb[0].mxu0
        %v2379 = vadd.f32 %v952, %v2378
        %v2380 = vpop.f32.mrb[0].mxu0
        %v2381 = vadd.f32 %v956, %v2380
        %2382 = vmatprep.mubr.bf16.mxu0 0
        %2383 = vmatmul.mubr.bf16.gmra.mrb[0].mxu0 %v1375
        %v2384 = vpop.f32.mrb[0].mxu0
        %v2385 = vadd.f32 %v952, %v2384
        %v2386 = vpop.f32.mrb[0].mxu0
        %v2387 = vadd.f32 %v956, %v2386
        %v2388 = vpop.f32.mrb[0].mxu0
        %v2389 = vadd.f32 %v952, %v2388
        %v2390 = vpop.f32.mrb[0].mxu0
        %v2391 = vadd.f32 %v956, %v2390
        %2392 = vmatprep.mubr.bf16.mxu0 0
        %2393 = vmatmul.mubr.bf16.gmra.mrb[0].mxu0 %v1378
        %v2394 = vpop.f32.mrb[0].mxu0
        %v2395 = vadd.f32 %v952, %v2394
        %v2396 = vpop.f32.mrb[0].mxu0
        %v2397 = vadd.f32 %v956, %v2396
        %v2398 = vpop.f32.mrb[0].mxu0
        %v2399 = vadd.f32 %v952, %v2398
        %v2400 = vpop.f32.mrb[0].mxu0
        %v2401 = vadd.f32 %v956, %v2400
        %2402 = vmatprep.mubr.bf16.mxu0 0
        %2403 = vmatmul.mubr.bf16.gmra.mrb[0].mxu0 %v1381
        %v2404 = vpop.f32.mrb[0].mxu0
        %v2405 = vadd.f32 %v952, %v2404
        %v2406 = vpop.f32.mrb[0].mxu0
        %v2407 = vadd.f32 %v956, %v2406
        %v2408 = vpop.f32.mrb[0].mxu0
        %v2409 = vadd.f32 %v952, %v2408
        %v2410 = vpop.f32.mrb[0].mxu0
        %v2411 = vadd.f32 %v956, %v2410
        %2412 = vmatprep.mubr.bf16.mxu0 0
        %2413 = vmatmul.mubr.bf16.gmra.mrb[0].mxu0 %v1384
        %v2414 = vpop.f32.mrb[0].mxu0
        %v2415 = vadd.f32 %v952, %v2414
        %v2416 = vpop.f32.mrb[0].mxu0
        %v2417 = vadd.f32 %v956, %v2416
        %v2418 = vpop.f32.mrb[0].mxu0
        %v2419 = vadd.f32 %v952, %v2418
        %v2420 = vpop.f32.mrb[0].mxu0
        %v2421 = vadd.f32 %v956, %v2420
        %2422 = vmatprep.mubr.bf16.mxu0 0
        %2423 = vmatmul.mubr.bf16.gmra.mrb[0].mxu0 %v1387
        %v2424 = vpop.f32.mrb[0].mxu0
        %v2425 = vadd.f32 %v952, %v2424
        %v2426 = vpop.f32.mrb[0].mxu0
        %v2427 = vadd.f32 %v956, %v2426
        %v2428 = vpop.f32.mrb[0].mxu0
        %v2429 = vadd.f32 %v952, %v2428
        %v2430 = vpop.f32.mrb[0].mxu0
        %v2431 = vadd.f32 %v956, %v2430
        %2432 = vmatprep.mubr.bf16.mxu0 0
        %2433 = vmatmul.mubr.bf16.gmra.mrb[0].mxu0 %v1390
        %v2434 = vpop.f32.mrb[0].mxu0
        %v2435 = vadd.f32 %v952, %v2434
        %v2436 = vpop.f32.mrb[0].mxu0
        %v2437 = vadd.f32 %v956, %v2436
        %v2438 = vpop.f32.mrb[0].mxu0
        %v2439 = vadd.f32 %v952, %v2438
        %v2440 = vpop.f32.mrb[0].mxu0
        %v2441 = vadd.f32 %v956, %v2440
        %2442 = vmatprep.mubr.bf16.mxu0 0
        %2443 = vmatmul.mubr.bf16.gmra.mrb[0].mxu0 %v1393
        %v2444 = vpop.f32.mrb[0].mxu0
        %v2445 = vadd.f32 %v952, %v2444
        %v2446 = vpop.f32.mrb[0].mxu0
        %v2447 = vadd.f32 %v956, %v2446
        %v2448 = vpop.f32.mrb[0].mxu0
        %v2449 = vadd.f32 %v952, %v2448
        %v2450 = vpop.f32.mrb[0].mxu0
        %v2451 = vadd.f32 %v956, %v2450
        %2452 = vmatprep.mubr.bf16.mxu0 0
        %2453 = vmatmul.mubr.bf16.gmra.mrb[0].mxu0 %v1396
        %v2454 = vpop.f32.mrb[0].mxu0
        %v2455 = vadd.f32 %v952, %v2454
        %v2456 = vpop.f32.mrb[0].mxu0
        %v2457 = vadd.f32 %v956, %v2456
        %v2458 = vpop.f32.mrb[0].mxu0
        %v2459 = vadd.f32 %v952, %v2458
        %v2460 = vpop.f32.mrb[0].mxu0
        %v2461 = vadd.f32 %v956, %v2460
        %2462 = vmatprep.mubr.bf16.mxu0 0
        %2463 = vmatmul.mubr.bf16.gmra.mrb[0].mxu0 %v1399
        %v2464 = vpop.f32.mrb[0].mxu0
        %v2465 = vadd.f32 %v952, %v2464
        %v2466 = vpop.f32.mrb[0].mxu0
        %v2467 = vadd.f32 %v956, %v2466
        %v2468 = vpop.f32.mrb[0].mxu0
        %v2469 = vadd.f32 %v952, %v2468
        %v2470 = vpop.f32.mrb[0].mxu0
        %v2471 = vadd.f32 %v956, %v2470
        %2472 = vmatprep.mubr.bf16.mxu0 0
        %2473 = vmatmul.mubr.bf16.gmra.mrb[0].mxu0 %v1402
        %v2474 = vpop.f32.mrb[0].mxu0
        %v2475 = vadd.f32 %v952, %v2474
        %v2476 = vpop.f32.mrb[0].mxu0
        %v2477 = vadd.f32 %v956, %v2476
        %v2478 = vpop.f32.mrb[0].mxu0
        %v2479 = vadd.f32 %v952, %v2478
        %v2480 = vpop.f32.mrb[0].mxu0
        %v2481 = vadd.f32 %v956, %v2480
        %2482 = vmatprep.mubr.bf16.mxu0 0
        %2483 = vmatmul.mubr.bf16.gmra.mrb[0].mxu0 %v1405
        %v2484 = vpop.f32.mrb[0].mxu0
        %v2485 = vadd.f32 %v952, %v2484
        %v2486 = vpop.f32.mrb[0].mxu0
        %v2487 = vadd.f32 %v956, %v2486
        %v2488 = vpop.f32.mrb[0].mxu0
        %v2489 = vadd.f32 %v952, %v2488
        %v2490 = vpop.f32.mrb[0].mxu0
        %v2491 = vadd.f32 %v956, %v2490
        %2492 = vmatprep.mubr.bf16.mxu0 0
        %2493 = vmatmul.mubr.bf16.gmra.mrb[0].mxu0 %v1408
        %v2494 = vpop.f32.mrb[0].mxu0
        %v2495 = vadd.f32 %v952, %v2494
        %v2496 = vpop.f32.mrb[0].mxu0
        %v2497 = vadd.f32 %v956, %v2496
        %v2498 = vpop.f32.mrb[0].mxu0
        %v2499 = vadd.f32 %v952, %v2498
        %v2500 = vpop.f32.mrb[0].mxu0
        %v2501 = vadd.f32 %v956, %v2500
        %2502 = vmatprep.mubr.bf16.mxu0 0
        %2503 = vmatmul.mubr.bf16.gmra.mrb[0].mxu0 %v1411
        %v2504 = vpop.f32.mrb[0].mxu0
        %v2505 = vadd.f32 %v952, %v2504
        %v2506 = vpop.f32.mrb[0].mxu0
        %v2507 = vadd.f32 %v956, %v2506
        %v2508 = vpop.f32.mrb[0].mxu0
        %v2509 = vadd.f32 %v952, %v2508
        %v2510 = vpop.f32.mrb[0].mxu0
        %v2511 = vadd.f32 %v956, %v2510
        %2512 = vmatprep.mubr.bf16.mxu0 0
        %2513 = vmatmul.mubr.bf16.gmra.mrb[0].mxu0 %v1414
        %v2514 = vpop.f32.mrb[0].mxu0
        %v2515 = vadd.f32 %v952, %v2514
        %v2516 = vpop.f32.mrb[0].mxu0
        %v2517 = vadd.f32 %v956, %v2516
        %v2518 = vpop.f32.mrb[0].mxu0
        %v2519 = vadd.f32 %v952, %v2518
        %v2520 = vpop.f32.mrb[0].mxu0
        %v2521 = vadd.f32 %v956, %v2520
        %2522 = vmatprep.mubr.bf16.mxu0 0
        %2523 = vmatmul.mubr.bf16.gmra.mrb[0].mxu0 %v1417
        %v2524 = vpop.f32.mrb[0].mxu0
        %v2525 = vadd.f32 %v952, %v2524
        %v2526 = vpop.f32.mrb[0].mxu0
        %v2527 = vadd.f32 %v956, %v2526
        %v2528 = vpop.f32.mrb[0].mxu0
        %v2529 = vadd.f32 %v952, %v2528
        %v2530 = vpop.f32.mrb[0].mxu0
        %v2531 = vadd.f32 %v956, %v2530
        %2532 = vmatprep.mubr.bf16.mxu0 0
        %2533 = vmatmul.mubr.bf16.gmra.mrb[0].mxu0 %v1420
        %v2534 = vpop.f32.mrb[0].mxu0
        %v2535 = vadd.f32 %v952, %v2534
        %v2536 = vpop.f32.mrb[0].mxu0
        %v2537 = vadd.f32 %v956, %v2536
        %v2538 = vpop.f32.mrb[0].mxu0
        %v2539 = vadd.f32 %v952, %v2538
        %v2540 = vpop.f32.mrb[0].mxu0
        %v2541 = vadd.f32 %v956, %v2540
        %2542 = vmatprep.mubr.bf16.mxu0 0
        %2543 = vmatmul.mubr.bf16.gmra.mrb[0].mxu0 %v1423
        %v2544 = vpop.f32.mrb[0].mxu0
        %v2545 = vadd.f32 %v952, %v2544
        %v2546 = vpop.f32.mrb[0].mxu0
        %v2547 = vadd.f32 %v956, %v2546
        %v2548 = vpop.f32.mrb[0].mxu0
        %v2549 = vadd.f32 %v952, %v2548
        %v2550 = vpop.f32.mrb[0].mxu0
        %v2551 = vadd.f32 %v956, %v2550
        %2552 = vmatprep.mubr.bf16.mxu0 0
        %2553 = vmatmul.mubr.bf16.gmra.mrb[0].mxu0 %v1426
        %v2554 = vpop.f32.mrb[0].mxu0
        %v2555 = vadd.f32 %v952, %v2554
        %v2556 = vpop.f32.mrb[0].mxu0
        %v2557 = vadd.f32 %v956, %v2556
        %v2558 = vpop.f32.mrb[0].mxu0
        %v2559 = vadd.f32 %v952, %v2558
        %v2560 = vpop.f32.mrb[0].mxu0
        %v2561 = vadd.f32 %v956, %v2560
        %2562 = vmatprep.mubr.bf16.mxu0 0
        %2563 = vmatmul.mubr.bf16.gmra.mrb[0].mxu0 %v1429
        %v2564 = vpop.f32.mrb[0].mxu0
        %v2565 = vadd.f32 %v952, %v2564
        %v2566 = vpop.f32.mrb[0].mxu0
        %v2567 = vadd.f32 %v956, %v2566
        %v2568 = vpop.f32.mrb[0].mxu0
        %v2569 = vadd.f32 %v952, %v2568
        %v2570 = vpop.f32.mrb[0].mxu0
        %v2571 = vadd.f32 %v956, %v2570
        %2572 = vmatprep.mubr.bf16.mxu0 0
        %2573 = vmatmul.mubr.bf16.gmra.mrb[0].mxu0 %v1432
        %v2574 = vpop.f32.mrb[0].mxu0
        %v2575 = vadd.f32 %v952, %v2574
        %v2576 = vpop.f32.mrb[0].mxu0
        %v2577 = vadd.f32 %v956, %v2576
        %v2578 = vpop.f32.mrb[0].mxu0
        %v2579 = vadd.f32 %v952, %v2578
        %v2580 = vpop.f32.mrb[0].mxu0
        %v2581 = vadd.f32 %v956, %v2580
        %2582 = vmatprep.mubr.bf16.mxu0 0
        %2583 = vmatmul.mubr.bf16.gmra.mrb[0].mxu0 %v1435
        %v2584 = vpop.f32.mrb[0].mxu0
        %v2585 = vadd.f32 %v952, %v2584
        %v2586 = vpop.f32.mrb[0].mxu0
        %v2587 = vadd.f32 %v956, %v2586
        %v2588 = vpop.f32.mrb[0].mxu0
        %v2589 = vadd.f32 %v952, %v2588
        %v2590 = vpop.f32.mrb[0].mxu0
        %v2591 = vadd.f32 %v956, %v2590
        %2592 = vmatprep.mubr.bf16.mxu0 0
        %2593 = vmatmul.mubr.bf16.gmra.mrb[0].mxu0 %v1438
        %v2594 = vpop.f32.mrb[0].mxu0
        %v2595 = vadd.f32 %v952, %v2594
        %v2596 = vpop.f32.mrb[0].mxu0
        %v2597 = vadd.f32 %v956, %v2596
        %v2598 = vpop.f32.mrb[0].mxu0
        %v2599 = vadd.f32 %v952, %v2598
        %v2600 = vpop.f32.mrb[0].mxu0
        %v2601 = vadd.f32 %v956, %v2600
        %2602 = vmatprep.mubr.bf16.mxu0 0
        %2603 = vmatmul.mubr.bf16.gmra.mrb[0].mxu0 %v1441
        %v2604 = vpop.f32.mrb[0].mxu0
        %v2605 = vadd.f32 %v952, %v2604
        %v2606 = vpop.f32.mrb[0].mxu0
        %v2607 = vadd.f32 %v956, %v2606
        %v2608 = vpop.f32.mrb[0].mxu0
        %v2609 = vadd.f32 %v952, %v2608
        %v2610 = vpop.f32.mrb[0].mxu0
        %v2611 = vadd.f32 %v956, %v2610
        %2612 = vmatprep.mubr.bf16.mxu0 0
        %2613 = vmatmul.mubr.bf16.gmra.mrb[0].mxu0 %v1444
        %v2614 = vpop.f32.mrb[0].mxu0
        %v2615 = vadd.f32 %v952, %v2614
        %v2616 = vpop.f32.mrb[0].mxu0
        %v2617 = vadd.f32 %v956, %v2616
        %v2618 = vpop.f32.mrb[0].mxu0
        %v2619 = vadd.f32 %v952, %v2618
        %v2620 = vpop.f32.mrb[0].mxu0
        %v2621 = vadd.f32 %v956, %v2620
        %2622 = vmatprep.mubr.bf16.mxu0 0
        %2623 = vmatmul.mubr.bf16.gmra.mrb[0].mxu0 %v1447
        %v2624 = vpop.f32.mrb[0].mxu0
        %v2625 = vadd.f32 %v952, %v2624
        %v2626 = vpop.f32.mrb[0].mxu0
        %v2627 = vadd.f32 %v956, %v2626
        %v2628 = vpop.f32.mrb[0].mxu0
        %v2629 = vadd.f32 %v952, %v2628
        %v2630 = vpop.f32.mrb[0].mxu0
        %v2631 = vadd.f32 %v956, %v2630
        %2632 = vmatprep.mubr.bf16.mxu0 0
        %2633 = vmatmul.mubr.bf16.gmra.mrb[0].mxu0 %v1450
        %v2634 = vpop.f32.mrb[0].mxu0
        %v2635 = vadd.f32 %v952, %v2634
        %v2636 = vpop.f32.mrb[0].mxu0
        %v2637 = vadd.f32 %v956, %v2636
        %v2638 = vpop.f32.mrb[0].mxu0
        %v2639 = vadd.f32 %v952, %v2638
        %v2640 = vpop.f32.mrb[0].mxu0
        %v2641 = vadd.f32 %v956, %v2640
        %2642 = vmatprep.mubr.bf16.mxu0 0
        %2643 = vmatmul.mubr.bf16.gmra.mrb[0].mxu0 %v1453
        %v2644 = vpop.f32.mrb[0].mxu0
        %v2645 = vadd.f32 %v952, %v2644
        %v2646 = vpop.f32.mrb[0].mxu0
        %v2647 = vadd.f32 %v956, %v2646
        %v2648 = vpop.f32.mrb[0].mxu0
        %v2649 = vadd.f32 %v952, %v2648
        %v2650 = vpop.f32.mrb[0].mxu0
        %v2651 = vadd.f32 %v956, %v2650
        %2652 = vmatprep.mubr.bf16.mxu0 0
        %2653 = vmatmul.mubr.bf16.gmra.mrb[0].mxu0 %v1456
        %v2654 = vpop.f32.mrb[0].mxu0
        %v2655 = vadd.f32 %v952, %v2654
        %v2656 = vpop.f32.mrb[0].mxu0
        %v2657 = vadd.f32 %v956, %v2656
        %v2658 = vpop.f32.mrb[0].mxu0
        %v2659 = vadd.f32 %v952, %v2658
        %v2660 = vpop.f32.mrb[0].mxu0
        %v2661 = vadd.f32 %v956, %v2660
        %2662 = vmatprep.mubr.bf16.mxu0 0
        %2663 = vmatmul.mubr.bf16.gmra.mrb[0].mxu0 %v1459
        %v2664 = vpop.f32.mrb[0].mxu0
        %v2665 = vadd.f32 %v952, %v2664
        %v2666 = vpop.f32.mrb[0].mxu0
        %v2667 = vadd.f32 %v956, %v2666
        %v2668 = vpop.f32.mrb[0].mxu0
        %v2669 = vadd.f32 %v952, %v2668
        %v2670 = vpop.f32.mrb[0].mxu0
        %v2671 = vadd.f32 %v956, %v2670
        %2672 = vmatprep.mubr.bf16.mxu0 0
        %2673 = vmatmul.mubr.bf16.gmra.mrb[0].mxu0 %v1462
        %v2674 = vpop.f32.mrb[0].mxu0
        %v2675 = vadd.f32 %v952, %v2674
        %v2676 = vpop.f32.mrb[0].mxu0
        %v2677 = vadd.f32 %v956, %v2676
        %v2678 = vpop.f32.mrb[0].mxu0
        %v2679 = vadd.f32 %v952, %v2678
        %v2680 = vpop.f32.mrb[0].mxu0
        %v2681 = vadd.f32 %v956, %v2680
        %2682 = vmatprep.mubr.bf16.mxu0 0
        %2683 = vmatmul.mubr.bf16.gmra.mrb[0].mxu0 %v1465
        %v2684 = vpop.f32.mrb[0].mxu0
        %v2685 = vadd.f32 %v952, %v2684
        %v2686 = vpop.f32.mrb[0].mxu0
        %v2687 = vadd.f32 %v956, %v2686
        %v2688 = vpop.f32.mrb[0].mxu0
        %v2689 = vadd.f32 %v952, %v2688
        %v2690 = vpop.f32.mrb[0].mxu0
        %v2691 = vadd.f32 %v956, %v2690
        %2692 = vmatprep.mubr.bf16.mxu0 0
        %2693 = vmatmul.mubr.bf16.gmra.mrb[0].mxu0 %v1468
        %v2694 = vpop.f32.mrb[0].mxu0
        %v2695 = vadd.f32 %v952, %v2694
        %v2696 = vpop.f32.mrb[0].mxu0
        %v2697 = vadd.f32 %v956, %v2696
        %v2698 = vpop.f32.mrb[0].mxu0
        %v2699 = vadd.f32 %v952, %v2698
        %v2700 = vpop.f32.mrb[0].mxu0
        %v2701 = vadd.f32 %v956, %v2700
        %2702 = vmatprep.mubr.bf16.mxu0 0
        %2703 = vmatmul.mubr.bf16.gmra.mrb[0].mxu0 %v1471
        %v2704 = vpop.f32.mrb[0].mxu0
        %v2705 = vadd.f32 %v952, %v2704
        %v2706 = vpop.f32.mrb[0].mxu0
        %v2707 = vadd.f32 %v956, %v2706
        %v2708 = vpop.f32.mrb[0].mxu0
        %v2709 = vadd.f32 %v952, %v2708
        %v2710 = vpop.f32.mrb[0].mxu0
        %v2711 = vadd.f32 %v956, %v2710
        %2712 = vmatprep.mubr.bf16.mxu0 0
        %2713 = vmatmul.mubr.bf16.gmra.mrb[0].mxu0 %v1474
        %v2714 = vpop.f32.mrb[0].mxu0
        %v2715 = vadd.f32 %v952, %v2714
        %v2716 = vpop.f32.mrb[0].mxu0
        %v2717 = vadd.f32 %v956, %v2716
        %v2718 = vpop.f32.mrb[0].mxu0
        %v2719 = vadd.f32 %v952, %v2718
        %v2720 = vpop.f32.mrb[0].mxu0
        %v2721 = vadd.f32 %v956, %v2720
        %2722 = vmatprep.mubr.bf16.mxu0 0
        %2723 = vmatmul.mubr.bf16.gmra.mrb[0].mxu0 %v1477
        %v2724 = vpop.f32.mrb[0].mxu0
        %v2725 = vadd.f32 %v952, %v2724
        %v2726 = vpop.f32.mrb[0].mxu0
        %v2727 = vadd.f32 %v956, %v2726
        %v2728 = vpop.f32.mrb[0].mxu0
        %v2729 = vadd.f32 %v952, %v2728
        %v2730 = vpop.f32.mrb[0].mxu0
        %v2731 = vadd.f32 %v956, %v2730
        %2732 = vmatprep.mubr.bf16.mxu0 0
        %2733 = vmatmul.mubr.bf16.gmra.mrb[0].mxu0 %v1480
        %v2734 = vpop.f32.mrb[0].mxu0
        %v2735 = vadd.f32 %v952, %v2734
        %v2736 = vpop.f32.mrb[0].mxu0
        %v2737 = vadd.f32 %v956, %v2736
        %v2738 = vpop.f32.mrb[0].mxu0
        %v2739 = vadd.f32 %v952, %v2738
        %v2740 = vpop.f32.mrb[0].mxu0
        %v2741 = vadd.f32 %v956, %v2740
        %2742 = vmatprep.mubr.bf16.mxu0 0
        %2743 = vmatmul.mubr.bf16.gmra.mrb[0].mxu0 %v1483
        %v2744 = vpop.f32.mrb[0].mxu0
        %v2745 = vadd.f32 %v952, %v2744
        %v2746 = vpop.f32.mrb[0].mxu0
        %v2747 = vadd.f32 %v956, %v2746
        %v2748 = vpop.f32.mrb[0].mxu0
        %v2749 = vadd.f32 %v952, %v2748
        %v2750 = vpop.f32.mrb[0].mxu0
        %v2751 = vadd.f32 %v956, %v2750
        %2752 = vmatprep.mubr.bf16.mxu0 0
        %2753 = vmatmul.mubr.bf16.gmra.mrb[0].mxu0 %v1486
        %v2754 = vpop.f32.mrb[0].mxu0
        %v2755 = vadd.f32 %v952, %v2754
        %v2756 = vpop.f32.mrb[0].mxu0
        %v2757 = vadd.f32 %v956, %v2756
        %v2758 = vpop.f32.mrb[0].mxu0
        %v2759 = vadd.f32 %v952, %v2758
        %v2760 = vpop.f32.mrb[0].mxu0
        %v2761 = vadd.f32 %v956, %v2760
        %2762 = vmatprep.mubr.bf16.mxu0 0
        %2763 = vmatmul.mubr.bf16.gmra.mrb[0].mxu0 %v1489
        %v2764 = vpop.f32.mrb[0].mxu0
        %v2765 = vadd.f32 %v952, %v2764
        %v2766 = vpop.f32.mrb[0].mxu0
        %v2767 = vadd.f32 %v956, %v2766
        %v2768 = vpop.f32.mrb[0].mxu0
        %v2769 = vadd.f32 %v952, %v2768
        %v2770 = vpop.f32.mrb[0].mxu0
        %v2771 = vadd.f32 %v956, %v2770
        %2772 = vmatprep.mubr.bf16.mxu0 0
        %2773 = vmatmul.mubr.bf16.gmra.mrb[0].mxu0 %v1492
        %v2774 = vpop.f32.mrb[0].mxu0
        %v2775 = vadd.f32 %v952, %v2774
        %v2776 = vpop.f32.mrb[0].mxu0
        %v2777 = vadd.f32 %v956, %v2776
        %v2778 = vpop.f32.mrb[0].mxu0
        %v2779 = vadd.f32 %v952, %v2778
        %v2780 = vpop.f32.mrb[0].mxu0
        %v2781 = vadd.f32 %v956, %v2780
        %2782 = vmatprep.mubr.bf16.mxu0 0
        %2783 = vmatmul.mubr.bf16.gmra.mrb[0].mxu0 %v1495
        %v2784 = vpop.f32.mrb[0].mxu0
        %v2785 = vadd.f32 %v952, %v2784
        %v2786 = vpop.f32.mrb[0].mxu0
        %v2787 = vadd.f32 %v956, %v2786
        %v2788 = vpop.f32.mrb[0].mxu0
        %v2789 = vadd.f32 %v952, %v2788
        %v2790 = vpop.f32.mrb[0].mxu0
        %v2791 = vadd.f32 %v956, %v2790
        %2792 = vmatprep.mubr.bf16.mxu0 0
        %2793 = vmatmul.mubr.bf16.gmra.mrb[0].mxu0 %v1498
        %v2794 = vpop.f32.mrb[0].mxu0
        %v2795 = vadd.f32 %v952, %v2794
        %v2796 = vpop.f32.mrb[0].mxu0
        %v2797 = vadd.f32 %v956, %v2796
        %v2798 = vpop.f32.mrb[0].mxu0
        %v2799 = vadd.f32 %v952, %v2798
        %v2800 = vpop.f32.mrb[0].mxu0
        %v2801 = vadd.f32 %v956, %v2800
        %2802 = vmatprep.mubr.bf16.mxu0 0
        %2803 = vmatmul.mubr.bf16.gmra.mrb[0].mxu0 %v1501
        %v2804 = vpop.f32.mrb[0].mxu0
        %v2805 = vadd.f32 %v952, %v2804
        %v2806 = vpop.f32.mrb[0].mxu0
        %v2807 = vadd.f32 %v956, %v2806
        %v2808 = vpop.f32.mrb[0].mxu0
        %v2809 = vadd.f32 %v952, %v2808
        %v2810 = vpop.f32.mrb[0].mxu0
        %v2811 = vadd.f32 %v956, %v2810
        %2812 = vmatprep.mubr.bf16.mxu0 0
        %2813 = vmatmul.mubr.bf16.gmra.mrb[0].mxu0 %v1504
        %v2814 = vpop.f32.mrb[0].mxu0
        %v2815 = vadd.f32 %v952, %v2814
        %v2816 = vpop.f32.mrb[0].mxu0
        %v2817 = vadd.f32 %v956, %v2816
        %v2818 = vpop.f32.mrb[0].mxu0
        %v2819 = vadd.f32 %v952, %v2818
        %v2820 = vpop.f32.mrb[0].mxu0
        %v2821 = vadd.f32 %v956, %v2820
        %2822 = vmatprep.mubr.bf16.mxu0 0
        %2823 = vmatmul.mubr.bf16.gmra.mrb[0].mxu0 %v1507
        %v2824 = vpop.f32.mrb[0].mxu0
        %v2825 = vadd.f32 %v952, %v2824
        %v2826 = vpop.f32.mrb[0].mxu0
        %v2827 = vadd.f32 %v956, %v2826
        %v2828 = vpop.f32.mrb[0].mxu0
        %v2829 = vadd.f32 %v952, %v2828
        %v2830 = vpop.f32.mrb[0].mxu0
        %v2831 = vadd.f32 %v956, %v2830
        %2832 = vmatprep.mubr.bf16.mxu0 0
        %2833 = vmatmul.mubr.bf16.gmra.mrb[0].mxu0 %v1510
        %v2834 = vpop.f32.mrb[0].mxu0
        %v2835 = vadd.f32 %v952, %v2834
        %v2836 = vpop.f32.mrb[0].mxu0
        %v2837 = vadd.f32 %v956, %v2836
        %v2838 = vpop.f32.mrb[0].mxu0
        %v2839 = vadd.f32 %v952, %v2838
        %v2840 = vpop.f32.mrb[0].mxu0
        %v2841 = vadd.f32 %v956, %v2840
        %2842 = vmatprep.mubr.bf16.mxu0 0
        %2843 = vmatmul.mubr.bf16.gmra.mrb[0].mxu0 %v1513
        %v2844 = vpop.f32.mrb[0].mxu0
        %v2845 = vadd.f32 %v952, %v2844
        %v2846 = vpop.f32.mrb[0].mxu0
        %v2847 = vadd.f32 %v956, %v2846
        %v2848 = vpop.f32.mrb[0].mxu0
        %v2849 = vadd.f32 %v952, %v2848
        %v2850 = vpop.f32.mrb[0].mxu0
        %v2851 = vadd.f32 %v956, %v2850
        %2852 = vmatprep.mubr.bf16.mxu0 0
        %2853 = vmatmul.mubr.bf16.gmra.mrb[0].mxu0 %v1516
        %v2854 = vpop.f32.mrb[0].mxu0
        %v2855 = vadd.f32 %v952, %v2854
        %v2856 = vpop.f32.mrb[0].mxu0
        %v2857 = vadd.f32 %v956, %v2856
        %v2858 = vpop.f32.mrb[0].mxu0
        %v2859 = vadd.f32 %v952, %v2858
        %v2860 = vpop.f32.mrb[0].mxu0
        %v2861 = vadd.f32 %v956, %v2860
        %2862 = vmatprep.mubr.bf16.mxu0 0
        %2863 = vmatmul.mubr.bf16.gmra.mrb[0].mxu0 %v1519
        %v2864 = vpop.f32.mrb[0].mxu0
        %v2865 = vadd.f32 %v952, %v2864
        %v2866 = vpop.f32.mrb[0].mxu0
        %v2867 = vadd.f32 %v956, %v2866
        %v2868 = vpop.f32.mrb[0].mxu0
        %v2869 = vadd.f32 %v952, %v2868
        %v2870 = vpop.f32.mrb[0].mxu0
        %v2871 = vadd.f32 %v956, %v2870
        %2872 = vmatprep.mubr.bf16.mxu0 0
        %2873 = vmatmul.mubr.bf16.gmra.mrb[0].mxu0 %v1522
        %v2874 = vpop.f32.mrb[0].mxu0
        %v2875 = vadd.f32 %v952, %v2874
        %v2876 = vpop.f32.mrb[0].mxu0
        %v2877 = vadd.f32 %v956, %v2876
        %v2878 = vpop.f32.mrb[0].mxu0
        %v2879 = vadd.f32 %v952, %v2878
        %v2880 = vpop.f32.mrb[0].mxu0
        %v2881 = vadd.f32 %v956, %v2880
        %2882 = vdwg.mxu0
        %v2883 = vmax.f32 %v1572, 0.0
        %v2884 = vmax.f32 %v1574, 0.0
        %v2885 = vmax.f32 %v2245, 0.0
        %v2886 = vmax.f32 %v2247, 0.0
        %v2887 = vmax.f32 %v1576, 0.0
        %v2888 = vmax.f32 %v1578, 0.0
        %v2889 = vmax.f32 %v2249, 0.0
        %v2890 = vmax.f32 %v2251, 0.0
        %v2891 = vmax.f32 %v1582, 0.0
        %v2892 = vmax.f32 %v1584, 0.0
        %v2893 = vmax.f32 %v2255, 0.0
        %v2894 = vmax.f32 %v2257, 0.0
        %v2895 = vmax.f32 %v1586, 0.0
        %v2896 = vmax.f32 %v1588, 0.0
        %v2897 = vmax.f32 %v2259, 0.0
        %v2898 = vmax.f32 %v2261, 0.0
        %v2899 = vmax.f32 %v1592, 0.0
        %v2900 = vmax.f32 %v1594, 0.0
        %v2901 = vmax.f32 %v2265, 0.0
        %v2902 = vmax.f32 %v2267, 0.0
        %v2903 = vmax.f32 %v1596, 0.0
        %v2904 = vmax.f32 %v1598, 0.0
        %v2905 = vmax.f32 %v2269, 0.0
        %v2906 = vmax.f32 %v2271, 0.0
        %v2907 = vmax.f32 %v1602, 0.0
        %v2908 = vmax.f32 %v1604, 0.0
        %v2909 = vmax.f32 %v2275, 0.0
        %v2910 = vmax.f32 %v2277, 0.0
        %v2911 = vmax.f32 %v1606, 0.0
        %v2912 = vmax.f32 %v1608, 0.0
        %v2913 = vmax.f32 %v2279, 0.0
        %v2914 = vmax.f32 %v2281, 0.0
        %v2915 = vmax.f32 %v1612, 0.0
        %v2916 = vmax.f32 %v1614, 0.0
        %v2917 = vmax.f32 %v2285, 0.0
        %v2918 = vmax.f32 %v2287, 0.0
        %v2919 = vmax.f32 %v1616, 0.0
        %v2920 = vmax.f32 %v1618, 0.0
        %v2921 = vmax.f32 %v2289, 0.0
        %v2922 = vmax.f32 %v2291, 0.0
        %v2923 = vmax.f32 %v1622, 0.0
        %v2924 = vmax.f32 %v1624, 0.0
        %v2925 = vmax.f32 %v2295, 0.0
        %v2926 = vmax.f32 %v2297, 0.0
        %v2927 = vmax.f32 %v1626, 0.0
        %v2928 = vmax.f32 %v1628, 0.0
        %v2929 = vmax.f32 %v2299, 0.0
        %v2930 = vmax.f32 %v2301, 0.0
        %v2931 = vmax.f32 %v1632, 0.0
        %v2932 = vmax.f32 %v1634, 0.0
        %v2933 = vmax.f32 %v2305, 0.0
        %v2934 = vmax.f32 %v2307, 0.0
        %v2935 = vmax.f32 %v1636, 0.0
        %v2936 = vmax.f32 %v1638, 0.0
        %v2937 = vmax.f32 %v2309, 0.0
        %v2938 = vmax.f32 %v2311, 0.0
        %v2939 = vmax.f32 %v1642, 0.0
        %v2940 = vmax.f32 %v1644, 0.0
        %v2941 = vmax.f32 %v2315, 0.0
        %v2942 = vmax.f32 %v2317, 0.0
        %v2943 = vmax.f32 %v1646, 0.0
        %v2944 = vmax.f32 %v1648, 0.0
        %v2945 = vmax.f32 %v2319, 0.0
        %v2946 = vmax.f32 %v2321, 0.0
        %v2947 = vmax.f32 %v1652, 0.0
        %v2948 = vmax.f32 %v1654, 0.0
        %v2949 = vmax.f32 %v2325, 0.0
        %v2950 = vmax.f32 %v2327, 0.0
        %v2951 = vmax.f32 %v1656, 0.0
        %v2952 = vmax.f32 %v1658, 0.0
        %v2953 = vmax.f32 %v2329, 0.0
        %v2954 = vmax.f32 %v2331, 0.0
        %v2955 = vmax.f32 %v1662, 0.0
        %v2956 = vmax.f32 %v1664, 0.0
        %v2957 = vmax.f32 %v2335, 0.0
        %v2958 = vmax.f32 %v2337, 0.0
        %v2959 = vmax.f32 %v1666, 0.0
        %v2960 = vmax.f32 %v1668, 0.0
        %v2961 = vmax.f32 %v2339, 0.0
        %v2962 = vmax.f32 %v2341, 0.0
        %v2963 = vmax.f32 %v1672, 0.0
        %v2964 = vmax.f32 %v1674, 0.0
        %v2965 = vmax.f32 %v2345, 0.0
        %v2966 = vmax.f32 %v2347, 0.0
        %v2967 = vmax.f32 %v1676, 0.0
        %v2968 = vmax.f32 %v1678, 0.0
        %v2969 = vmax.f32 %v2349, 0.0
        %v2970 = vmax.f32 %v2351, 0.0
        %v2971 = vmax.f32 %v1682, 0.0
        %v2972 = vmax.f32 %v1684, 0.0
        %v2973 = vmax.f32 %v2355, 0.0
        %v2974 = vmax.f32 %v2357, 0.0
        %v2975 = vmax.f32 %v1686, 0.0
        %v2976 = vmax.f32 %v1688, 0.0
        %v2977 = vmax.f32 %v2359, 0.0
        %v2978 = vmax.f32 %v2361, 0.0
        %v2979 = vmax.f32 %v1692, 0.0
        %v2980 = vmax.f32 %v1694, 0.0
        %v2981 = vmax.f32 %v2365, 0.0
        %v2982 = vmax.f32 %v2367, 0.0
        %v2983 = vmax.f32 %v1696, 0.0
        %v2984 = vmax.f32 %v1698, 0.0
        %v2985 = vmax.f32 %v2369, 0.0
        %v2986 = vmax.f32 %v2371, 0.0
        %v2987 = vmax.f32 %v1702, 0.0
        %v2988 = vmax.f32 %v1704, 0.0
        %v2989 = vmax.f32 %v2375, 0.0
        %v2990 = vmax.f32 %v2377, 0.0
        %v2991 = vmax.f32 %v1706, 0.0
        %v2992 = vmax.f32 %v1708, 0.0
        %v2993 = vmax.f32 %v2379, 0.0
        %v2994 = vmax.f32 %v2381, 0.0
        %v2995 = vmax.f32 %v1712, 0.0
        %v2996 = vmax.f32 %v1714, 0.0
        %v2997 = vmax.f32 %v2385, 0.0
        %v2998 = vmax.f32 %v2387, 0.0
        %v2999 = vmax.f32 %v1716, 0.0
        %v3000 = vmax.f32 %v1718, 0.0
        %v3001 = vmax.f32 %v2389, 0.0
        %v3002 = vmax.f32 %v2391, 0.0
        %v3003 = vmax.f32 %v1722, 0.0
        %v3004 = vmax.f32 %v1724, 0.0
        %v3005 = vmax.f32 %v2395, 0.0
        %v3006 = vmax.f32 %v2397, 0.0
        %v3007 = vmax.f32 %v1726, 0.0
        %v3008 = vmax.f32 %v1728, 0.0
        %v3009 = vmax.f32 %v2399, 0.0
        %v3010 = vmax.f32 %v2401, 0.0
        %v3011 = vmax.f32 %v1732, 0.0
        %v3012 = vmax.f32 %v1734, 0.0
        %v3013 = vmax.f32 %v2405, 0.0
        %v3014 = vmax.f32 %v2407, 0.0
        %v3015 = vmax.f32 %v1736, 0.0
        %v3016 = vmax.f32 %v1738, 0.0
        %v3017 = vmax.f32 %v2409, 0.0
        %v3018 = vmax.f32 %v2411, 0.0
        %v3019 = vmax.f32 %v1742, 0.0
        %v3020 = vmax.f32 %v1744, 0.0
        %v3021 = vmax.f32 %v2415, 0.0
        %v3022 = vmax.f32 %v2417, 0.0
        %v3023 = vmax.f32 %v1746, 0.0
        %v3024 = vmax.f32 %v1748, 0.0
        %v3025 = vmax.f32 %v2419, 0.0
        %v3026 = vmax.f32 %v2421, 0.0
        %v3027 = vmax.f32 %v1752, 0.0
        %v3028 = vmax.f32 %v1754, 0.0
        %v3029 = vmax.f32 %v2425, 0.0
        %v3030 = vmax.f32 %v2427, 0.0
        %v3031 = vmax.f32 %v1756, 0.0
        %v3032 = vmax.f32 %v1758, 0.0
        %v3033 = vmax.f32 %v2429, 0.0
        %v3034 = vmax.f32 %v2431, 0.0
        %v3035 = vmax.f32 %v1762, 0.0
        %v3036 = vmax.f32 %v1764, 0.0
        %v3037 = vmax.f32 %v2435, 0.0
        %v3038 = vmax.f32 %v2437, 0.0
        %v3039 = vmax.f32 %v1766, 0.0
        %v3040 = vmax.f32 %v1768, 0.0
        %v3041 = vmax.f32 %v2439, 0.0
        %v3042 = vmax.f32 %v2441, 0.0
        %v3043 = vmax.f32 %v1772, 0.0
        %v3044 = vmax.f32 %v1774, 0.0
        %v3045 = vmax.f32 %v2445, 0.0
        %v3046 = vmax.f32 %v2447, 0.0
        %v3047 = vmax.f32 %v1776, 0.0
        %v3048 = vmax.f32 %v1778, 0.0
        %v3049 = vmax.f32 %v2449, 0.0
        %v3050 = vmax.f32 %v2451, 0.0
        %v3051 = vmax.f32 %v1782, 0.0
        %v3052 = vmax.f32 %v1784, 0.0
        %v3053 = vmax.f32 %v2455, 0.0
        %v3054 = vmax.f32 %v2457, 0.0
        %v3055 = vmax.f32 %v1786, 0.0
        %v3056 = vmax.f32 %v1788, 0.0
        %v3057 = vmax.f32 %v2459, 0.0
        %v3058 = vmax.f32 %v2461, 0.0
        %v3059 = vmax.f32 %v1792, 0.0
        %v3060 = vmax.f32 %v1794, 0.0
        %v3061 = vmax.f32 %v2465, 0.0
        %v3062 = vmax.f32 %v2467, 0.0
        %v3063 = vmax.f32 %v1796, 0.0
        %v3064 = vmax.f32 %v1798, 0.0
        %v3065 = vmax.f32 %v2469, 0.0
        %v3066 = vmax.f32 %v2471, 0.0
        %v3067 = vmax.f32 %v1802, 0.0
        %v3068 = vmax.f32 %v1804, 0.0
        %v3069 = vmax.f32 %v2475, 0.0
        %v3070 = vmax.f32 %v2477, 0.0
        %v3071 = vmax.f32 %v1806, 0.0
        %v3072 = vmax.f32 %v1808, 0.0
        %v3073 = vmax.f32 %v2479, 0.0
        %v3074 = vmax.f32 %v2481, 0.0
        %v3075 = vmax.f32 %v1812, 0.0
        %v3076 = vmax.f32 %v1814, 0.0
        %v3077 = vmax.f32 %v2485, 0.0
        %v3078 = vmax.f32 %v2487, 0.0
        %v3079 = vmax.f32 %v1816, 0.0
        %v3080 = vmax.f32 %v1818, 0.0
        %v3081 = vmax.f32 %v2489, 0.0
        %v3082 = vmax.f32 %v2491, 0.0
        %v3083 = vmax.f32 %v1822, 0.0
        %v3084 = vmax.f32 %v1824, 0.0
        %v3085 = vmax.f32 %v2495, 0.0
        %v3086 = vmax.f32 %v2497, 0.0
        %v3087 = vmax.f32 %v1826, 0.0
        %v3088 = vmax.f32 %v1828, 0.0
        %v3089 = vmax.f32 %v2499, 0.0
        %v3090 = vmax.f32 %v2501, 0.0
        %v3091 = vmax.f32 %v1832, 0.0
        %v3092 = vmax.f32 %v1834, 0.0
        %v3093 = vmax.f32 %v2505, 0.0
        %v3094 = vmax.f32 %v2507, 0.0
        %v3095 = vmax.f32 %v1836, 0.0
        %v3096 = vmax.f32 %v1838, 0.0
        %v3097 = vmax.f32 %v2509, 0.0
        %v3098 = vmax.f32 %v2511, 0.0
        %v3099 = vmax.f32 %v1842, 0.0
        %v3100 = vmax.f32 %v1844, 0.0
        %v3101 = vmax.f32 %v2515, 0.0
        %v3102 = vmax.f32 %v2517, 0.0
        %v3103 = vmax.f32 %v1846, 0.0
        %v3104 = vmax.f32 %v1848, 0.0
        %v3105 = vmax.f32 %v2519, 0.0
        %v3106 = vmax.f32 %v2521, 0.0
        %v3107 = vmax.f32 %v1852, 0.0
        %v3108 = vmax.f32 %v1854, 0.0
        %v3109 = vmax.f32 %v2525, 0.0
        %v3110 = vmax.f32 %v2527, 0.0
        %v3111 = vmax.f32 %v1856, 0.0
        %v3112 = vmax.f32 %v1858, 0.0
        %v3113 = vmax.f32 %v2529, 0.0
        %v3114 = vmax.f32 %v2531, 0.0
        %v3115 = vmax.f32 %v1862, 0.0
        %v3116 = vmax.f32 %v1864, 0.0
        %v3117 = vmax.f32 %v2535, 0.0
        %v3118 = vmax.f32 %v2537, 0.0
        %v3119 = vmax.f32 %v1866, 0.0
        %v3120 = vmax.f32 %v1868, 0.0
        %v3121 = vmax.f32 %v2539, 0.0
        %v3122 = vmax.f32 %v2541, 0.0
        %v3123 = vmax.f32 %v1872, 0.0
        %v3124 = vmax.f32 %v1874, 0.0
        %v3125 = vmax.f32 %v2545, 0.0
        %v3126 = vmax.f32 %v2547, 0.0
        %v3127 = vmax.f32 %v1876, 0.0
        %v3128 = vmax.f32 %v1878, 0.0
        %v3129 = vmax.f32 %v2549, 0.0
        %v3130 = vmax.f32 %v2551, 0.0
        %v3131 = vmax.f32 %v1882, 0.0
        %v3132 = vmax.f32 %v1884, 0.0
        %v3133 = vmax.f32 %v2555, 0.0
        %v3134 = vmax.f32 %v2557, 0.0
        %v3135 = vmax.f32 %v1886, 0.0
        %v3136 = vmax.f32 %v1888, 0.0
        %v3137 = vmax.f32 %v2559, 0.0
        %v3138 = vmax.f32 %v2561, 0.0
        %v3139 = vmax.f32 %v1892, 0.0
        %v3140 = vmax.f32 %v1894, 0.0
        %v3141 = vmax.f32 %v2565, 0.0
        %v3142 = vmax.f32 %v2567, 0.0
        %v3143 = vmax.f32 %v1896, 0.0
        %v3144 = vmax.f32 %v1898, 0.0
        %v3145 = vmax.f32 %v2569, 0.0
        %v3146 = vmax.f32 %v2571, 0.0
        %v3147 = vmax.f32 %v1902, 0.0
        %v3148 = vmax.f32 %v1904, 0.0
        %v3149 = vmax.f32 %v2575, 0.0
        %v3150 = vmax.f32 %v2577, 0.0
        %v3151 = vmax.f32 %v1906, 0.0
        %v3152 = vmax.f32 %v1908, 0.0
        %v3153 = vmax.f32 %v2579, 0.0
        %v3154 = vmax.f32 %v2581, 0.0
        %v3155 = vmax.f32 %v1912, 0.0
        %v3156 = vmax.f32 %v1914, 0.0
        %v3157 = vmax.f32 %v2585, 0.0
        %v3158 = vmax.f32 %v2587, 0.0
        %v3159 = vmax.f32 %v1916, 0.0
        %v3160 = vmax.f32 %v1918, 0.0
        %v3161 = vmax.f32 %v2589, 0.0
        %v3162 = vmax.f32 %v2591, 0.0
        %v3163 = vmax.f32 %v1922, 0.0
        %v3164 = vmax.f32 %v1924, 0.0
        %v3165 = vmax.f32 %v2595, 0.0
        %v3166 = vmax.f32 %v2597, 0.0
        %v3167 = vmax.f32 %v1926, 0.0
        %v3168 = vmax.f32 %v1928, 0.0
        %v3169 = vmax.f32 %v2599, 0.0
        %v3170 = vmax.f32 %v2601, 0.0
        %v3171 = vmax.f32 %v1932, 0.0
        %v3172 = vmax.f32 %v1934, 0.0
        %v3173 = vmax.f32 %v2605, 0.0
        %v3174 = vmax.f32 %v2607, 0.0
        %v3175 = vmax.f32 %v1936, 0.0
        %v3176 = vmax.f32 %v1938, 0.0
        %v3177 = vmax.f32 %v2609, 0.0
        %v3178 = vmax.f32 %v2611, 0.0
        %v3179 = vmax.f32 %v1942, 0.0
        %v3180 = vmax.f32 %v1944, 0.0
        %v3181 = vmax.f32 %v2615, 0.0
        %v3182 = vmax.f32 %v2617, 0.0
        %v3183 = vmax.f32 %v1946, 0.0
        %v3184 = vmax.f32 %v1948, 0.0
        %v3185 = vmax.f32 %v2619, 0.0
        %v3186 = vmax.f32 %v2621, 0.0
        %v3187 = vmax.f32 %v1952, 0.0
        %v3188 = vmax.f32 %v1954, 0.0
        %v3189 = vmax.f32 %v2625, 0.0
        %v3190 = vmax.f32 %v2627, 0.0
        %v3191 = vmax.f32 %v1956, 0.0
        %v3192 = vmax.f32 %v1958, 0.0
        %v3193 = vmax.f32 %v2629, 0.0
        %v3194 = vmax.f32 %v2631, 0.0
        %v3195 = vmax.f32 %v1962, 0.0
        %v3196 = vmax.f32 %v1964, 0.0
        %v3197 = vmax.f32 %v2635, 0.0
        %v3198 = vmax.f32 %v2637, 0.0
        %v3199 = vmax.f32 %v1966, 0.0
        %v3200 = vmax.f32 %v1968, 0.0
        %v3201 = vmax.f32 %v2639, 0.0
        %v3202 = vmax.f32 %v2641, 0.0
        %v3203 = vmax.f32 %v1972, 0.0
        %v3204 = vmax.f32 %v1974, 0.0
        %v3205 = vmax.f32 %v2645, 0.0
        %v3206 = vmax.f32 %v2647, 0.0
        %v3207 = vmax.f32 %v1976, 0.0
        %v3208 = vmax.f32 %v1978, 0.0
        %v3209 = vmax.f32 %v2649, 0.0
        %v3210 = vmax.f32 %v2651, 0.0
        %v3211 = vmax.f32 %v1982, 0.0
        %v3212 = vmax.f32 %v1984, 0.0
        %v3213 = vmax.f32 %v2655, 0.0
        %v3214 = vmax.f32 %v2657, 0.0
        %v3215 = vmax.f32 %v1986, 0.0
        %v3216 = vmax.f32 %v1988, 0.0
        %v3217 = vmax.f32 %v2659, 0.0
        %v3218 = vmax.f32 %v2661, 0.0
        %v3219 = vmax.f32 %v1992, 0.0
        %v3220 = vmax.f32 %v1994, 0.0
        %v3221 = vmax.f32 %v2665, 0.0
        %v3222 = vmax.f32 %v2667, 0.0
        %v3223 = vmax.f32 %v1996, 0.0
        %v3224 = vmax.f32 %v1998, 0.0
        %v3225 = vmax.f32 %v2669, 0.0
        %v3226 = vmax.f32 %v2671, 0.0
        %v3227 = vmax.f32 %v2002, 0.0
        %v3228 = vmax.f32 %v2004, 0.0
        %v3229 = vmax.f32 %v2675, 0.0
        %v3230 = vmax.f32 %v2677, 0.0
        %v3231 = vmax.f32 %v2006, 0.0
        %v3232 = vmax.f32 %v2008, 0.0
        %v3233 = vmax.f32 %v2679, 0.0
        %v3234 = vmax.f32 %v2681, 0.0
        %v3235 = vmax.f32 %v2012, 0.0
        %v3236 = vmax.f32 %v2014, 0.0
        %v3237 = vmax.f32 %v2685, 0.0
        %v3238 = vmax.f32 %v2687, 0.0
        %v3239 = vmax.f32 %v2016, 0.0
        %v3240 = vmax.f32 %v2018, 0.0
        %v3241 = vmax.f32 %v2689, 0.0
        %v3242 = vmax.f32 %v2691, 0.0
        %v3243 = vmax.f32 %v2022, 0.0
        %v3244 = vmax.f32 %v2024, 0.0
        %v3245 = vmax.f32 %v2695, 0.0
        %v3246 = vmax.f32 %v2697, 0.0
        %v3247 = vmax.f32 %v2026, 0.0
        %v3248 = vmax.f32 %v2028, 0.0
        %v3249 = vmax.f32 %v2699, 0.0
        %v3250 = vmax.f32 %v2701, 0.0
        %v3251 = vmax.f32 %v2032, 0.0
        %v3252 = vmax.f32 %v2034, 0.0
        %v3253 = vmax.f32 %v2705, 0.0
        %v3254 = vmax.f32 %v2707, 0.0
        %v3255 = vmax.f32 %v2036, 0.0
        %v3256 = vmax.f32 %v2038, 0.0
        %v3257 = vmax.f32 %v2709, 0.0
        %v3258 = vmax.f32 %v2711, 0.0
        %v3259 = vmax.f32 %v2042, 0.0
        %v3260 = vmax.f32 %v2044, 0.0
        %v3261 = vmax.f32 %v2715, 0.0
        %v3262 = vmax.f32 %v2717, 0.0
        %v3263 = vmax.f32 %v2046, 0.0
        %v3264 = vmax.f32 %v2048, 0.0
        %v3265 = vmax.f32 %v2719, 0.0
        %v3266 = vmax.f32 %v2721, 0.0
        %v3267 = vmax.f32 %v2052, 0.0
        %v3268 = vmax.f32 %v2054, 0.0
        %v3269 = vmax.f32 %v2725, 0.0
        %v3270 = vmax.f32 %v2727, 0.0
        %v3271 = vmax.f32 %v2056, 0.0
        %v3272 = vmax.f32 %v2058, 0.0
        %v3273 = vmax.f32 %v2729, 0.0
        %v3274 = vmax.f32 %v2731, 0.0
        %v3275 = vmax.f32 %v2062, 0.0
        %v3276 = vmax.f32 %v2064, 0.0
        %v3277 = vmax.f32 %v2735, 0.0
        %v3278 = vmax.f32 %v2737, 0.0
        %v3279 = vmax.f32 %v2066, 0.0
        %v3280 = vmax.f32 %v2068, 0.0
        %v3281 = vmax.f32 %v2739, 0.0
        %v3282 = vmax.f32 %v2741, 0.0
        %v3283 = vmax.f32 %v2072, 0.0
        %v3284 = vmax.f32 %v2074, 0.0
        %v3285 = vmax.f32 %v2745, 0.0
        %v3286 = vmax.f32 %v2747, 0.0
        %v3287 = vmax.f32 %v2076, 0.0
        %v3288 = vmax.f32 %v2078, 0.0
        %v3289 = vmax.f32 %v2749, 0.0
        %v3290 = vmax.f32 %v2751, 0.0
        %v3291 = vmax.f32 %v2082, 0.0
        %v3292 = vmax.f32 %v2084, 0.0
        %v3293 = vmax.f32 %v2755, 0.0
        %v3294 = vmax.f32 %v2757, 0.0
        %v3295 = vmax.f32 %v2086, 0.0
        %v3296 = vmax.f32 %v2088, 0.0
        %v3297 = vmax.f32 %v2759, 0.0
        %v3298 = vmax.f32 %v2761, 0.0
        %v3299 = vmax.f32 %v2092, 0.0
        %v3300 = vmax.f32 %v2094, 0.0
        %v3301 = vmax.f32 %v2765, 0.0
        %v3302 = vmax.f32 %v2767, 0.0
        %v3303 = vmax.f32 %v2096, 0.0
        %v3304 = vmax.f32 %v2098, 0.0
        %v3305 = vmax.f32 %v2769, 0.0
        %v3306 = vmax.f32 %v2771, 0.0
        %v3307 = vmax.f32 %v2102, 0.0
        %v3308 = vmax.f32 %v2104, 0.0
        %v3309 = vmax.f32 %v2775, 0.0
        %v3310 = vmax.f32 %v2777, 0.0
        %v3311 = vmax.f32 %v2106, 0.0
        %v3312 = vmax.f32 %v2108, 0.0
        %v3313 = vmax.f32 %v2779, 0.0
        %v3314 = vmax.f32 %v2781, 0.0
        %v3315 = vmax.f32 %v2112, 0.0
        %v3316 = vmax.f32 %v2114, 0.0
        %v3317 = vmax.f32 %v2785, 0.0
        %v3318 = vmax.f32 %v2787, 0.0
        %v3319 = vmax.f32 %v2116, 0.0
        %v3320 = vmax.f32 %v2118, 0.0
        %v3321 = vmax.f32 %v2789, 0.0
        %v3322 = vmax.f32 %v2791, 0.0
        %v3323 = vmax.f32 %v2122, 0.0
        %v3324 = vmax.f32 %v2124, 0.0
        %v3325 = vmax.f32 %v2795, 0.0
        %v3326 = vmax.f32 %v2797, 0.0
        %v3327 = vmax.f32 %v2126, 0.0
        %v3328 = vmax.f32 %v2128, 0.0
        %v3329 = vmax.f32 %v2799, 0.0
        %v3330 = vmax.f32 %v2801, 0.0
        %v3331 = vmax.f32 %v2132, 0.0
        %v3332 = vmax.f32 %v2134, 0.0
        %v3333 = vmax.f32 %v2805, 0.0
        %v3334 = vmax.f32 %v2807, 0.0
        %v3335 = vmax.f32 %v2136, 0.0
        %v3336 = vmax.f32 %v2138, 0.0
        %v3337 = vmax.f32 %v2809, 0.0
        %v3338 = vmax.f32 %v2811, 0.0
        %v3339 = vmax.f32 %v2142, 0.0
        %v3340 = vmax.f32 %v2144, 0.0
        %v3341 = vmax.f32 %v2815, 0.0
        %v3342 = vmax.f32 %v2817, 0.0
        %v3343 = vmax.f32 %v2146, 0.0
        %v3344 = vmax.f32 %v2148, 0.0
        %v3345 = vmax.f32 %v2819, 0.0
        %v3346 = vmax.f32 %v2821, 0.0
        %v3347 = vmax.f32 %v2152, 0.0
        %v3348 = vmax.f32 %v2154, 0.0
        %v3349 = vmax.f32 %v2825, 0.0
        %v3350 = vmax.f32 %v2827, 0.0
        %v3351 = vmax.f32 %v2156, 0.0
        %v3352 = vmax.f32 %v2158, 0.0
        %v3353 = vmax.f32 %v2829, 0.0
        %v3354 = vmax.f32 %v2831, 0.0
        %v3355 = vmax.f32 %v2162, 0.0
        %v3356 = vmax.f32 %v2164, 0.0
        %v3357 = vmax.f32 %v2835, 0.0
        %v3358 = vmax.f32 %v2837, 0.0
        %v3359 = vmax.f32 %v2166, 0.0
        %v3360 = vmax.f32 %v2168, 0.0
        %v3361 = vmax.f32 %v2839, 0.0
        %v3362 = vmax.f32 %v2841, 0.0
        %v3363 = vmax.f32 %v2172, 0.0
        %v3364 = vmax.f32 %v2174, 0.0
        %v3365 = vmax.f32 %v2845, 0.0
        %v3366 = vmax.f32 %v2847, 0.0
        %v3367 = vmax.f32 %v2176, 0.0
        %v3368 = vmax.f32 %v2178, 0.0
        %v3369 = vmax.f32 %v2849, 0.0
        %v3370 = vmax.f32 %v2851, 0.0
        %v3371 = vmax.f32 %v2182, 0.0
        %v3372 = vmax.f32 %v2184, 0.0
        %v3373 = vmax.f32 %v2855, 0.0
        %v3374 = vmax.f32 %v2857, 0.0
        %v3375 = vmax.f32 %v2186, 0.0
        %v3376 = vmax.f32 %v2188, 0.0
        %v3377 = vmax.f32 %v2859, 0.0
        %v3378 = vmax.f32 %v2861, 0.0
        %v3379 = vmax.f32 %v2192, 0.0
        %v3380 = vmax.f32 %v2194, 0.0
        %v3381 = vmax.f32 %v2865, 0.0
        %v3382 = vmax.f32 %v2867, 0.0
        %v3383 = vmax.f32 %v2196, 0.0
        %v3384 = vmax.f32 %v2198, 0.0
        %v3385 = vmax.f32 %v2869, 0.0
        %v3386 = vmax.f32 %v2871, 0.0
        %v3387 = vmax.f32 %v2202, 0.0
        %v3388 = vmax.f32 %v2204, 0.0
        %v3389 = vmax.f32 %v2875, 0.0
        %v3390 = vmax.f32 %v2877, 0.0
        %v3391 = vmax.f32 %v2206, 0.0
        %v3392 = vmax.f32 %v2208, 0.0
        %v3393 = vmax.f32 %v2879, 0.0
        %v3394 = vmax.f32 %v2881, 0.0
        %v3395 = vld [vmem:[#allocation2] sm:$0xff]
        %v3396 = vld [vmem:[#allocation2 + $0x8] sm:$0xff]
        %v3397 = vld [vmem:[#allocation2 + $0x10] sm:$0xff]
        %v3398 = vld [vmem:[#allocation2 + $0x18] sm:$0xff]
        %v3399 = vadd.f32 %v2883, %v2887
        %v3400 = vadd.f32 %v3399, %v2891
        %v3401 = vadd.f32 %v3400, %v2895
        %v3402 = vadd.f32 %v3401, %v2899
        %v3403 = vadd.f32 %v3402, %v2903
        %v3404 = vadd.f32 %v3403, %v2907
        %v3405 = vadd.f32 %v3404, %v2911
        %v3406 = vadd.f32 %v3405, %v2915
        %v3407 = vadd.f32 %v3406, %v2919
        %v3408 = vadd.f32 %v3407, %v2923
        %v3409 = vadd.f32 %v3408, %v2927
        %v3410 = vadd.f32 %v3409, %v2931
        %v3411 = vadd.f32 %v3410, %v2935
        %v3412 = vadd.f32 %v3411, %v2939
        %v3413 = vadd.f32 %v3412, %v2943
        %v3414 = vrot.slane %v3413, 4
        %v3415 = vadd.f32 %v3413, %v3414
        %v3416 = vrot.slane %v3415, 2
        %v3417 = vadd.f32 %v3415, %v3416
        %v3418 = vrot.slane %v3417, 1
        %v3419 = vadd.f32 %v3417, %v3418
        %v3420 = vadd.f32 %v2884, %v2888
        %v3421 = vadd.f32 %v3420, %v2892
        %v3422 = vadd.f32 %v3421, %v2896
        %v3423 = vadd.f32 %v3422, %v2900
        %v3424 = vadd.f32 %v3423, %v2904
        %v3425 = vadd.f32 %v3424, %v2908
        %v3426 = vadd.f32 %v3425, %v2912
        %v3427 = vadd.f32 %v3426, %v2916
        %v3428 = vadd.f32 %v3427, %v2920
        %v3429 = vadd.f32 %v3428, %v2924
        %v3430 = vadd.f32 %v3429, %v2928
        %v3431 = vadd.f32 %v3430, %v2932
        %v3432 = vadd.f32 %v3431, %v2936
        %v3433 = vadd.f32 %v3432, %v2940
        %v3434 = vadd.f32 %v3433, %v2944
        %v3435 = vrot.slane %v3434, 4
        %v3436 = vadd.f32 %v3434, %v3435
        %v3437 = vrot.slane %v3436, 2
        %v3438 = vadd.f32 %v3436, %v3437
        %v3439 = vrot.slane %v3438, 1
        %v3440 = vadd.f32 %v3438, %v3439
        %v3441 = vadd.f32 %v2885, %v2889
        %v3442 = vadd.f32 %v3441, %v2893
        %v3443 = vadd.f32 %v3442, %v2897
        %v3444 = vadd.f32 %v3443, %v2901
        %v3445 = vadd.f32 %v3444, %v2905
        %v3446 = vadd.f32 %v3445, %v2909
        %v3447 = vadd.f32 %v3446, %v2913
        %v3448 = vadd.f32 %v3447, %v2917
        %v3449 = vadd.f32 %v3448, %v2921
        %v3450 = vadd.f32 %v3449, %v2925
        %v3451 = vadd.f32 %v3450, %v2929
        %v3452 = vadd.f32 %v3451, %v2933
        %v3453 = vadd.f32 %v3452, %v2937
        %v3454 = vadd.f32 %v3453, %v2941
        %v3455 = vadd.f32 %v3454, %v2945
        %v3456 = vrot.slane %v3455, 4
        %v3457 = vadd.f32 %v3455, %v3456
        %v3458 = vrot.slane %v3457, 2
        %v3459 = vadd.f32 %v3457, %v3458
        %v3460 = vrot.slane %v3459, 1
        %v3461 = vadd.f32 %v3459, %v3460
        %v3462 = vadd.f32 %v2886, %v2890
        %v3463 = vadd.f32 %v3462, %v2894
        %v3464 = vadd.f32 %v3463, %v2898
        %v3465 = vadd.f32 %v3464, %v2902
        %v3466 = vadd.f32 %v3465, %v2906
        %v3467 = vadd.f32 %v3466, %v2910
        %v3468 = vadd.f32 %v3467, %v2914
        %v3469 = vadd.f32 %v3468, %v2918
        %v3470 = vadd.f32 %v3469, %v2922
        %v3471 = vadd.f32 %v3470, %v2926
        %v3472 = vadd.f32 %v3471, %v2930
        %v3473 = vadd.f32 %v3472, %v2934
        %v3474 = vadd.f32 %v3473, %v2938
        %v3475 = vadd.f32 %v3474, %v2942
        %v3476 = vadd.f32 %v3475, %v2946
        %v3477 = vrot.slane %v3476, 4
        %v3478 = vadd.f32 %v3476, %v3477
        %v3479 = vrot.slane %v3478, 2
        %v3480 = vadd.f32 %v3478, %v3479
        %v3481 = vrot.slane %v3480, 1
        %v3482 = vadd.f32 %v3480, %v3481
        %v3483 = vadd.f32 %v2947, %v2951
        %v3484 = vadd.f32 %v3483, %v2955
        %v3485 = vadd.f32 %v3484, %v2959
        %v3486 = vadd.f32 %v3485, %v2963
        %v3487 = vadd.f32 %v3486, %v2967
        %v3488 = vadd.f32 %v3487, %v2971
        %v3489 = vadd.f32 %v3488, %v2975
        %v3490 = vadd.f32 %v3489, %v2979
        %v3491 = vadd.f32 %v3490, %v2983
        %v3492 = vadd.f32 %v3491, %v2987
        %v3493 = vadd.f32 %v3492, %v2991
        %v3494 = vadd.f32 %v3493, %v2995
        %v3495 = vadd.f32 %v3494, %v2999
        %v3496 = vadd.f32 %v3495, %v3003
        %v3497 = vadd.f32 %v3496, %v3007
        %v3498 = vrot.slane %v3497, 4
        %v3499 = vadd.f32 %v3497, %v3498
        %v3500 = vrot.slane %v3499, 2
        %v3501 = vadd.f32 %v3499, %v3500
        %v3502 = vrot.slane %v3501, 1
        %v3503 = vadd.f32 %v3501, %v3502
        %v3504 = vadd.f32 %v2948, %v2952
        %v3505 = vadd.f32 %v3504, %v2956
        %v3506 = vadd.f32 %v3505, %v2960
        %v3507 = vadd.f32 %v3506, %v2964
        %v3508 = vadd.f32 %v3507, %v2968
        %v3509 = vadd.f32 %v3508, %v2972
        %v3510 = vadd.f32 %v3509, %v2976
        %v3511 = vadd.f32 %v3510, %v2980
        %v3512 = vadd.f32 %v3511, %v2984
        %v3513 = vadd.f32 %v3512, %v2988
        %v3514 = vadd.f32 %v3513, %v2992
        %v3515 = vadd.f32 %v3514, %v2996
        %v3516 = vadd.f32 %v3515, %v3000
        %v3517 = vadd.f32 %v3516, %v3004
        %v3518 = vadd.f32 %v3517, %v3008
        %v3519 = vrot.slane %v3518, 4
        %v3520 = vadd.f32 %v3518, %v3519
        %v3521 = vrot.slane %v3520, 2
        %v3522 = vadd.f32 %v3520, %v3521
        %v3523 = vrot.slane %v3522, 1
        %v3524 = vadd.f32 %v3522, %v3523
        %v3525 = vadd.f32 %v2949, %v2953
        %v3526 = vadd.f32 %v3525, %v2957
        %v3527 = vadd.f32 %v3526, %v2961
        %v3528 = vadd.f32 %v3527, %v2965
        %v3529 = vadd.f32 %v3528, %v2969
        %v3530 = vadd.f32 %v3529, %v2973
        %v3531 = vadd.f32 %v3530, %v2977
        %v3532 = vadd.f32 %v3531, %v2981
        %v3533 = vadd.f32 %v3532, %v2985
        %v3534 = vadd.f32 %v3533, %v2989
        %v3535 = vadd.f32 %v3534, %v2993
        %v3536 = vadd.f32 %v3535, %v2997
        %v3537 = vadd.f32 %v3536, %v3001
        %v3538 = vadd.f32 %v3537, %v3005
        %v3539 = vadd.f32 %v3538, %v3009
        %v3540 = vrot.slane %v3539, 4
        %v3541 = vadd.f32 %v3539, %v3540
        %v3542 = vrot.slane %v3541, 2
        %v3543 = vadd.f32 %v3541, %v3542
        %v3544 = vrot.slane %v3543, 1
        %v3545 = vadd.f32 %v3543, %v3544
        %v3546 = vadd.f32 %v2950, %v2954
        %v3547 = vadd.f32 %v3546, %v2958
        %v3548 = vadd.f32 %v3547, %v2962
        %v3549 = vadd.f32 %v3548, %v2966
        %v3550 = vadd.f32 %v3549, %v2970
        %v3551 = vadd.f32 %v3550, %v2974
        %v3552 = vadd.f32 %v3551, %v2978
        %v3553 = vadd.f32 %v3552, %v2982
        %v3554 = vadd.f32 %v3553, %v2986
        %v3555 = vadd.f32 %v3554, %v2990
        %v3556 = vadd.f32 %v3555, %v2994
        %v3557 = vadd.f32 %v3556, %v2998
        %v3558 = vadd.f32 %v3557, %v3002
        %v3559 = vadd.f32 %v3558, %v3006
        %v3560 = vadd.f32 %v3559, %v3010
        %v3561 = vrot.slane %v3560, 4
        %v3562 = vadd.f32 %v3560, %v3561
        %v3563 = vrot.slane %v3562, 2
        %v3564 = vadd.f32 %v3562, %v3563
        %v3565 = vrot.slane %v3564, 1
        %v3566 = vadd.f32 %v3564, %v3565
        %v3567 = vadd.f32 %v3011, %v3015
        %v3568 = vadd.f32 %v3567, %v3019
        %v3569 = vadd.f32 %v3568, %v3023
        %v3570 = vadd.f32 %v3569, %v3027
        %v3571 = vadd.f32 %v3570, %v3031
        %v3572 = vadd.f32 %v3571, %v3035
        %v3573 = vadd.f32 %v3572, %v3039
        %v3574 = vadd.f32 %v3573, %v3043
        %v3575 = vadd.f32 %v3574, %v3047
        %v3576 = vadd.f32 %v3575, %v3051
        %v3577 = vadd.f32 %v3576, %v3055
        %v3578 = vadd.f32 %v3577, %v3059
        %v3579 = vadd.f32 %v3578, %v3063
        %v3580 = vadd.f32 %v3579, %v3067
        %v3581 = vadd.f32 %v3580, %v3071
        %v3582 = vrot.slane %v3581, 4
        %v3583 = vadd.f32 %v3581, %v3582
        %v3584 = vrot.slane %v3583, 2
        %v3585 = vadd.f32 %v3583, %v3584
        %v3586 = vrot.slane %v3585, 1
        %v3587 = vadd.f32 %v3585, %v3586
        %v3588 = vadd.f32 %v3012, %v3016
        %v3589 = vadd.f32 %v3588, %v3020
        %v3590 = vadd.f32 %v3589, %v3024
        %v3591 = vadd.f32 %v3590, %v3028
        %v3592 = vadd.f32 %v3591, %v3032
        %v3593 = vadd.f32 %v3592, %v3036
        %v3594 = vadd.f32 %v3593, %v3040
        %v3595 = vadd.f32 %v3594, %v3044
        %v3596 = vadd.f32 %v3595, %v3048
        %v3597 = vadd.f32 %v3596, %v3052
        %v3598 = vadd.f32 %v3597, %v3056
        %v3599 = vadd.f32 %v3598, %v3060
        %v3600 = vadd.f32 %v3599, %v3064
        %v3601 = vadd.f32 %v3600, %v3068
        %v3602 = vadd.f32 %v3601, %v3072
        %v3603 = vrot.slane %v3602, 4
        %v3604 = vadd.f32 %v3602, %v3603
        %v3605 = vrot.slane %v3604, 2
        %v3606 = vadd.f32 %v3604, %v3605
        %v3607 = vrot.slane %v3606, 1
        %v3608 = vadd.f32 %v3606, %v3607
        %v3609 = vadd.f32 %v3013, %v3017
        %v3610 = vadd.f32 %v3609, %v3021
        %v3611 = vadd.f32 %v3610, %v3025
        %v3612 = vadd.f32 %v3611, %v3029
        %v3613 = vadd.f32 %v3612, %v3033
        %v3614 = vadd.f32 %v3613, %v3037
        %v3615 = vadd.f32 %v3614, %v3041
        %v3616 = vadd.f32 %v3615, %v3045
        %v3617 = vadd.f32 %v3616, %v3049
        %v3618 = vadd.f32 %v3617, %v3053
        %v3619 = vadd.f32 %v3618, %v3057
        %v3620 = vadd.f32 %v3619, %v3061
        %v3621 = vadd.f32 %v3620, %v3065
        %v3622 = vadd.f32 %v3621, %v3069
        %v3623 = vadd.f32 %v3622, %v3073
        %v3624 = vrot.slane %v3623, 4
        %v3625 = vadd.f32 %v3623, %v3624
        %v3626 = vrot.slane %v3625, 2
        %v3627 = vadd.f32 %v3625, %v3626
        %v3628 = vrot.slane %v3627, 1
        %v3629 = vadd.f32 %v3627, %v3628
        %v3630 = vadd.f32 %v3014, %v3018
        %v3631 = vadd.f32 %v3630, %v3022
        %v3632 = vadd.f32 %v3631, %v3026
        %v3633 = vadd.f32 %v3632, %v3030
        %v3634 = vadd.f32 %v3633, %v3034
        %v3635 = vadd.f32 %v3634, %v3038
        %v3636 = vadd.f32 %v3635, %v3042
        %v3637 = vadd.f32 %v3636, %v3046
        %v3638 = vadd.f32 %v3637, %v3050
        %v3639 = vadd.f32 %v3638, %v3054
        %v3640 = vadd.f32 %v3639, %v3058
        %v3641 = vadd.f32 %v3640, %v3062
        %v3642 = vadd.f32 %v3641, %v3066
        %v3643 = vadd.f32 %v3642, %v3070
        %v3644 = vadd.f32 %v3643, %v3074
        %v3645 = vrot.slane %v3644, 4
        %v3646 = vadd.f32 %v3644, %v3645
        %v3647 = vrot.slane %v3646, 2
        %v3648 = vadd.f32 %v3646, %v3647
        %v3649 = vrot.slane %v3648, 1
        %v3650 = vadd.f32 %v3648, %v3649
        %v3651 = vadd.f32 %v3075, %v3079
        %v3652 = vadd.f32 %v3651, %v3083
        %v3653 = vadd.f32 %v3652, %v3087
        %v3654 = vadd.f32 %v3653, %v3091
        %v3655 = vadd.f32 %v3654, %v3095
        %v3656 = vadd.f32 %v3655, %v3099
        %v3657 = vadd.f32 %v3656, %v3103
        %v3658 = vadd.f32 %v3657, %v3107
        %v3659 = vadd.f32 %v3658, %v3111
        %v3660 = vadd.f32 %v3659, %v3115
        %v3661 = vadd.f32 %v3660, %v3119
        %v3662 = vadd.f32 %v3661, %v3123
        %v3663 = vadd.f32 %v3662, %v3127
        %v3664 = vadd.f32 %v3663, %v3131
        %v3665 = vadd.f32 %v3664, %v3135
        %v3666 = vrot.slane %v3665, 4
        %v3667 = vadd.f32 %v3665, %v3666
        %v3668 = vrot.slane %v3667, 2
        %v3669 = vadd.f32 %v3667, %v3668
        %v3670 = vrot.slane %v3669, 1
        %v3671 = vadd.f32 %v3669, %v3670
        %v3672 = vadd.f32 %v3076, %v3080
        %v3673 = vadd.f32 %v3672, %v3084
        %v3674 = vadd.f32 %v3673, %v3088
        %v3675 = vadd.f32 %v3674, %v3092
        %v3676 = vadd.f32 %v3675, %v3096
        %v3677 = vadd.f32 %v3676, %v3100
        %v3678 = vadd.f32 %v3677, %v3104
        %v3679 = vadd.f32 %v3678, %v3108
        %v3680 = vadd.f32 %v3679, %v3112
        %v3681 = vadd.f32 %v3680, %v3116
        %v3682 = vadd.f32 %v3681, %v3120
        %v3683 = vadd.f32 %v3682, %v3124
        %v3684 = vadd.f32 %v3683, %v3128
        %v3685 = vadd.f32 %v3684, %v3132
        %v3686 = vadd.f32 %v3685, %v3136
        %v3687 = vrot.slane %v3686, 4
        %v3688 = vadd.f32 %v3686, %v3687
        %v3689 = vrot.slane %v3688, 2
        %v3690 = vadd.f32 %v3688, %v3689
        %v3691 = vrot.slane %v3690, 1
        %v3692 = vadd.f32 %v3690, %v3691
        %v3693 = vadd.f32 %v3077, %v3081
        %v3694 = vadd.f32 %v3693, %v3085
        %v3695 = vadd.f32 %v3694, %v3089
        %v3696 = vadd.f32 %v3695, %v3093
        %v3697 = vadd.f32 %v3696, %v3097
        %v3698 = vadd.f32 %v3697, %v3101
        %v3699 = vadd.f32 %v3698, %v3105
        %v3700 = vadd.f32 %v3699, %v3109
        %v3701 = vadd.f32 %v3700, %v3113
        %v3702 = vadd.f32 %v3701, %v3117
        %v3703 = vadd.f32 %v3702, %v3121
        %v3704 = vadd.f32 %v3703, %v3125
        %v3705 = vadd.f32 %v3704, %v3129
        %v3706 = vadd.f32 %v3705, %v3133
        %v3707 = vadd.f32 %v3706, %v3137
        %v3708 = vrot.slane %v3707, 4
        %v3709 = vadd.f32 %v3707, %v3708
        %v3710 = vrot.slane %v3709, 2
        %v3711 = vadd.f32 %v3709, %v3710
        %v3712 = vrot.slane %v3711, 1
        %v3713 = vadd.f32 %v3711, %v3712
        %v3714 = vadd.f32 %v3078, %v3082
        %v3715 = vadd.f32 %v3714, %v3086
        %v3716 = vadd.f32 %v3715, %v3090
        %v3717 = vadd.f32 %v3716, %v3094
        %v3718 = vadd.f32 %v3717, %v3098
        %v3719 = vadd.f32 %v3718, %v3102
        %v3720 = vadd.f32 %v3719, %v3106
        %v3721 = vadd.f32 %v3720, %v3110
        %v3722 = vadd.f32 %v3721, %v3114
        %v3723 = vadd.f32 %v3722, %v3118
        %v3724 = vadd.f32 %v3723, %v3122
        %v3725 = vadd.f32 %v3724, %v3126
        %v3726 = vadd.f32 %v3725, %v3130
        %v3727 = vadd.f32 %v3726, %v3134
        %v3728 = vadd.f32 %v3727, %v3138
        %v3729 = vrot.slane %v3728, 4
        %v3730 = vadd.f32 %v3728, %v3729
        %v3731 = vrot.slane %v3730, 2
        %v3732 = vadd.f32 %v3730, %v3731
        %v3733 = vrot.slane %v3732, 1
        %v3734 = vadd.f32 %v3732, %v3733
        %v3735 = vadd.f32 %v3139, %v3143
        %v3736 = vadd.f32 %v3735, %v3147
        %v3737 = vadd.f32 %v3736, %v3151
        %v3738 = vadd.f32 %v3737, %v3155
        %v3739 = vadd.f32 %v3738, %v3159
        %v3740 = vadd.f32 %v3739, %v3163
        %v3741 = vadd.f32 %v3740, %v3167
        %v3742 = vadd.f32 %v3741, %v3171
        %v3743 = vadd.f32 %v3742, %v3175
        %v3744 = vadd.f32 %v3743, %v3179
        %v3745 = vadd.f32 %v3744, %v3183
        %v3746 = vadd.f32 %v3745, %v3187
        %v3747 = vadd.f32 %v3746, %v3191
        %v3748 = vadd.f32 %v3747, %v3195
        %v3749 = vadd.f32 %v3748, %v3199
        %v3750 = vrot.slane %v3749, 4
        %v3751 = vadd.f32 %v3749, %v3750
        %v3752 = vrot.slane %v3751, 2
        %v3753 = vadd.f32 %v3751, %v3752
        %v3754 = vrot.slane %v3753, 1
        %v3755 = vadd.f32 %v3753, %v3754
        %v3756 = vadd.f32 %v3140, %v3144
        %v3757 = vadd.f32 %v3756, %v3148
        %v3758 = vadd.f32 %v3757, %v3152
        %v3759 = vadd.f32 %v3758, %v3156
        %v3760 = vadd.f32 %v3759, %v3160
        %v3761 = vadd.f32 %v3760, %v3164
        %v3762 = vadd.f32 %v3761, %v3168
        %v3763 = vadd.f32 %v3762, %v3172
        %v3764 = vadd.f32 %v3763, %v3176
        %v3765 = vadd.f32 %v3764, %v3180
        %v3766 = vadd.f32 %v3765, %v3184
        %v3767 = vadd.f32 %v3766, %v3188
        %v3768 = vadd.f32 %v3767, %v3192
        %v3769 = vadd.f32 %v3768, %v3196
        %v3770 = vadd.f32 %v3769, %v3200
        %v3771 = vrot.slane %v3770, 4
        %v3772 = vadd.f32 %v3770, %v3771
        %v3773 = vrot.slane %v3772, 2
        %v3774 = vadd.f32 %v3772, %v3773
        %v3775 = vrot.slane %v3774, 1
        %v3776 = vadd.f32 %v3774, %v3775
        %v3777 = vadd.f32 %v3141, %v3145
        %v3778 = vadd.f32 %v3777, %v3149
        %v3779 = vadd.f32 %v3778, %v3153
        %v3780 = vadd.f32 %v3779, %v3157
        %v3781 = vadd.f32 %v3780, %v3161
        %v3782 = vadd.f32 %v3781, %v3165
        %v3783 = vadd.f32 %v3782, %v3169
        %v3784 = vadd.f32 %v3783, %v3173
        %v3785 = vadd.f32 %v3784, %v3177
        %v3786 = vadd.f32 %v3785, %v3181
        %v3787 = vadd.f32 %v3786, %v3185
        %v3788 = vadd.f32 %v3787, %v3189
        %v3789 = vadd.f32 %v3788, %v3193
        %v3790 = vadd.f32 %v3789, %v3197
        %v3791 = vadd.f32 %v3790, %v3201
        %v3792 = vrot.slane %v3791, 4
        %v3793 = vadd.f32 %v3791, %v3792
        %v3794 = vrot.slane %v3793, 2
        %v3795 = vadd.f32 %v3793, %v3794
        %v3796 = vrot.slane %v3795, 1
        %v3797 = vadd.f32 %v3795, %v3796
        %v3798 = vadd.f32 %v3142, %v3146
        %v3799 = vadd.f32 %v3798, %v3150
        %v3800 = vadd.f32 %v3799, %v3154
        %v3801 = vadd.f32 %v3800, %v3158
        %v3802 = vadd.f32 %v3801, %v3162
        %v3803 = vadd.f32 %v3802, %v3166
        %v3804 = vadd.f32 %v3803, %v3170
        %v3805 = vadd.f32 %v3804, %v3174
        %v3806 = vadd.f32 %v3805, %v3178
        %v3807 = vadd.f32 %v3806, %v3182
        %v3808 = vadd.f32 %v3807, %v3186
        %v3809 = vadd.f32 %v3808, %v3190
        %v3810 = vadd.f32 %v3809, %v3194
        %v3811 = vadd.f32 %v3810, %v3198
        %v3812 = vadd.f32 %v3811, %v3202
        %v3813 = vrot.slane %v3812, 4
        %v3814 = vadd.f32 %v3812, %v3813
        %v3815 = vrot.slane %v3814, 2
        %v3816 = vadd.f32 %v3814, %v3815
        %v3817 = vrot.slane %v3816, 1
        %v3818 = vadd.f32 %v3816, %v3817
        %v3819 = vadd.f32 %v3203, %v3207
        %v3820 = vadd.f32 %v3819, %v3211
        %v3821 = vadd.f32 %v3820, %v3215
        %v3822 = vadd.f32 %v3821, %v3219
        %v3823 = vadd.f32 %v3822, %v3223
        %v3824 = vadd.f32 %v3823, %v3227
        %v3825 = vadd.f32 %v3824, %v3231
        %v3826 = vadd.f32 %v3825, %v3235
        %v3827 = vadd.f32 %v3826, %v3239
        %v3828 = vadd.f32 %v3827, %v3243
        %v3829 = vadd.f32 %v3828, %v3247
        %v3830 = vadd.f32 %v3829, %v3251
        %v3831 = vadd.f32 %v3830, %v3255
        %v3832 = vadd.f32 %v3831, %v3259
        %v3833 = vadd.f32 %v3832, %v3263
        %v3834 = vrot.slane %v3833, 4
        %v3835 = vadd.f32 %v3833, %v3834
        %v3836 = vrot.slane %v3835, 2
        %v3837 = vadd.f32 %v3835, %v3836
        %v3838 = vrot.slane %v3837, 1
        %v3839 = vadd.f32 %v3837, %v3838
        %v3840 = vadd.f32 %v3204, %v3208
        %v3841 = vadd.f32 %v3840, %v3212
        %v3842 = vadd.f32 %v3841, %v3216
        %v3843 = vadd.f32 %v3842, %v3220
        %v3844 = vadd.f32 %v3843, %v3224
        %v3845 = vadd.f32 %v3844, %v3228
        %v3846 = vadd.f32 %v3845, %v3232
        %v3847 = vadd.f32 %v3846, %v3236
        %v3848 = vadd.f32 %v3847, %v3240
        %v3849 = vadd.f32 %v3848, %v3244
        %v3850 = vadd.f32 %v3849, %v3248
        %v3851 = vadd.f32 %v3850, %v3252
        %v3852 = vadd.f32 %v3851, %v3256
        %v3853 = vadd.f32 %v3852, %v3260
        %v3854 = vadd.f32 %v3853, %v3264
        %v3855 = vrot.slane %v3854, 4
        %v3856 = vadd.f32 %v3854, %v3855
        %v3857 = vrot.slane %v3856, 2
        %v3858 = vadd.f32 %v3856, %v3857
        %v3859 = vrot.slane %v3858, 1
        %v3860 = vadd.f32 %v3858, %v3859
        %v3861 = vadd.f32 %v3205, %v3209
        %v3862 = vadd.f32 %v3861, %v3213
        %v3863 = vadd.f32 %v3862, %v3217
        %v3864 = vadd.f32 %v3863, %v3221
        %v3865 = vadd.f32 %v3864, %v3225
        %v3866 = vadd.f32 %v3865, %v3229
        %v3867 = vadd.f32 %v3866, %v3233
        %v3868 = vadd.f32 %v3867, %v3237
        %v3869 = vadd.f32 %v3868, %v3241
        %v3870 = vadd.f32 %v3869, %v3245
        %v3871 = vadd.f32 %v3870, %v3249
        %v3872 = vadd.f32 %v3871, %v3253
        %v3873 = vadd.f32 %v3872, %v3257
        %v3874 = vadd.f32 %v3873, %v3261
        %v3875 = vadd.f32 %v3874, %v3265
        %v3876 = vrot.slane %v3875, 4
        %v3877 = vadd.f32 %v3875, %v3876
        %v3878 = vrot.slane %v3877, 2
        %v3879 = vadd.f32 %v3877, %v3878
        %v3880 = vrot.slane %v3879, 1
        %v3881 = vadd.f32 %v3879, %v3880
        %v3882 = vadd.f32 %v3206, %v3210
        %v3883 = vadd.f32 %v3882, %v3214
        %v3884 = vadd.f32 %v3883, %v3218
        %v3885 = vadd.f32 %v3884, %v3222
        %v3886 = vadd.f32 %v3885, %v3226
        %v3887 = vadd.f32 %v3886, %v3230
        %v3888 = vadd.f32 %v3887, %v3234
        %v3889 = vadd.f32 %v3888, %v3238
        %v3890 = vadd.f32 %v3889, %v3242
        %v3891 = vadd.f32 %v3890, %v3246
        %v3892 = vadd.f32 %v3891, %v3250
        %v3893 = vadd.f32 %v3892, %v3254
        %v3894 = vadd.f32 %v3893, %v3258
        %v3895 = vadd.f32 %v3894, %v3262
        %v3896 = vadd.f32 %v3895, %v3266
        %v3897 = vrot.slane %v3896, 4
        %v3898 = vadd.f32 %v3896, %v3897
        %v3899 = vrot.slane %v3898, 2
        %v3900 = vadd.f32 %v3898, %v3899
        %v3901 = vrot.slane %v3900, 1
        %v3902 = vadd.f32 %v3900, %v3901
        %v3903 = vadd.f32 %v3267, %v3271
        %v3904 = vadd.f32 %v3903, %v3275
        %v3905 = vadd.f32 %v3904, %v3279
        %v3906 = vadd.f32 %v3905, %v3283
        %v3907 = vadd.f32 %v3906, %v3287
        %v3908 = vadd.f32 %v3907, %v3291
        %v3909 = vadd.f32 %v3908, %v3295
        %v3910 = vadd.f32 %v3909, %v3299
        %v3911 = vadd.f32 %v3910, %v3303
        %v3912 = vadd.f32 %v3911, %v3307
        %v3913 = vadd.f32 %v3912, %v3311
        %v3914 = vadd.f32 %v3913, %v3315
        %v3915 = vadd.f32 %v3914, %v3319
        %v3916 = vadd.f32 %v3915, %v3323
        %v3917 = vadd.f32 %v3916, %v3327
        %v3918 = vrot.slane %v3917, 4
        %v3919 = vadd.f32 %v3917, %v3918
        %v3920 = vrot.slane %v3919, 2
        %v3921 = vadd.f32 %v3919, %v3920
        %v3922 = vrot.slane %v3921, 1
        %v3923 = vadd.f32 %v3921, %v3922
        %v3924 = vadd.f32 %v3268, %v3272
        %v3925 = vadd.f32 %v3924, %v3276
        %v3926 = vadd.f32 %v3925, %v3280
        %v3927 = vadd.f32 %v3926, %v3284
        %v3928 = vadd.f32 %v3927, %v3288
        %v3929 = vadd.f32 %v3928, %v3292
        %v3930 = vadd.f32 %v3929, %v3296
        %v3931 = vadd.f32 %v3930, %v3300
        %v3932 = vadd.f32 %v3931, %v3304
        %v3933 = vadd.f32 %v3932, %v3308
        %v3934 = vadd.f32 %v3933, %v3312
        %v3935 = vadd.f32 %v3934, %v3316
        %v3936 = vadd.f32 %v3935, %v3320
        %v3937 = vadd.f32 %v3936, %v3324
        %v3938 = vadd.f32 %v3937, %v3328
        %v3939 = vrot.slane %v3938, 4
        %v3940 = vadd.f32 %v3938, %v3939
        %v3941 = vrot.slane %v3940, 2
        %v3942 = vadd.f32 %v3940, %v3941
        %v3943 = vrot.slane %v3942, 1
        %v3944 = vadd.f32 %v3942, %v3943
        %v3945 = vadd.f32 %v3269, %v3273
        %v3946 = vadd.f32 %v3945, %v3277
        %v3947 = vadd.f32 %v3946, %v3281
        %v3948 = vadd.f32 %v3947, %v3285
        %v3949 = vadd.f32 %v3948, %v3289
        %v3950 = vadd.f32 %v3949, %v3293
        %v3951 = vadd.f32 %v3950, %v3297
        %v3952 = vadd.f32 %v3951, %v3301
        %v3953 = vadd.f32 %v3952, %v3305
        %v3954 = vadd.f32 %v3953, %v3309
        %v3955 = vadd.f32 %v3954, %v3313
        %v3956 = vadd.f32 %v3955, %v3317
        %v3957 = vadd.f32 %v3956, %v3321
        %v3958 = vadd.f32 %v3957, %v3325
        %v3959 = vadd.f32 %v3958, %v3329
        %v3960 = vrot.slane %v3959, 4
        %v3961 = vadd.f32 %v3959, %v3960
        %v3962 = vrot.slane %v3961, 2
        %v3963 = vadd.f32 %v3961, %v3962
        %v3964 = vrot.slane %v3963, 1
        %v3965 = vadd.f32 %v3963, %v3964
        %v3966 = vadd.f32 %v3270, %v3274
        %v3967 = vadd.f32 %v3966, %v3278
        %v3968 = vadd.f32 %v3967, %v3282
        %v3969 = vadd.f32 %v3968, %v3286
        %v3970 = vadd.f32 %v3969, %v3290
        %v3971 = vadd.f32 %v3970, %v3294
        %v3972 = vadd.f32 %v3971, %v3298
        %v3973 = vadd.f32 %v3972, %v3302
        %v3974 = vadd.f32 %v3973, %v3306
        %v3975 = vadd.f32 %v3974, %v3310
        %v3976 = vadd.f32 %v3975, %v3314
        %v3977 = vadd.f32 %v3976, %v3318
        %v3978 = vadd.f32 %v3977, %v3322
        %v3979 = vadd.f32 %v3978, %v3326
        %v3980 = vadd.f32 %v3979, %v3330
        %v3981 = vrot.slane %v3980, 4
        %v3982 = vadd.f32 %v3980, %v3981
        %v3983 = vrot.slane %v3982, 2
        %v3984 = vadd.f32 %v3982, %v3983
        %v3985 = vrot.slane %v3984, 1
        %v3986 = vadd.f32 %v3984, %v3985
        %v3987 = vadd.f32 %v3331, %v3335
        %v3988 = vadd.f32 %v3987, %v3339
        %v3989 = vadd.f32 %v3988, %v3343
        %v3990 = vadd.f32 %v3989, %v3347
        %v3991 = vadd.f32 %v3990, %v3351
        %v3992 = vadd.f32 %v3991, %v3355
        %v3993 = vadd.f32 %v3992, %v3359
        %v3994 = vadd.f32 %v3993, %v3363
        %v3995 = vadd.f32 %v3994, %v3367
        %v3996 = vadd.f32 %v3995, %v3371
        %v3997 = vadd.f32 %v3996, %v3375
        %v3998 = vadd.f32 %v3997, %v3379
        %v3999 = vadd.f32 %v3998, %v3383
        %v4000 = vadd.f32 %v3999, %v3387
        %v4001 = vadd.f32 %v4000, %v3391
        %v4002 = vrot.slane %v4001, 4
        %v4003 = vadd.f32 %v4001, %v4002
        %v4004 = vrot.slane %v4003, 2
        %v4005 = vadd.f32 %v4003, %v4004
        %v4006 = vrot.slane %v4005, 1
        %v4007 = vadd.f32 %v4005, %v4006
        %v4008 = vadd.f32 %v3332, %v3336
        %v4009 = vadd.f32 %v4008, %v3340
        %v4010 = vadd.f32 %v4009, %v3344
        %v4011 = vadd.f32 %v4010, %v3348
        %v4012 = vadd.f32 %v4011, %v3352
        %v4013 = vadd.f32 %v4012, %v3356
        %v4014 = vadd.f32 %v4013, %v3360
        %v4015 = vadd.f32 %v4014, %v3364
        %v4016 = vadd.f32 %v4015, %v3368
        %v4017 = vadd.f32 %v4016, %v3372
        %v4018 = vadd.f32 %v4017, %v3376
        %v4019 = vadd.f32 %v4018, %v3380
        %v4020 = vadd.f32 %v4019, %v3384
        %v4021 = vadd.f32 %v4020, %v3388
        %v4022 = vadd.f32 %v4021, %v3392
        %v4023 = vrot.slane %v4022, 4
        %v4024 = vadd.f32 %v4022, %v4023
        %v4025 = vrot.slane %v4024, 2
        %v4026 = vadd.f32 %v4024, %v4025
        %v4027 = vrot.slane %v4026, 1
        %v4028 = vadd.f32 %v4026, %v4027
        %v4029 = vadd.f32 %v3333, %v3337
        %v4030 = vadd.f32 %v4029, %v3341
        %v4031 = vadd.f32 %v4030, %v3345
        %v4032 = vadd.f32 %v4031, %v3349
        %v4033 = vadd.f32 %v4032, %v3353
        %v4034 = vadd.f32 %v4033, %v3357
        %v4035 = vadd.f32 %v4034, %v3361
        %v4036 = vadd.f32 %v4035, %v3365
        %v4037 = vadd.f32 %v4036, %v3369
        %v4038 = vadd.f32 %v4037, %v3373
        %v4039 = vadd.f32 %v4038, %v3377
        %v4040 = vadd.f32 %v4039, %v3381
        %v4041 = vadd.f32 %v4040, %v3385
        %v4042 = vadd.f32 %v4041, %v3389
        %v4043 = vadd.f32 %v4042, %v3393
        %v4044 = vrot.slane %v4043, 4
        %v4045 = vadd.f32 %v4043, %v4044
        %v4046 = vrot.slane %v4045, 2
        %v4047 = vadd.f32 %v4045, %v4046
        %v4048 = vrot.slane %v4047, 1
        %v4049 = vadd.f32 %v4047, %v4048
        %v4050 = vadd.f32 %v3334, %v3338
        %v4051 = vadd.f32 %v4050, %v3342
        %v4052 = vadd.f32 %v4051, %v3346
        %v4053 = vadd.f32 %v4052, %v3350
        %v4054 = vadd.f32 %v4053, %v3354
        %v4055 = vadd.f32 %v4054, %v3358
        %v4056 = vadd.f32 %v4055, %v3362
        %v4057 = vadd.f32 %v4056, %v3366
        %v4058 = vadd.f32 %v4057, %v3370
        %v4059 = vadd.f32 %v4058, %v3374
        %v4060 = vadd.f32 %v4059, %v3378
        %v4061 = vadd.f32 %v4060, %v3382
        %v4062 = vadd.f32 %v4061, %v3386
        %v4063 = vadd.f32 %v4062, %v3390
        %v4064 = vadd.f32 %v4063, %v3394
        %v4065 = vrot.slane %v4064, 4
        %v4066 = vadd.f32 %v4064, %v4065
        %v4067 = vrot.slane %v4066, 2
        %v4068 = vadd.f32 %v4066, %v4067
        %v4069 = vrot.slane %v4068, 1
        %v4070 = vadd.f32 %v4068, %v4069
        %vm4103 = vcmask 1041409
        %v4104 = vsel %vm4103, %v3503, %v3419
        %vm4105 = vcmask 1042434
        %v4106 = vsel %vm4105, %v3587, %v4104
        %vm4107 = vcmask 1043459
        %v4108 = vsel %vm4107, %v3671, %v4106
        %vm4109 = vcmask 1044484
        %v4110 = vsel %vm4109, %v3755, %v4108
        %vm4111 = vcmask 1045509
        %v4112 = vsel %vm4111, %v3839, %v4110
        %vm4113 = vcmask 1046534
        %v4114 = vsel %vm4113, %v3923, %v4112
        %vm4115 = vcmask 1047559
        %v4116 = vsel %vm4115, %v4007, %v4114
        %v4117 = vsel %vm4103, %v3524, %v3440
        %v4118 = vsel %vm4105, %v3608, %v4117
        %v4119 = vsel %vm4107, %v3692, %v4118
        %v4120 = vsel %vm4109, %v3776, %v4119
        %v4121 = vsel %vm4111, %v3860, %v4120
        %v4122 = vsel %vm4113, %v3944, %v4121
        %v4123 = vsel %vm4115, %v4028, %v4122
        %v4124 = vsel %vm4103, %v3545, %v3461
        %v4125 = vsel %vm4105, %v3629, %v4124
        %v4126 = vsel %vm4107, %v3713, %v4125
        %v4127 = vsel %vm4109, %v3797, %v4126
        %v4128 = vsel %vm4111, %v3881, %v4127
        %v4129 = vsel %vm4113, %v3965, %v4128
        %v4130 = vsel %vm4115, %v4049, %v4129
        %v4131 = vsel %vm4103, %v3566, %v3482
        %v4132 = vsel %vm4105, %v3650, %v4131
        %v4133 = vsel %vm4107, %v3734, %v4132
        %v4134 = vsel %vm4109, %v3818, %v4133
        %v4135 = vsel %vm4111, %v3902, %v4134
        %v4136 = vsel %vm4113, %v3986, %v4135
        %v4137 = vsel %vm4115, %v4070, %v4136
        %v4142 = vadd.f32 %v3395, %v4116
        %v4143 = vadd.f32 %v3396, %v4123
        %v4144 = vadd.f32 %v3397, %v4130
        %v4145 = vadd.f32 %v3398, %v4137
        %4146 = vst [vmem:[#allocation2] sm:$0xff] %v4142
        %4147 = vst [vmem:[#allocation2 + $0x8] sm:$0xff] %v4143
        %4148 = vst [vmem:[#allocation2 + $0x10] sm:$0xff] %v4144
        %4149 = vst [vmem:[#allocation2 + $0x18] sm:$0xff] %v4145
        %p4150 = scmp.eq.s32.totalorder %s21, 1
        // Predicated region
        $region86: #{rotationnet_forward.1} parent=76 // pred_check
          %p4151 = pneg %p4150
        $region87: #{rotationnet_forward.1} parent=76 // pred_check_branch
          %4153 = sbr.rel (%p4151) target = $region89
        $region88: #{rotationnet_forward.1} parent=76 // pred_region
          %v4154 = vld [vmem:[#allocation2] sm:$0xff]
          %v4155 = vld [vmem:[#allocation2 + $0x8] sm:$0xff]
          %v4156 = vld [vmem:[#allocation2 + $0x10] sm:$0xff]
          %v4157 = vld [vmem:[#allocation2 + $0x18] sm:$0xff]
          %v4158 = vmul.f32 %v4154, 0.00390625
          %v4159 = vmul.f32 %v4155, 0.00390625
          %v4160 = vmul.f32 %v4156, 0.00390625
          %v4161 = vmul.f32 %v4157, 0.00390625
          %v4162 = vpack.c.bf16 %v4158, %v4158
          %v4163 = vpack.c.bf16 %v4159, %v4159
          %v4164 = vpack.c.bf16 %v4160, %v4160
          %v4165 = vpack.c.bf16 %v4161, %v4161
          %v4166 = vld [vmem:[%s3] sm:$0xf]
          %v4167 = vld [vmem:[%s3 + $0x4] sm:$0xf]
          %v4168 = vld [vmem:[%s3 + $0x8] sm:$0xf]
          %v4169 = vld [vmem:[%s3 + $0xc] sm:$0xf]
          %v4170 = vld [vmem:[%s3 + $0x10] sm:$0xf]
          %v4171 = vld [vmem:[%s3 + $0x14] sm:$0xf]
          %v4172 = vld [vmem:[%s3 + $0x18] sm:$0xf]
          %v4173 = vld [vmem:[%s3 + $0x1c] sm:$0xf]
          %v4174 = vld [vmem:[%s3 + $0x20] sm:$0xf]
          %v4175 = vld [vmem:[%s3 + $0x24] sm:$0xf]
          %v4176 = vld [vmem:[%s3 + $0x28] sm:$0xf]
          %v4177 = vld [vmem:[%s3 + $0x2c] sm:$0xf]
          %v4178 = vld [vmem:[%s3 + $0x30] sm:$0xf]
          %v4179 = vld [vmem:[%s3 + $0x34] sm:$0xf]
          %v4180 = vld [vmem:[%s3 + $0x38] sm:$0xf]
          %v4181 = vld [vmem:[%s3 + $0x3c] sm:$0xf]
          %v4182 = vld [vmem:[%s3 + $0x40] sm:$0xf]
          %v4183 = vld [vmem:[%s3 + $0x44] sm:$0xf]
          %v4184 = vld [vmem:[%s3 + $0x48] sm:$0xf]
          %v4185 = vld [vmem:[%s3 + $0x4c] sm:$0xf]
          %v4186 = vld [vmem:[%s3 + $0x50] sm:$0xf]
          %v4187 = vld [vmem:[%s3 + $0x54] sm:$0xf]
          %v4188 = vld [vmem:[%s3 + $0x58] sm:$0xf]
          %v4189 = vld [vmem:[%s3 + $0x5c] sm:$0xf]
          %v4190 = vld [vmem:[%s3 + $0x60] sm:$0xf]
          %v4191 = vld [vmem:[%s3 + $0x64] sm:$0xf]
          %v4192 = vld [vmem:[%s3 + $0x68] sm:$0xf]
          %v4193 = vld [vmem:[%s3 + $0x6c] sm:$0xf]
          %v4194 = vld [vmem:[%s3 + $0x70] sm:$0xf]
          %v4195 = vld [vmem:[%s3 + $0x74] sm:$0xf]
          %v4196 = vld [vmem:[%s3 + $0x78] sm:$0xf]
          %v4197 = vld [vmem:[%s3 + $0x7c] sm:$0xf]
          %v4198 = vld [vmem:[%s3 + $0x80] sm:$0xf]
          %v4199 = vld [vmem:[%s3 + $0x84] sm:$0xf]
          %v4200 = vld [vmem:[%s3 + $0x88] sm:$0xf]
          %v4201 = vld [vmem:[%s3 + $0x8c] sm:$0xf]
          %v4202 = vld [vmem:[%s3 + $0x90] sm:$0xf]
          %v4203 = vld [vmem:[%s3 + $0x94] sm:$0xf]
          %v4204 = vld [vmem:[%s3 + $0x98] sm:$0xf]
          %v4205 = vld [vmem:[%s3 + $0x9c] sm:$0xf]
          %v4206 = vld [vmem:[%s3 + $0xa0] sm:$0xf]
          %v4207 = vld [vmem:[%s3 + $0xa4] sm:$0xf]
          %v4208 = vld [vmem:[%s3 + $0xa8] sm:$0xf]
          %v4209 = vld [vmem:[%s3 + $0xac] sm:$0xf]
          %v4210 = vld [vmem:[%s3 + $0xb0] sm:$0xf]
          %v4211 = vld [vmem:[%s3 + $0xb4] sm:$0xf]
          %v4212 = vld [vmem:[%s3 + $0xb8] sm:$0xf]
          %v4213 = vld [vmem:[%s3 + $0xbc] sm:$0xf]
          %v4214 = vld [vmem:[%s3 + $0xc0] sm:$0xf]
          %v4215 = vld [vmem:[%s3 + $0xc4] sm:$0xf]
          %v4216 = vld [vmem:[%s3 + $0xc8] sm:$0xf]
          %v4217 = vld [vmem:[%s3 + $0xcc] sm:$0xf]
          %v4218 = vld [vmem:[%s3 + $0xd0] sm:$0xf]
          %v4219 = vld [vmem:[%s3 + $0xd4] sm:$0xf]
          %v4220 = vld [vmem:[%s3 + $0xd8] sm:$0xf]
          %v4221 = vld [vmem:[%s3 + $0xdc] sm:$0xf]
          %v4222 = vld [vmem:[%s3 + $0xe0] sm:$0xf]
          %v4223 = vld [vmem:[%s3 + $0xe4] sm:$0xf]
          %v4224 = vld [vmem:[%s3 + $0xe8] sm:$0xf]
          %v4225 = vld [vmem:[%s3 + $0xec] sm:$0xf]
          %v4226 = vld [vmem:[%s3 + $0xf0] sm:$0xf]
          %v4227 = vld [vmem:[%s3 + $0xf4] sm:$0xf]
          %v4228 = vld [vmem:[%s3 + $0xf8] sm:$0xf]
          %v4229 = vld [vmem:[%s3 + $0xfc] sm:$0xf]
          %v4230 = vld [vmem:[%s4] sm:$0x1]
          %v4232 = vlaneseq
          %v4233 = vshrl.u32 %v4232, 7
          %v4234 = vsub.s32 0, %v4233
          %v4235 = vrot.slane %v4230, %v4234
          %v4301 = vunpack.c.l.b16 %v4166
          %v4302 = vunpack.c.l.b16 %v4167
          %v4303 = vunpack.c.l.b16 %v4168
          %v4304 = vunpack.c.l.b16 %v4169
          %v4305 = vunpack.c.l.b16 %v4170
          %v4306 = vunpack.c.l.b16 %v4171
          %v4307 = vunpack.c.l.b16 %v4172
          %v4308 = vunpack.c.l.b16 %v4173
          %v4309 = vunpack.c.l.b16 %v4174
          %v4310 = vunpack.c.l.b16 %v4175
          %v4311 = vunpack.c.l.b16 %v4176
          %v4312 = vunpack.c.l.b16 %v4177
          %v4313 = vunpack.c.l.b16 %v4178
          %v4314 = vunpack.c.l.b16 %v4179
          %v4315 = vunpack.c.l.b16 %v4180
          %v4316 = vunpack.c.l.b16 %v4181
          %v4317 = vunpack.c.l.b16 %v4182
          %v4318 = vunpack.c.l.b16 %v4183
          %v4319 = vunpack.c.l.b16 %v4184
          %v4320 = vunpack.c.l.b16 %v4185
          %v4321 = vunpack.c.l.b16 %v4186
          %v4322 = vunpack.c.l.b16 %v4187
          %v4323 = vunpack.c.l.b16 %v4188
          %v4324 = vunpack.c.l.b16 %v4189
          %v4325 = vunpack.c.l.b16 %v4190
          %v4326 = vunpack.c.l.b16 %v4191
          %v4327 = vunpack.c.l.b16 %v4192
          %v4328 = vunpack.c.l.b16 %v4193
          %v4329 = vunpack.c.l.b16 %v4194
          %v4330 = vunpack.c.l.b16 %v4195
          %v4331 = vunpack.c.l.b16 %v4196
          %v4332 = vunpack.c.l.b16 %v4197
          %v4333 = vunpack.c.l.b16 %v4198
          %v4334 = vunpack.c.l.b16 %v4199
          %v4335 = vunpack.c.l.b16 %v4200
          %v4336 = vunpack.c.l.b16 %v4201
          %v4337 = vunpack.c.l.b16 %v4202
          %v4338 = vunpack.c.l.b16 %v4203
          %v4339 = vunpack.c.l.b16 %v4204
          %v4340 = vunpack.c.l.b16 %v4205
          %v4341 = vunpack.c.l.b16 %v4206
          %v4342 = vunpack.c.l.b16 %v4207
          %v4343 = vunpack.c.l.b16 %v4208
          %v4344 = vunpack.c.l.b16 %v4209
          %v4345 = vunpack.c.l.b16 %v4210
          %v4346 = vunpack.c.l.b16 %v4211
          %v4347 = vunpack.c.l.b16 %v4212
          %v4348 = vunpack.c.l.b16 %v4213
          %v4349 = vunpack.c.l.b16 %v4214
          %v4350 = vunpack.c.l.b16 %v4215
          %v4351 = vunpack.c.l.b16 %v4216
          %v4352 = vunpack.c.l.b16 %v4217
          %v4353 = vunpack.c.l.b16 %v4218
          %v4354 = vunpack.c.l.b16 %v4219
          %v4355 = vunpack.c.l.b16 %v4220
          %v4356 = vunpack.c.l.b16 %v4221
          %v4357 = vunpack.c.l.b16 %v4222
          %v4358 = vunpack.c.l.b16 %v4223
          %v4359 = vunpack.c.l.b16 %v4224
          %v4360 = vunpack.c.l.b16 %v4225
          %v4361 = vunpack.c.l.b16 %v4226
          %v4362 = vunpack.c.l.b16 %v4227
          %v4363 = vunpack.c.l.b16 %v4228
          %v4364 = vunpack.c.l.b16 %v4229
          %v4365 = vpack.c.b16 %v4302, %v4301
          %v4366 = vpack.c.b16 %v4304, %v4303
          %v4367 = vpack.c.b16 %v4306, %v4305
          %v4368 = vpack.c.b16 %v4308, %v4307
          %v4369 = vpack.c.b16 %v4310, %v4309
          %v4370 = vpack.c.b16 %v4312, %v4311
          %v4371 = vpack.c.b16 %v4314, %v4313
          %v4372 = vpack.c.b16 %v4316, %v4315
          %v4373 = vpack.c.b16 %v4318, %v4317
          %v4374 = vpack.c.b16 %v4320, %v4319
          %v4375 = vpack.c.b16 %v4322, %v4321
          %v4376 = vpack.c.b16 %v4324, %v4323
          %v4377 = vpack.c.b16 %v4326, %v4325
          %v4378 = vpack.c.b16 %v4328, %v4327
          %v4379 = vpack.c.b16 %v4330, %v4329
          %v4380 = vpack.c.b16 %v4332, %v4331
          %v4381 = vpack.c.b16 %v4334, %v4333
          %v4382 = vpack.c.b16 %v4336, %v4335
          %v4383 = vpack.c.b16 %v4338, %v4337
          %v4384 = vpack.c.b16 %v4340, %v4339
          %v4385 = vpack.c.b16 %v4342, %v4341
          %v4386 = vpack.c.b16 %v4344, %v4343
          %v4387 = vpack.c.b16 %v4346, %v4345
          %v4388 = vpack.c.b16 %v4348, %v4347
          %v4389 = vpack.c.b16 %v4350, %v4349
          %v4390 = vpack.c.b16 %v4352, %v4351
          %v4391 = vpack.c.b16 %v4354, %v4353
          %v4392 = vpack.c.b16 %v4356, %v4355
          %v4393 = vpack.c.b16 %v4358, %v4357
          %v4394 = vpack.c.b16 %v4360, %v4359
          %v4395 = vpack.c.b16 %v4362, %v4361
          %v4396 = vpack.c.b16 %v4364, %v4363
          %4429 = vmatprep.subr.bf16.mxu0 0
          %4430 = vmatpush1.bf16.msra.mxu0 %v4365
          %4431 = vmatprep.subr.bf16.mxu0 0
          %4432 = vmatpush1.bf16.msra.mxu0 %v4366
          %4433 = vmatprep.subr.bf16.mxu0 0
          %4434 = vmatpush1.bf16.msra.mxu0 %v4367
          %4435 = vmatprep.subr.bf16.mxu0 0
          %4436 = vmatpush1.bf16.msra.mxu0 %v4368
          %4437 = vmatprep.subr.bf16.mxu0 0
          %4438 = vmatpush1.bf16.msra.mxu0 %v4369
          %4439 = vmatprep.subr.bf16.mxu0 0
          %4440 = vmatpush1.bf16.msra.mxu0 %v4370
          %4441 = vmatprep.subr.bf16.mxu0 0
          %4442 = vmatpush1.bf16.msra.mxu0 %v4371
          %4443 = vmatprep.subr.bf16.mxu0 0
          %4444 = vmatpush1.bf16.msra.mxu0 %v4372
          %4445 = vmatprep.subr.bf16.mxu0 0
          %4446 = vmatpush1.bf16.msra.mxu0 %v4373
          %4447 = vmatprep.subr.bf16.mxu0 0
          %4448 = vmatpush1.bf16.msra.mxu0 %v4374
          %4449 = vmatprep.subr.bf16.mxu0 0
          %4450 = vmatpush1.bf16.msra.mxu0 %v4375
          %4451 = vmatprep.subr.bf16.mxu0 0
          %4452 = vmatpush1.bf16.msra.mxu0 %v4376
          %4453 = vmatprep.subr.bf16.mxu0 0
          %4454 = vmatpush1.bf16.msra.mxu0 %v4377
          %4455 = vmatprep.subr.bf16.mxu0 0
          %4456 = vmatpush1.bf16.msra.mxu0 %v4378
          %4457 = vmatprep.subr.bf16.mxu0 0
          %4458 = vmatpush1.bf16.msra.mxu0 %v4379
          %4459 = vmatprep.subr.bf16.mxu0 0
          %4460 = vmatpush1.bf16.msra.mxu0 %v4380
          %4461 = vmatprep.mubr.bf16.mxu0 %v4163
          %4462 = vmatmul.mubr.bf16.gmra.mrb[0].mxu0 %v4162
          %v4463 = vpop.f32.mrb[0].mxu0
          %v4464 = vadd.f32 %v4235, %v4463
          %v4465 = vpop.f32.mrb[0].mxu0
          %v4466 = vpop.f32.mrb[0].mxu0
          %v4467 = vpop.f32.mrb[0].mxu0
          %4468 = vdwg.mxu0
          %4469 = vmatprep.subr.bf16.mxu0 0
          %4470 = vmatpush1.bf16.msra.mxu0 %v4381
          %4471 = vmatprep.subr.bf16.mxu0 0
          %4472 = vmatpush1.bf16.msra.mxu0 %v4382
          %4473 = vmatprep.subr.bf16.mxu0 0
          %4474 = vmatpush1.bf16.msra.mxu0 %v4383
          %4475 = vmatprep.subr.bf16.mxu0 0
          %4476 = vmatpush1.bf16.msra.mxu0 %v4384
          %4477 = vmatprep.subr.bf16.mxu0 0
          %4478 = vmatpush1.bf16.msra.mxu0 %v4385
          %4479 = vmatprep.subr.bf16.mxu0 0
          %4480 = vmatpush1.bf16.msra.mxu0 %v4386
          %4481 = vmatprep.subr.bf16.mxu0 0
          %4482 = vmatpush1.bf16.msra.mxu0 %v4387
          %4483 = vmatprep.subr.bf16.mxu0 0
          %4484 = vmatpush1.bf16.msra.mxu0 %v4388
          %4485 = vmatprep.subr.bf16.mxu0 0
          %4486 = vmatpush1.bf16.msra.mxu0 %v4389
          %4487 = vmatprep.subr.bf16.mxu0 0
          %4488 = vmatpush1.bf16.msra.mxu0 %v4390
          %4489 = vmatprep.subr.bf16.mxu0 0
          %4490 = vmatpush1.bf16.msra.mxu0 %v4391
          %4491 = vmatprep.subr.bf16.mxu0 0
          %4492 = vmatpush1.bf16.msra.mxu0 %v4392
          %4493 = vmatprep.subr.bf16.mxu0 0
          %4494 = vmatpush1.bf16.msra.mxu0 %v4393
          %4495 = vmatprep.subr.bf16.mxu0 0
          %4496 = vmatpush1.bf16.msra.mxu0 %v4394
          %4497 = vmatprep.subr.bf16.mxu0 0
          %4498 = vmatpush1.bf16.msra.mxu0 %v4395
          %4499 = vmatprep.subr.bf16.mxu0 0
          %4500 = vmatpush1.bf16.msra.mxu0 %v4396
          %4501 = vmatprep.mubr.bf16.mxu0 %v4165
          %4502 = vmatmul.mubr.bf16.gmra.mrb[0].mxu0 %v4164
          %v4503 = vpop.f32.mrb[0].mxu0
          %v4504 = vadd.f32 %v4464, %v4503
          %v4505 = vpop.f32.mrb[0].mxu0
          %v4506 = vpop.f32.mrb[0].mxu0
          %v4507 = vpop.f32.mrb[0].mxu0
          %4508 = vdwg.mxu0
          %4509 = vst [vmem:[%s791] sm:$0xff] %v4504
        $region89: #{rotationnet_forward.1} parent=76 // pred_fallthru
          _
        %p4510 = scmp.lt.s32.totalorder %s20, 0
        %s4511 = scalar_select %p4510, %s20, 0
        %s4512 = smul.addr %s4511, 8
        %s4513 = scalar_lea.vmem %s5, %s4512
        // Predicated region
        $region90: #{rotationnet_forward.1} parent=76 // pred_check
          %p4514 = pneg %p158
        $region91: #{rotationnet_forward.1} parent=76 // pred_check_branch
          %4516 = sbr.rel (%p4514) target = $region93
        $region92: #{rotationnet_forward.1} parent=76 // pred_region
          _
        $region93: #{rotationnet_forward.1} parent=76 // pred_fallthru
          _
        // Predicated region
        $region94: #{rotationnet_forward.1} parent=76 // pred_check
          %p4517 = pneg %p158
        $region95: #{rotationnet_forward.1} parent=76 // pred_check_branch
          %4519 = sbr.rel (%p4517) target = $region97
        $region96: #{rotationnet_forward.1} parent=76 // pred_region
          %p4520 = scmp.lt.s32.totalorder %s20, 0
          %s4521 = scalar_select %p4520, %s20, 0
          %s4522 = smul.addr %s4521, 8
          %s4523 = scalar_lea.vmem %s5, %s4522
        $region97: #{rotationnet_forward.1} parent=76 // pred_fallthru
          _
      $region77: #{rotationnet_forward.1} parent=5 // pred_fallthru
        _
      %p4524 = scmp.le.s32.totalorder 2, %s11
      // Predicated region
      $region98: #{rotationnet_forward.1} parent=5 // pred_check
        %p4525 = pneg %p4524
      $region99: #{rotationnet_forward.1} parent=5 // pred_check_branch
        %4527 = sbr.rel (%p4525) target = $region101
      $region100: #{rotationnet_forward.1} parent=5 // pred_region
        %s4528 = ssub.s32 %s11, 2
      $region101: #{rotationnet_forward.1} parent=5 // pred_fallthru
        _
    $region6: #{rotationnet_forward.1} parent=1 // loop_footer
      %s15 = sadd.s32 1, %s11
    $region7: #{rotationnet_forward.1} parent=1 // loop_footer_branch
      %10 = sbr.rel target = $region3
    $region8: #{rotationnet_forward.1} parent=1 // loop_exit
      _

</llo_original>
